<compile_context>
chip_gen: v5e
topology: v5e:2x2
jax: 0.10.0
libtpu: 0.0.40
codegen_flags: <defaults>
</compile_context>

<pallas_src>
import numpy as np
import jax
import jax.numpy as jnp
from jax.experimental import pallas as pl
from jax.experimental.pallas import tpu as pltpu

BETA = 0.9          # config['neuron']['beta']
THRESHOLD = 1.0     # snntorch Leaky default threshold, reset_mechanism='subtract'


def _leaky(cur, mem_prev):
    """snntorch Leaky: reset-by-subtract computed from the previous membrane."""
    reset = (mem_prev > THRESHOLD).astype(jnp.float32)
    mem_new = BETA * mem_prev + cur - reset * THRESHOLD
    spk = (mem_new > THRESHOLD).astype(jnp.float32)
    return spk, mem_new


# ------------------------------ fused kernel ---------------------------------

def _snn_kernel(xe_ref, xo_ref, w1e_ref, w1o_ref, b1_ref, w2e_ref, w2o_ref,
                b2_ref, w3_ref, b3_ref, out_ref, mem1_ref, mem2_ref, mem3_ref):
    t = pl.program_id(1)

    # Membranes reset to zero at the first timestep of each batch element.
    @pl.when(t == 0)
    def _():
        mem1_ref[...] = jnp.zeros_like(mem1_ref)
        mem2_ref[...] = jnp.zeros_like(mem2_ref)
        mem3_ref[...] = jnp.zeros_like(mem3_ref)

    xe = xe_ref[...]                     # [17, 68] even input rows, col = w*2+cin
    xo = xo_ref[...]                     # [17, 68] odd  input rows

    # ---- conv1 (2->12, k=5) as Toeplitz matmuls, split by output row parity ----
    # even output rows oh = 2r use input row 2r+i; odd rows oh = 2r+1 use 2r+1+i.
    taps_e = ((xe, 0), (xo, 0), (xe, 1), (xo, 1), (xe, 2))
    taps_o = ((xo, 0), (xe, 1), (xo, 1), (xe, 2), (xo, 2))
    a_ee = jnp.zeros((15, 180), jnp.float32)   # even out-rows, even out-cols
    a_eo = jnp.zeros((15, 180), jnp.float32)   # even out-rows, odd  out-cols
    a_oe = jnp.zeros((15, 180), jnp.float32)
    a_oo = jnp.zeros((15, 180), jnp.float32)
    for i in range(5):
        se, ofe = taps_e[i]
        so, ofo = taps_o[i]
        le = se[ofe:ofe + 15, :]                 # [15, 68]
        lo = so[ofo:ofo + 15, :]
        w_e = w1e_ref[i]                         # [68, 180]
        w_o = w1o_ref[i]
        a_ee = a_ee + jnp.dot(le, w_e, preferred_element_type=jnp.float32)
        a_eo = a_eo + jnp.dot(le, w_o, preferred_element_type=jnp.float32)
        a_oe = a_oe + jnp.dot(lo, w_e, preferred_element_type=jnp.float32)
        a_oo = a_oo + jnp.dot(lo, w_o, preferred_element_type=jnp.float32)

    # 2x2 max-pool == elementwise max of the four parity accumulators, + bias.
    cur1 = jnp.maximum(jnp.maximum(a_ee, a_eo), jnp.maximum(a_oe, a_oo))
    cur1 = cur1 + b1_ref[...]                    # [15, 180] = [h, w*12 + c]

    # ---- Leaky 1 ----------------------------------------------------------------
    spk1, m1 = _leaky(cur1, mem1_ref[...])
    mem1_ref[...] = m1

    # ---- conv2 (12->32, k=5): only rows/cols 0..9 needed (pool drops index 10) --
    a2_e = jnp.zeros((10, 160), jnp.float32)     # even output columns (ow = 2pw)
    a2_o = jnp.zeros((10, 160), jnp.float32)     # odd  output columns (ow = 2pw+1)
    for i in range(5):
        s = spk1[i:i + 10, :]                    # [10, 180]
        a2_e = a2_e + jnp.dot(s, w2e_ref[i], preferred_element_type=jnp.float32)
        a2_o = a2_o + jnp.dot(s, w2o_ref[i], preferred_element_type=jnp.float32)
    colmax = jnp.maximum(a2_e, a2_o)             # pooled over ow, [10, 160]

    # ---- pool rows + Leaky2 + Linear(800->10), one pooled row (ph) at a time ----
    cur3 = b3_ref[...]                           # [1, 10]
    for ph in range(5):
        cur2 = jnp.maximum(colmax[2 * ph:2 * ph + 1, :],
                           colmax[2 * ph + 1:2 * ph + 2, :]) + b2_ref[...]  # [1,160]
        spk2, m2 = _leaky(cur2, mem2_ref[ph:ph + 1, :])
        mem2_ref[ph:ph + 1, :] = m2
        cur3 = cur3 + jnp.dot(spk2, w3_ref[ph],
                              preferred_element_type=jnp.float32)           # [1,10]

    # ---- Leaky 3 + output spikes -------------------------------------------------
    spk3, m3 = _leaky(cur3, mem3_ref[...])
    mem3_ref[...] = m3
    out_ref[pl.ds(t, 1), :] = spk3


# --------------------------- host-side weight prep ---------------------------

def _build_toeplitz(w, w_in, n_ow):
    """Block-Toeplitz expansion of a [Cout, Cin, KH, KW] conv weight.

    Returns T[KH, w_in*Cin, 2*half] with
      T[i, (ow+j)*Cin + cin, (ow % 2)*half + (ow // 2)*Cout + cout] = w[cout,cin,i,j]
    so that sum_i input_rows[oh+i, :] @ T[i] gives the conv output row oh with
    columns ordered (ow parity, ow//2, cout).
    """
    cout, cin, kh, kw = w.shape
    half = ((n_ow + 1) // 2) * cout
    T = np.zeros((kh, w_in * cin, 2 * half), np.float32)
    for i in range(kh):
        for j in range(kw):
            blk = w[:, :, i, j].T                # [Cin, Cout]
            for ow in range(n_ow):
                r0 = (ow + j) * cin
                c0 = (ow % 2) * half + (ow // 2) * cout
                T[i, r0:r0 + cin, c0:c0 + cout] = blk
    return T


def init_params(key):
    """Synthetic parameters (PyTorch layouts) plus kernel-ready layouts."""
    k = jax.random.split(key, 6)
    w1 = jax.random.normal(k[0], (12, 2, 5, 5), jnp.float32) * 0.40   # Conv2d(2,12,5)
    b1 = jax.random.normal(k[1], (12,), jnp.float32) * 0.20
    w2 = jax.random.normal(k[2], (32, 12, 5, 5), jnp.float32) * 0.08  # Conv2d(12,32,5)
    b2 = jax.random.normal(k[3], (32,), jnp.float32) * 0.05
    w3 = jax.random.normal(k[4], (10, 800), jnp.float32) * 0.05       # Linear(800,10)
    b3 = jax.random.normal(k[5], (10,), jnp.float32) * 0.05
    torch_params = (w1, b1, w2, b2, w3, b3)

    t1 = _build_toeplitz(np.asarray(w1), w_in=34, n_ow=30)            # [5, 68, 360]
    t2 = _build_toeplitz(np.asarray(w2), w_in=15, n_ow=10)            # [5, 180, 320]
    # Linear weight regrouped per pooled row ph with columns (pw, c); the PyTorch
    # NCHW flatten index c*25 + ph*5 + pw is folded in here.
    w3r = np.asarray(w3).reshape(10, 32, 5, 5).transpose(2, 3, 1, 0).reshape(5, 160, 10)

    kernel_params = dict(
        w1e=jnp.asarray(t1[:, :, :180]), w1o=jnp.asarray(t1[:, :, 180:]),
        b1r=jnp.tile(b1, 15).reshape(1, 180),
        w2e=jnp.asarray(t2[:, :, :160]), w2o=jnp.asarray(t2[:, :, 160:]),
        b2r=jnp.tile(b2, 5).reshape(1, 160),
        w3r=jnp.asarray(w3r), b3r=b3.reshape(1, 10))
    return kernel_params, torch_params


# ------------------------------ fused forward --------------------------------

@jax.jit
def snn_forward(params, x):
    """x: [T, B, 2, 34, 34] (PyTorch NCHW) -> output spikes [T, B, 10]."""
    T, B = x.shape[0], x.shape[1]
    xh = jnp.transpose(x.astype(jnp.float32), (0, 1, 3, 4, 2))   # NHWC
    xh = xh.reshape(T, B, 34, 68)                                # col = w*2 + cin
    xe = xh[:, :, 0::2, :]                                       # [T, B, 17, 68]
    xo = xh[:, :, 1::2, :]                                       # [T, B, 17, 68]

    out = pl.pallas_call(
        _snn_kernel,
        out_shape=jax.ShapeDtypeStruct((B, T, 10), jnp.float32),
        grid=(B, T),
        in_specs=[
            pl.BlockSpec((None, None, 17, 68), lambda b, t: (t, b, 0, 0)),   # xe
            pl.BlockSpec((None, None, 17, 68), lambda b, t: (t, b, 0, 0)),   # xo
            pl.BlockSpec((5, 68, 180), lambda b, t: (0, 0, 0)),              # w1e
            pl.BlockSpec((5, 68, 180), lambda b, t: (0, 0, 0)),              # w1o
            pl.BlockSpec((1, 180), lambda b, t: (0, 0)),                     # b1
            pl.BlockSpec((5, 180, 160), lambda b, t: (0, 0, 0)),             # w2e
            pl.BlockSpec((5, 180, 160), lambda b, t: (0, 0, 0)),             # w2o
            pl.BlockSpec((1, 160), lambda b, t: (0, 0)),                     # b2
            pl.BlockSpec((5, 160, 10), lambda b, t: (0, 0, 0)),              # w3
            pl.BlockSpec((1, 10), lambda b, t: (0, 0)),                      # b3
        ],
        out_specs=pl.BlockSpec((None, T, 10), lambda b, t: (b, 0, 0)),
        scratch_shapes=[
            pltpu.VMEM((15, 180), jnp.float32),   # mem1  [h, w*12 + c]
            pltpu.VMEM((5, 160), jnp.float32),    # mem2  [ph, pw*32 + c]
            pltpu.VMEM((1, 10), jnp.float32),     # mem3
        ],
        compiler_params=pltpu.CompilerParams(
            dimension_semantics=("parallel", "arbitrary")),
    )(xe, xo, params['w1e'], params['w1o'], params['b1r'],
      params['w2e'], params['w2o'], params['b2r'], params['w3r'], params['b3r'])
    return jnp.transpose(out, (1, 0, 2))                         # [T, B, 10]


# ------------------------- plain-JAX reference (check) ------------------------

def reference_forward(torch_params, x):
    w1, b1, w2, b2, w3, b3 = torch_params
    T, B = x.shape[0], x.shape[1]
    hp = jax.lax.Precision.HIGHEST

    def conv(h, w, b):
        y = jax.lax.conv_general_dilated(
            h, jnp.transpose(w, (2, 3, 1, 0)), (1, 1), 'VALID',
            dimension_numbers=('NHWC', 'HWIO', 'NHWC'), precision=hp)
        return y + b[None, None, None, :]

    def pool(h):
        return jax.lax.reduce_window(h, -jnp.inf, jax.lax.max,
                                     (1, 2, 2, 1), (1, 2, 2, 1), 'VALID')

    def leaky(cur, mem):
        reset = (mem > THRESHOLD).astype(jnp.float32)
        mem = BETA * mem + cur - reset * THRESHOLD
        return (mem > THRESHOLD).astype(jnp.float32), mem

    mem1 = jnp.zeros((B, 15, 15, 12), jnp.float32)
    mem2 = jnp.zeros((B, 5, 5, 32), jnp.float32)
    mem3 = jnp.zeros((B, 10), jnp.float32)
    outs = []
    for t in range(T):
        xt = jnp.transpose(x[t].astype(jnp.float32), (0, 2, 3, 1))   # NHWC
        spk1, mem1 = leaky(pool(conv(xt, w1, b1)), mem1)
        spk2, mem2 = leaky(pool(conv(spk1, w2, b2)), mem2)
        flat = jnp.transpose(spk2, (0, 3, 1, 2)).reshape(B, 800)     # NCHW flatten
        spk3, mem3 = leaky(jnp.dot(flat, w3.T, precision=hp) + b3[None, :], mem3)
        outs.append(spk3)
    return jnp.stack(outs, axis=0)


if __name__ == "__main__":
    key = jax.random.PRNGKey(0)
    kp, kx = jax.random.split(key)
    params, torch_params = init_params(kp)

    T, B = 3, 2
    # Spike-like (0/1) deterministic input, [time_steps, batch, 2, 34, 34].
    x = (jax.random.uniform(kx, (T, B, 2, 34, 34)) > 0.7).astype(jnp.float32)

    out = snn_forward(params, x)
    out = jax.block_until_ready(out)
    assert out.shape == (T, B, 10)
    assert out.dtype == jnp.float32

    # Sanity check against a plain-JAX reference.  Outputs are thresholded spikes,
    # so a handful of flips from float summation-order differences are tolerated.
    ref = jax.block_until_ready(reference_forward(torch_params, x))
    mismatches = int(jnp.sum(out != ref))
    assert mismatches <= 6, f"kernel/reference spike mismatch: {mismatches}/{out.size}"

    # TODO(synk): record_hidden / loss / accuracy / optimiser are host-side training
    # logic (and the surrogate gradient only affects backward), not part of the
    # forward kernel hot path.
    print("KERNEL_OK")
</pallas_src>

<mosaic_0001>
module attributes {stable_mosaic.version = 11 : i64} {
  func.func @_snn_kernel(%arg0: i32, %arg1: i32, %arg2: memref<1x1x17x68xf32, #tpu.memory_space<vmem>>, %arg3: memref<1x1x17x68xf32, #tpu.memory_space<vmem>>, %arg4: memref<5x68x180xf32, #tpu.memory_space<vmem>>, %arg5: memref<5x68x180xf32, #tpu.memory_space<vmem>>, %arg6: memref<1x180xf32, #tpu.memory_space<vmem>>, %arg7: memref<5x180x160xf32, #tpu.memory_space<vmem>>, %arg8: memref<5x180x160xf32, #tpu.memory_space<vmem>>, %arg9: memref<1x160xf32, #tpu.memory_space<vmem>>, %arg10: memref<5x160x10xf32, #tpu.memory_space<vmem>>, %arg11: memref<1x10xf32, #tpu.memory_space<vmem>>, %arg12: memref<1x3x10xf32, #tpu.memory_space<vmem>>, %arg13: memref<15x180xf32, #tpu.memory_space<vmem>>, %arg14: memref<5x160xf32, #tpu.memory_space<vmem>>, %arg15: memref<1x10xf32, #tpu.memory_space<vmem>>) attributes {dimension_semantics = [#tpu.dimension_semantics<parallel>, #tpu.dimension_semantics<arbitrary>], iteration_bounds = array<i64: 2, 3>, scalar_prefetch = 0 : i64, scratch_operands = 3 : i64, tpu.core_type = #tpu.core_type<tc>, window_params = [{transform_indices = @transform_0, window_bounds = array<i64: 1, 1, 17, 68>}, {transform_indices = @transform_1, window_bounds = array<i64: 1, 1, 17, 68>}, {pipeline_mode = #tpu.pipeline_mode<synchronous>, transform_indices = @transform_2, window_bounds = array<i64: 5, 68, 180>}, {pipeline_mode = #tpu.pipeline_mode<synchronous>, transform_indices = @transform_3, window_bounds = array<i64: 5, 68, 180>}, {pipeline_mode = #tpu.pipeline_mode<synchronous>, transform_indices = @transform_4, window_bounds = array<i64: 1, 180>}, {pipeline_mode = #tpu.pipeline_mode<synchronous>, transform_indices = @transform_5, window_bounds = array<i64: 5, 180, 160>}, {pipeline_mode = #tpu.pipeline_mode<synchronous>, transform_indices = @transform_6, window_bounds = array<i64: 5, 180, 160>}, {pipeline_mode = #tpu.pipeline_mode<synchronous>, transform_indices = @transform_7, window_bounds = array<i64: 1, 160>}, {pipeline_mode = #tpu.pipeline_mode<synchronous>, transform_indices = @transform_8, window_bounds = array<i64: 5, 160, 10>}, {pipeline_mode = #tpu.pipeline_mode<synchronous>, transform_indices = @transform_9, window_bounds = array<i64: 1, 10>}, {transform_indices = @transform_10, window_bounds = array<i64: 1, 3, 10>}]} {
    %c0_i32 = arith.constant 0 : i32
    %0 = arith.cmpi eq, %arg1, %c0_i32 : i32
    %1 = arith.extui %0 : i1 to i32
    %c0_i32_0 = arith.constant 0 : i32
    %2 = arith.cmpi ne, %1, %c0_i32_0 : i32
    scf.if %2 {
      %cst_191 = arith.constant 0.000000e+00 : f32
      %297 = vector.broadcast %cst_191 : f32 to vector<15x180xf32>
      %c0_192 = arith.constant 0 : index
      %c0_193 = arith.constant 0 : index
      %298 = vector.load %arg13[%c0_192, %c0_193] : memref<15x180xf32, #tpu.memory_space<vmem>>, vector<15x180xf32>
      tpu.vector_store %arg13[%c0_192, %c0_193], %297 {strides = array<i32>} : memref<15x180xf32, #tpu.memory_space<vmem>>, vector<15x180xf32>,
      %cst_194 = arith.constant 0.000000e+00 : f32
      %299 = vector.broadcast %cst_194 : f32 to vector<5x160xf32>
      %c0_195 = arith.constant 0 : index
      %c0_196 = arith.constant 0 : index
      %300 = vector.load %arg14[%c0_195, %c0_196] : memref<5x160xf32, #tpu.memory_space<vmem>>, vector<5x160xf32>
      tpu.vector_store %arg14[%c0_195, %c0_196], %299 {strides = array<i32>} : memref<5x160xf32, #tpu.memory_space<vmem>>, vector<5x160xf32>,
      %cst_197 = arith.constant 0.000000e+00 : f32
      %301 = vector.broadcast %cst_197 : f32 to vector<1x10xf32>
      %c0_198 = arith.constant 0 : index
      %c0_199 = arith.constant 0 : index
      %302 = vector.load %arg15[%c0_198, %c0_199] : memref<1x10xf32, #tpu.memory_space<vmem>>, vector<1x10xf32>
      tpu.vector_store %arg15[%c0_198, %c0_199], %301 {strides = array<i32>} : memref<1x10xf32, #tpu.memory_space<vmem>>, vector<1x10xf32>,
    } else {
    }
    %c0 = arith.constant 0 : index
    %c0_1 = arith.constant 0 : index
    %c0_2 = arith.constant 0 : index
    %c0_3 = arith.constant 0 : index
    %3 = vector.load %arg2[%c0, %c0_1, %c0_2, %c0_3] : memref<1x1x17x68xf32, #tpu.memory_space<vmem>>, vector<1x1x17x68xf32>
    %4 = vector.shape_cast %3 : vector<1x1x17x68xf32> to vector<17x68xf32>
    %c0_4 = arith.constant 0 : index
    %c0_5 = arith.constant 0 : index
    %c0_6 = arith.constant 0 : index
    %c0_7 = arith.constant 0 : index
    %5 = vector.load %arg3[%c0_4, %c0_5, %c0_6, %c0_7] : memref<1x1x17x68xf32, #tpu.memory_space<vmem>>, vector<1x1x17x68xf32>
    %6 = vector.shape_cast %5 : vector<1x1x17x68xf32> to vector<17x68xf32>
    %cst = arith.constant 0.000000e+00 : f32
    %7 = vector.broadcast %cst : f32 to vector<15x180xf32>
    %cst_8 = arith.constant 0.000000e+00 : f32
    %8 = vector.broadcast %cst_8 : f32 to vector<15x180xf32>
    %cst_9 = arith.constant 0.000000e+00 : f32
    %9 = vector.broadcast %cst_9 : f32 to vector<15x180xf32>
    %cst_10 = arith.constant 0.000000e+00 : f32
    %10 = vector.broadcast %cst_10 : f32 to vector<15x180xf32>
    %11 = vector.extract_strided_slice %4 {offsets = [0, 0], sizes = [15, 68], strides = [1, 1]} : vector<17x68xf32> to vector<15x68xf32>
    %12 = vector.extract_strided_slice %6 {offsets = [0, 0], sizes = [15, 68], strides = [1, 1]} : vector<17x68xf32> to vector<15x68xf32>
    %c0_11 = arith.constant 0 : index
    %c0_12 = arith.constant 0 : index
    %c0_13 = arith.constant 0 : index
    %13 = vector.load %arg4[%c0_11, %c0_12, %c0_13] : memref<5x68x180xf32, #tpu.memory_space<vmem>>, vector<1x68x180xf32>
    %14 = vector.shape_cast %13 : vector<1x68x180xf32> to vector<68x180xf32>
    %c0_14 = arith.constant 0 : index
    %c0_15 = arith.constant 0 : index
    %c0_16 = arith.constant 0 : index
    %15 = vector.load %arg5[%c0_14, %c0_15, %c0_16] : memref<5x68x180xf32, #tpu.memory_space<vmem>>, vector<1x68x180xf32>
    %16 = vector.shape_cast %15 : vector<1x68x180xf32> to vector<68x180xf32>
    %cst_17 = arith.constant dense<0.000000e+00> : vector<15x180xf32>
    %17 = tpu.matmul %11, %14, %cst_17 {dimension_numbers = #tpu.dot_dimension_numbers<[1], [0], [0], [1], [0, 0, 1, 1], [], []>} : vector<15x68xf32>, vector<68x180xf32>, vector<15x180xf32> -> vector<15x180xf32>
    %18 = arith.addf %7, %17 : vector<15x180xf32>
    %cst_18 = arith.constant dense<0.000000e+00> : vector<15x180xf32>
    %19 = tpu.matmul %11, %16, %cst_18 {dimension_numbers = #tpu.dot_dimension_numbers<[1], [0], [0], [1], [0, 0, 1, 1], [], []>} : vector<15x68xf32>, vector<68x180xf32>, vector<15x180xf32> -> vector<15x180xf32>
    %20 = arith.addf %8, %19 : vector<15x180xf32>
    %cst_19 = arith.constant dense<0.000000e+00> : vector<15x180xf32>
    %21 = tpu.matmul %12, %14, %cst_19 {dimension_numbers = #tpu.dot_dimension_numbers<[1], [0], [0], [1], [0, 0, 1, 1], [], []>} : vector<15x68xf32>, vector<68x180xf32>, vector<15x180xf32> -> vector<15x180xf32>
    %22 = arith.addf %9, %21 : vector<15x180xf32>
    %cst_20 = arith.constant dense<0.000000e+00> : vector<15x180xf32>
    %23 = tpu.matmul %12, %16, %cst_20 {dimension_numbers = #tpu.dot_dimension_numbers<[1], [0], [0], [1], [0, 0, 1, 1], [], []>} : vector<15x68xf32>, vector<68x180xf32>, vector<15x180xf32> -> vector<15x180xf32>
    %24 = arith.addf %10, %23 : vector<15x180xf32>
    %25 = vector.extract_strided_slice %6 {offsets = [0, 0], sizes = [15, 68], strides = [1, 1]} : vector<17x68xf32> to vector<15x68xf32>
    %26 = vector.extract_strided_slice %4 {offsets = [1, 0], sizes = [15, 68], strides = [1, 1]} : vector<17x68xf32> to vector<15x68xf32>
    %c1 = arith.constant 1 : index
    %c0_21 = arith.constant 0 : index
    %c0_22 = arith.constant 0 : index
    %27 = vector.load %arg4[%c1, %c0_21, %c0_22] : memref<5x68x180xf32, #tpu.memory_space<vmem>>, vector<1x68x180xf32>
    %28 = vector.shape_cast %27 : vector<1x68x180xf32> to vector<68x180xf32>
    %c1_23 = arith.constant 1 : index
    %c0_24 = arith.constant 0 : index
    %c0_25 = arith.constant 0 : index
    %29 = vector.load %arg5[%c1_23, %c0_24, %c0_25] : memref<5x68x180xf32, #tpu.memory_space<vmem>>, vector<1x68x180xf32>
    %30 = vector.shape_cast %29 : vector<1x68x180xf32> to vector<68x180xf32>
    %cst_26 = arith.constant dense<0.000000e+00> : vector<15x180xf32>
    %31 = tpu.matmul %25, %28, %cst_26 {dimension_numbers = #tpu.dot_dimension_numbers<[1], [0], [0], [1], [0, 0, 1, 1], [], []>} : vector<15x68xf32>, vector<68x180xf32>, vector<15x180xf32> -> vector<15x180xf32>
    %32 = arith.addf %18, %31 : vector<15x180xf32>
    %cst_27 = arith.constant dense<0.000000e+00> : vector<15x180xf32>
    %33 = tpu.matmul %25, %30, %cst_27 {dimension_numbers = #tpu.dot_dimension_numbers<[1], [0], [0], [1], [0, 0, 1, 1], [], []>} : vector<15x68xf32>, vector<68x180xf32>, vector<15x180xf32> -> vector<15x180xf32>
    %34 = arith.addf %20, %33 : vector<15x180xf32>
    %cst_28 = arith.constant dense<0.000000e+00> : vector<15x180xf32>
    %35 = tpu.matmul %26, %28, %cst_28 {dimension_numbers = #tpu.dot_dimension_numbers<[1], [0], [0], [1], [0, 0, 1, 1], [], []>} : vector<15x68xf32>, vector<68x180xf32>, vector<15x180xf32> -> vector<15x180xf32>
    %36 = arith.addf %22, %35 : vector<15x180xf32>
    %cst_29 = arith.constant dense<0.000000e+00> : vector<15x180xf32>
    %37 = tpu.matmul %26, %30, %cst_29 {dimension_numbers = #tpu.dot_dimension_numbers<[1], [0], [0], [1], [0, 0, 1, 1], [], []>} : vector<15x68xf32>, vector<68x180xf32>, vector<15x180xf32> -> vector<15x180xf32>
    %38 = arith.addf %24, %37 : vector<15x180xf32>
    %39 = vector.extract_strided_slice %4 {offsets = [1, 0], sizes = [15, 68], strides = [1, 1]} : vector<17x68xf32> to vector<15x68xf32>
    %40 = vector.extract_strided_slice %6 {offsets = [1, 0], sizes = [15, 68], strides = [1, 1]} : vector<17x68xf32> to vector<15x68xf32>
    %c2 = arith.constant 2 : index
    %c0_30 = arith.constant 0 : index
    %c0_31 = arith.constant 0 : index
    %41 = vector.load %arg4[%c2, %c0_30, %c0_31] : memref<5x68x180xf32, #tpu.memory_space<vmem>>, vector<1x68x180xf32>
    %42 = vector.shape_cast %41 : vector<1x68x180xf32> to vector<68x180xf32>
    %c2_32 = arith.constant 2 : index
    %c0_33 = arith.constant 0 : index
    %c0_34 = arith.constant 0 : index
    %43 = vector.load %arg5[%c2_32, %c0_33, %c0_34] : memref<5x68x180xf32, #tpu.memory_space<vmem>>, vector<1x68x180xf32>
    %44 = vector.shape_cast %43 : vector<1x68x180xf32> to vector<68x180xf32>
    %cst_35 = arith.constant dense<0.000000e+00> : vector<15x180xf32>
    %45 = tpu.matmul %39, %42, %cst_35 {dimension_numbers = #tpu.dot_dimension_numbers<[1], [0], [0], [1], [0, 0, 1, 1], [], []>} : vector<15x68xf32>, vector<68x180xf32>, vector<15x180xf32> -> vector<15x180xf32>
    %46 = arith.addf %32, %45 : vector<15x180xf32>
    %cst_36 = arith.constant dense<0.000000e+00> : vector<15x180xf32>
    %47 = tpu.matmul %39, %44, %cst_36 {dimension_numbers = #tpu.dot_dimension_numbers<[1], [0], [0], [1], [0, 0, 1, 1], [], []>} : vector<15x68xf32>, vector<68x180xf32>, vector<15x180xf32> -> vector<15x180xf32>
    %48 = arith.addf %34, %47 : vector<15x180xf32>
    %cst_37 = arith.constant dense<0.000000e+00> : vector<15x180xf32>
    %49 = tpu.matmul %40, %42, %cst_37 {dimension_numbers = #tpu.dot_dimension_numbers<[1], [0], [0], [1], [0, 0, 1, 1], [], []>} : vector<15x68xf32>, vector<68x180xf32>, vector<15x180xf32> -> vector<15x180xf32>
    %50 = arith.addf %36, %49 : vector<15x180xf32>
    %cst_38 = arith.constant dense<0.000000e+00> : vector<15x180xf32>
    %51 = tpu.matmul %40, %44, %cst_38 {dimension_numbers = #tpu.dot_dimension_numbers<[1], [0], [0], [1], [0, 0, 1, 1], [], []>} : vector<15x68xf32>, vector<68x180xf32>, vector<15x180xf32> -> vector<15x180xf32>
    %52 = arith.addf %38, %51 : vector<15x180xf32>
    %53 = vector.extract_strided_slice %6 {offsets = [1, 0], sizes = [15, 68], strides = [1, 1]} : vector<17x68xf32> to vector<15x68xf32>
    %54 = vector.extract_strided_slice %4 {offsets = [2, 0], sizes = [15, 68], strides = [1, 1]} : vector<17x68xf32> to vector<15x68xf32>
    %c3 = arith.constant 3 : index
    %c0_39 = arith.constant 0 : index
    %c0_40 = arith.constant 0 : index
    %55 = vector.load %arg4[%c3, %c0_39, %c0_40] : memref<5x68x180xf32, #tpu.memory_space<vmem>>, vector<1x68x180xf32>
    %56 = vector.shape_cast %55 : vector<1x68x180xf32> to vector<68x180xf32>
    %c3_41 = arith.constant 3 : index
    %c0_42 = arith.constant 0 : index
    %c0_43 = arith.constant 0 : index
    %57 = vector.load %arg5[%c3_41, %c0_42, %c0_43] : memref<5x68x180xf32, #tpu.memory_space<vmem>>, vector<1x68x180xf32>
    %58 = vector.shape_cast %57 : vector<1x68x180xf32> to vector<68x180xf32>
    %cst_44 = arith.constant dense<0.000000e+00> : vector<15x180xf32>
    %59 = tpu.matmul %53, %56, %cst_44 {dimension_numbers = #tpu.dot_dimension_numbers<[1], [0], [0], [1], [0, 0, 1, 1], [], []>} : vector<15x68xf32>, vector<68x180xf32>, vector<15x180xf32> -> vector<15x180xf32>
    %60 = arith.addf %46, %59 : vector<15x180xf32>
    %cst_45 = arith.constant dense<0.000000e+00> : vector<15x180xf32>
    %61 = tpu.matmul %53, %58, %cst_45 {dimension_numbers = #tpu.dot_dimension_numbers<[1], [0], [0], [1], [0, 0, 1, 1], [], []>} : vector<15x68xf32>, vector<68x180xf32>, vector<15x180xf32> -> vector<15x180xf32>
    %62 = arith.addf %48, %61 : vector<15x180xf32>
    %cst_46 = arith.constant dense<0.000000e+00> : vector<15x180xf32>
    %63 = tpu.matmul %54, %56, %cst_46 {dimension_numbers = #tpu.dot_dimension_numbers<[1], [0], [0], [1], [0, 0, 1, 1], [], []>} : vector<15x68xf32>, vector<68x180xf32>, vector<15x180xf32> -> vector<15x180xf32>
    %64 = arith.addf %50, %63 : vector<15x180xf32>
    %cst_47 = arith.constant dense<0.000000e+00> : vector<15x180xf32>
    %65 = tpu.matmul %54, %58, %cst_47 {dimension_numbers = #tpu.dot_dimension_numbers<[1], [0], [0], [1], [0, 0, 1, 1], [], []>} : vector<15x68xf32>, vector<68x180xf32>, vector<15x180xf32> -> vector<15x180xf32>
    %66 = arith.addf %52, %65 : vector<15x180xf32>
    %67 = vector.extract_strided_slice %4 {offsets = [2, 0], sizes = [15, 68], strides = [1, 1]} : vector<17x68xf32> to vector<15x68xf32>
    %68 = vector.extract_strided_slice %6 {offsets = [2, 0], sizes = [15, 68], strides = [1, 1]} : vector<17x68xf32> to vector<15x68xf32>
    %c4 = arith.constant 4 : index
    %c0_48 = arith.constant 0 : index
    %c0_49 = arith.constant 0 : index
    %69 = vector.load %arg4[%c4, %c0_48, %c0_49] : memref<5x68x180xf32, #tpu.memory_space<vmem>>, vector<1x68x180xf32>
    %70 = vector.shape_cast %69 : vector<1x68x180xf32> to vector<68x180xf32>
    %c4_50 = arith.constant 4 : index
    %c0_51 = arith.constant 0 : index
    %c0_52 = arith.constant 0 : index
    %71 = vector.load %arg5[%c4_50, %c0_51, %c0_52] : memref<5x68x180xf32, #tpu.memory_space<vmem>>, vector<1x68x180xf32>
    %72 = vector.shape_cast %71 : vector<1x68x180xf32> to vector<68x180xf32>
    %cst_53 = arith.constant dense<0.000000e+00> : vector<15x180xf32>
    %73 = tpu.matmul %67, %70, %cst_53 {dimension_numbers = #tpu.dot_dimension_numbers<[1], [0], [0], [1], [0, 0, 1, 1], [], []>} : vector<15x68xf32>, vector<68x180xf32>, vector<15x180xf32> -> vector<15x180xf32>
    %74 = arith.addf %60, %73 : vector<15x180xf32>
    %cst_54 = arith.constant dense<0.000000e+00> : vector<15x180xf32>
    %75 = tpu.matmul %67, %72, %cst_54 {dimension_numbers = #tpu.dot_dimension_numbers<[1], [0], [0], [1], [0, 0, 1, 1], [], []>} : vector<15x68xf32>, vector<68x180xf32>, vector<15x180xf32> -> vector<15x180xf32>
    %76 = arith.addf %62, %75 : vector<15x180xf32>
    %cst_55 = arith.constant dense<0.000000e+00> : vector<15x180xf32>
    %77 = tpu.matmul %68, %70, %cst_55 {dimension_numbers = #tpu.dot_dimension_numbers<[1], [0], [0], [1], [0, 0, 1, 1], [], []>} : vector<15x68xf32>, vector<68x180xf32>, vector<15x180xf32> -> vector<15x180xf32>
    %78 = arith.addf %64, %77 : vector<15x180xf32>
    %cst_56 = arith.constant dense<0.000000e+00> : vector<15x180xf32>
    %79 = tpu.matmul %68, %72, %cst_56 {dimension_numbers = #tpu.dot_dimension_numbers<[1], [0], [0], [1], [0, 0, 1, 1], [], []>} : vector<15x68xf32>, vector<68x180xf32>, vector<15x180xf32> -> vector<15x180xf32>
    %80 = arith.addf %66, %79 : vector<15x180xf32>
    %81 = arith.maximumf %74, %76 : vector<15x180xf32>
    %82 = arith.maximumf %78, %80 : vector<15x180xf32>
    %83 = arith.maximumf %81, %82 : vector<15x180xf32>
    %c0_57 = arith.constant 0 : index
    %c0_58 = arith.constant 0 : index
    %84 = vector.load %arg6[%c0_57, %c0_58] : memref<1x180xf32, #tpu.memory_space<vmem>>, vector<1x180xf32>
    %85 = vector.broadcast %84 : vector<1x180xf32> to vector<15x180xf32>
    %86 = arith.addf %83, %85 : vector<15x180xf32>
    %c0_59 = arith.constant 0 : index
    %c0_60 = arith.constant 0 : index
    %87 = vector.load %arg13[%c0_59, %c0_60] : memref<15x180xf32, #tpu.memory_space<vmem>>, vector<15x180xf32>
    %cst_61 = arith.constant 1.000000e+00 : f32
    %88 = vector.broadcast %cst_61 : f32 to vector<15x180xf32>
    %89 = arith.cmpf ogt, %87, %88 : vector<15x180xf32>
    %90 = arith.extui %89 : vector<15x180xi1> to vector<15x180xi32>
    %91 = arith.sitofp %90 : vector<15x180xi32> to vector<15x180xf32>
    %cst_62 = arith.constant 0.899999976 : f32
    %92 = vector.broadcast %cst_62 : f32 to vector<15x180xf32>
    %93 = arith.mulf %92, %87 : vector<15x180xf32>
    %94 = arith.addf %93, %86 : vector<15x180xf32>
    %cst_63 = arith.constant 1.000000e+00 : f32
    %95 = vector.broadcast %cst_63 : f32 to vector<15x180xf32>
    %96 = arith.mulf %91, %95 : vector<15x180xf32>
    %97 = arith.subf %94, %96 : vector<15x180xf32>
    %cst_64 = arith.constant 1.000000e+00 : f32
    %98 = vector.broadcast %cst_64 : f32 to vector<15x180xf32>
    %99 = arith.cmpf ogt, %97, %98 : vector<15x180xf32>
    %100 = arith.extui %99 : vector<15x180xi1> to vector<15x180xi32>
    %101 = arith.sitofp %100 : vector<15x180xi32> to vector<15x180xf32>
    %c0_65 = arith.constant 0 : index
    %c0_66 = arith.constant 0 : index
    %102 = vector.load %arg13[%c0_65, %c0_66] : memref<15x180xf32, #tpu.memory_space<vmem>>, vector<15x180xf32>
    tpu.vector_store %arg13[%c0_65, %c0_66], %97 {strides = array<i32>} : memref<15x180xf32, #tpu.memory_space<vmem>>, vector<15x180xf32>,
    %cst_67 = arith.constant 0.000000e+00 : f32
    %103 = vector.broadcast %cst_67 : f32 to vector<10x160xf32>
    %cst_68 = arith.constant 0.000000e+00 : f32
    %104 = vector.broadcast %cst_68 : f32 to vector<10x160xf32>
    %105 = vector.extract_strided_slice %101 {offsets = [0, 0], sizes = [10, 180], strides = [1, 1]} : vector<15x180xf32> to vector<10x180xf32>
    %c0_69 = arith.constant 0 : index
    %c0_70 = arith.constant 0 : index
    %c0_71 = arith.constant 0 : index
    %106 = vector.load %arg7[%c0_69, %c0_70, %c0_71] : memref<5x180x160xf32, #tpu.memory_space<vmem>>, vector<1x180x160xf32>
    %107 = vector.shape_cast %106 : vector<1x180x160xf32> to vector<180x160xf32>
    %cst_72 = arith.constant dense<0.000000e+00> : vector<10x160xf32>
    %108 = tpu.matmul %105, %107, %cst_72 {dimension_numbers = #tpu.dot_dimension_numbers<[1], [0], [0], [1], [0, 0, 1, 1], [], []>} : vector<10x180xf32>, vector<180x160xf32>, vector<10x160xf32> -> vector<10x160xf32>
    %109 = arith.addf %103, %108 : vector<10x160xf32>
    %c0_73 = arith.constant 0 : index
    %c0_74 = arith.constant 0 : index
    %c0_75 = arith.constant 0 : index
    %110 = vector.load %arg8[%c0_73, %c0_74, %c0_75] : memref<5x180x160xf32, #tpu.memory_space<vmem>>, vector<1x180x160xf32>
    %111 = vector.shape_cast %110 : vector<1x180x160xf32> to vector<180x160xf32>
    %cst_76 = arith.constant dense<0.000000e+00> : vector<10x160xf32>
    %112 = tpu.matmul %105, %111, %cst_76 {dimension_numbers = #tpu.dot_dimension_numbers<[1], [0], [0], [1], [0, 0, 1, 1], [], []>} : vector<10x180xf32>, vector<180x160xf32>, vector<10x160xf32> -> vector<10x160xf32>
    %113 = arith.addf %104, %112 : vector<10x160xf32>
    %114 = vector.extract_strided_slice %101 {offsets = [1, 0], sizes = [10, 180], strides = [1, 1]} : vector<15x180xf32> to vector<10x180xf32>
    %c1_77 = arith.constant 1 : index
    %c0_78 = arith.constant 0 : index
    %c0_79 = arith.constant 0 : index
    %115 = vector.load %arg7[%c1_77, %c0_78, %c0_79] : memref<5x180x160xf32, #tpu.memory_space<vmem>>, vector<1x180x160xf32>
    %116 = vector.shape_cast %115 : vector<1x180x160xf32> to vector<180x160xf32>
    %cst_80 = arith.constant dense<0.000000e+00> : vector<10x160xf32>
    %117 = tpu.matmul %114, %116, %cst_80 {dimension_numbers = #tpu.dot_dimension_numbers<[1], [0], [0], [1], [0, 0, 1, 1], [], []>} : vector<10x180xf32>, vector<180x160xf32>, vector<10x160xf32> -> vector<10x160xf32>
    %118 = arith.addf %109, %117 : vector<10x160xf32>
    %c1_81 = arith.constant 1 : index
    %c0_82 = arith.constant 0 : index
    %c0_83 = arith.constant 0 : index
    %119 = vector.load %arg8[%c1_81, %c0_82, %c0_83] : memref<5x180x160xf32, #tpu.memory_space<vmem>>, vector<1x180x160xf32>
    %120 = vector.shape_cast %119 : vector<1x180x160xf32> to vector<180x160xf32>
    %cst_84 = arith.constant dense<0.000000e+00> : vector<10x160xf32>
    %121 = tpu.matmul %114, %120, %cst_84 {dimension_numbers = #tpu.dot_dimension_numbers<[1], [0], [0], [1], [0, 0, 1, 1], [], []>} : vector<10x180xf32>, vector<180x160xf32>, vector<10x160xf32> -> vector<10x160xf32>
    %122 = arith.addf %113, %121 : vector<10x160xf32>
    %123 = vector.extract_strided_slice %101 {offsets = [2, 0], sizes = [10, 180], strides = [1, 1]} : vector<15x180xf32> to vector<10x180xf32>
    %c2_85 = arith.constant 2 : index
    %c0_86 = arith.constant 0 : index
    %c0_87 = arith.constant 0 : index
    %124 = vector.load %arg7[%c2_85, %c0_86, %c0_87] : memref<5x180x160xf32, #tpu.memory_space<vmem>>, vector<1x180x160xf32>
    %125 = vector.shape_cast %124 : vector<1x180x160xf32> to vector<180x160xf32>
    %cst_88 = arith.constant dense<0.000000e+00> : vector<10x160xf32>
    %126 = tpu.matmul %123, %125, %cst_88 {dimension_numbers = #tpu.dot_dimension_numbers<[1], [0], [0], [1], [0, 0, 1, 1], [], []>} : vector<10x180xf32>, vector<180x160xf32>, vector<10x160xf32> -> vector<10x160xf32>
    %127 = arith.addf %118, %126 : vector<10x160xf32>
    %c2_89 = arith.constant 2 : index
    %c0_90 = arith.constant 0 : index
    %c0_91 = arith.constant 0 : index
    %128 = vector.load %arg8[%c2_89, %c0_90, %c0_91] : memref<5x180x160xf32, #tpu.memory_space<vmem>>, vector<1x180x160xf32>
    %129 = vector.shape_cast %128 : vector<1x180x160xf32> to vector<180x160xf32>
    %cst_92 = arith.constant dense<0.000000e+00> : vector<10x160xf32>
    %130 = tpu.matmul %123, %129, %cst_92 {dimension_numbers = #tpu.dot_dimension_numbers<[1], [0], [0], [1], [0, 0, 1, 1], [], []>} : vector<10x180xf32>, vector<180x160xf32>, vector<10x160xf32> -> vector<10x160xf32>
    %131 = arith.addf %122, %130 : vector<10x160xf32>
    %132 = vector.extract_strided_slice %101 {offsets = [3, 0], sizes = [10, 180], strides = [1, 1]} : vector<15x180xf32> to vector<10x180xf32>
    %c3_93 = arith.constant 3 : index
    %c0_94 = arith.constant 0 : index
    %c0_95 = arith.constant 0 : index
    %133 = vector.load %arg7[%c3_93, %c0_94, %c0_95] : memref<5x180x160xf32, #tpu.memory_space<vmem>>, vector<1x180x160xf32>
    %134 = vector.shape_cast %133 : vector<1x180x160xf32> to vector<180x160xf32>
    %cst_96 = arith.constant dense<0.000000e+00> : vector<10x160xf32>
    %135 = tpu.matmul %132, %134, %cst_96 {dimension_numbers = #tpu.dot_dimension_numbers<[1], [0], [0], [1], [0, 0, 1, 1], [], []>} : vector<10x180xf32>, vector<180x160xf32>, vector<10x160xf32> -> vector<10x160xf32>
    %136 = arith.addf %127, %135 : vector<10x160xf32>
    %c3_97 = arith.constant 3 : index
    %c0_98 = arith.constant 0 : index
    %c0_99 = arith.constant 0 : index
    %137 = vector.load %arg8[%c3_97, %c0_98, %c0_99] : memref<5x180x160xf32, #tpu.memory_space<vmem>>, vector<1x180x160xf32>
    %138 = vector.shape_cast %137 : vector<1x180x160xf32> to vector<180x160xf32>
    %cst_100 = arith.constant dense<0.000000e+00> : vector<10x160xf32>
    %139 = tpu.matmul %132, %138, %cst_100 {dimension_numbers = #tpu.dot_dimension_numbers<[1], [0], [0], [1], [0, 0, 1, 1], [], []>} : vector<10x180xf32>, vector<180x160xf32>, vector<10x160xf32> -> vector<10x160xf32>
    %140 = arith.addf %131, %139 : vector<10x160xf32>
    %141 = vector.extract_strided_slice %101 {offsets = [4, 0], sizes = [10, 180], strides = [1, 1]} : vector<15x180xf32> to vector<10x180xf32>
    %c4_101 = arith.constant 4 : index
    %c0_102 = arith.constant 0 : index
    %c0_103 = arith.constant 0 : index
    %142 = vector.load %arg7[%c4_101, %c0_102, %c0_103] : memref<5x180x160xf32, #tpu.memory_space<vmem>>, vector<1x180x160xf32>
    %143 = vector.shape_cast %142 : vector<1x180x160xf32> to vector<180x160xf32>
    %cst_104 = arith.constant dense<0.000000e+00> : vector<10x160xf32>
    %144 = tpu.matmul %141, %143, %cst_104 {dimension_numbers = #tpu.dot_dimension_numbers<[1], [0], [0], [1], [0, 0, 1, 1], [], []>} : vector<10x180xf32>, vector<180x160xf32>, vector<10x160xf32> -> vector<10x160xf32>
    %145 = arith.addf %136, %144 : vector<10x160xf32>
    %c4_105 = arith.constant 4 : index
    %c0_106 = arith.constant 0 : index
    %c0_107 = arith.constant 0 : index
    %146 = vector.load %arg8[%c4_105, %c0_106, %c0_107] : memref<5x180x160xf32, #tpu.memory_space<vmem>>, vector<1x180x160xf32>
    %147 = vector.shape_cast %146 : vector<1x180x160xf32> to vector<180x160xf32>
    %cst_108 = arith.constant dense<0.000000e+00> : vector<10x160xf32>
    %148 = tpu.matmul %141, %147, %cst_108 {dimension_numbers = #tpu.dot_dimension_numbers<[1], [0], [0], [1], [0, 0, 1, 1], [], []>} : vector<10x180xf32>, vector<180x160xf32>, vector<10x160xf32> -> vector<10x160xf32>
    %149 = arith.addf %140, %148 : vector<10x160xf32>
    %150 = arith.maximumf %145, %149 : vector<10x160xf32>
    %c0_109 = arith.constant 0 : index
    %c0_110 = arith.constant 0 : index
    %151 = vector.load %arg11[%c0_109, %c0_110] : memref<1x10xf32, #tpu.memory_space<vmem>>, vector<1x10xf32>
    %152 = vector.extract_strided_slice %150 {offsets = [0, 0], sizes = [1, 160], strides = [1, 1]} : vector<10x160xf32> to vector<1x160xf32>
    %153 = vector.extract_strided_slice %150 {offsets = [1, 0], sizes = [1, 160], strides = [1, 1]} : vector<10x160xf32> to vector<1x160xf32>
    %154 = arith.maximumf %152, %153 : vector<1x160xf32>
    %c0_111 = arith.constant 0 : index
    %c0_112 = arith.constant 0 : index
    %155 = vector.load %arg9[%c0_111, %c0_112] : memref<1x160xf32, #tpu.memory_space<vmem>>, vector<1x160xf32>
    %156 = arith.addf %154, %155 : vector<1x160xf32>
    %c0_113 = arith.constant 0 : index
    %c0_114 = arith.constant 0 : index
    %157 = vector.load %arg14[%c0_113, %c0_114] : memref<5x160xf32, #tpu.memory_space<vmem>>, vector<1x160xf32>
    %cst_115 = arith.constant 1.000000e+00 : f32
    %158 = vector.broadcast %cst_115 : f32 to vector<1x160xf32>
    %159 = arith.cmpf ogt, %157, %158 : vector<1x160xf32>
    %160 = arith.extui %159 : vector<1x160xi1> to vector<1x160xi32>
    %161 = arith.sitofp %160 : vector<1x160xi32> to vector<1x160xf32>
    %cst_116 = arith.constant 0.899999976 : f32
    %162 = vector.broadcast %cst_116 : f32 to vector<1x160xf32>
    %163 = arith.mulf %162, %157 : vector<1x160xf32>
    %164 = arith.addf %163, %156 : vector<1x160xf32>
    %cst_117 = arith.constant 1.000000e+00 : f32
    %165 = vector.broadcast %cst_117 : f32 to vector<1x160xf32>
    %166 = arith.mulf %161, %165 : vector<1x160xf32>
    %167 = arith.subf %164, %166 : vector<1x160xf32>
    %cst_118 = arith.constant 1.000000e+00 : f32
    %168 = vector.broadcast %cst_118 : f32 to vector<1x160xf32>
    %169 = arith.cmpf ogt, %167, %168 : vector<1x160xf32>
    %170 = arith.extui %169 : vector<1x160xi1> to vector<1x160xi32>
    %171 = arith.sitofp %170 : vector<1x160xi32> to vector<1x160xf32>
    %c0_119 = arith.constant 0 : index
    %c0_120 = arith.constant 0 : index
    %172 = vector.load %arg14[%c0_119, %c0_120] : memref<5x160xf32, #tpu.memory_space<vmem>>, vector<1x160xf32>
    tpu.vector_store %arg14[%c0_119, %c0_120], %167 {strides = array<i32>} : memref<5x160xf32, #tpu.memory_space<vmem>>, vector<1x160xf32>,
    %c0_121 = arith.constant 0 : index
    %c0_122 = arith.constant 0 : index
    %c0_123 = arith.constant 0 : index
    %173 = vector.load %arg10[%c0_121, %c0_122, %c0_123] : memref<5x160x10xf32, #tpu.memory_space<vmem>>, vector<1x160x10xf32>
    %174 = vector.shape_cast %173 : vector<1x160x10xf32> to vector<160x10xf32>
    %cst_124 = arith.constant dense<0.000000e+00> : vector<1x10xf32>
    %175 = tpu.matmul %171, %174, %cst_124 {dimension_numbers = #tpu.dot_dimension_numbers<[1], [0], [0], [1], [0, 0, 1, 1], [], []>} : vector<1x160xf32>, vector<160x10xf32>, vector<1x10xf32> -> vector<1x10xf32>
    %176 = arith.addf %151, %175 : vector<1x10xf32>
    %177 = vector.extract_strided_slice %150 {offsets = [2, 0], sizes = [1, 160], strides = [1, 1]} : vector<10x160xf32> to vector<1x160xf32>
    %178 = vector.extract_strided_slice %150 {offsets = [3, 0], sizes = [1, 160], strides = [1, 1]} : vector<10x160xf32> to vector<1x160xf32>
    %179 = arith.maximumf %177, %178 : vector<1x160xf32>
    %c0_125 = arith.constant 0 : index
    %c0_126 = arith.constant 0 : index
    %180 = vector.load %arg9[%c0_125, %c0_126] : memref<1x160xf32, #tpu.memory_space<vmem>>, vector<1x160xf32>
    %181 = arith.addf %179, %180 : vector<1x160xf32>
    %c1_127 = arith.constant 1 : index
    %c0_128 = arith.constant 0 : index
    %182 = vector.load %arg14[%c1_127, %c0_128] : memref<5x160xf32, #tpu.memory_space<vmem>>, vector<1x160xf32>
    %cst_129 = arith.constant 1.000000e+00 : f32
    %183 = vector.broadcast %cst_129 : f32 to vector<1x160xf32>
    %184 = arith.cmpf ogt, %182, %183 : vector<1x160xf32>
    %185 = arith.extui %184 : vector<1x160xi1> to vector<1x160xi32>
    %186 = arith.sitofp %185 : vector<1x160xi32> to vector<1x160xf32>
    %cst_130 = arith.constant 0.899999976 : f32
    %187 = vector.broadcast %cst_130 : f32 to vector<1x160xf32>
    %188 = arith.mulf %187, %182 : vector<1x160xf32>
    %189 = arith.addf %188, %181 : vector<1x160xf32>
    %cst_131 = arith.constant 1.000000e+00 : f32
    %190 = vector.broadcast %cst_131 : f32 to vector<1x160xf32>
    %191 = arith.mulf %186, %190 : vector<1x160xf32>
    %192 = arith.subf %189, %191 : vector<1x160xf32>
    %cst_132 = arith.constant 1.000000e+00 : f32
    %193 = vector.broadcast %cst_132 : f32 to vector<1x160xf32>
    %194 = arith.cmpf ogt, %192, %193 : vector<1x160xf32>
    %195 = arith.extui %194 : vector<1x160xi1> to vector<1x160xi32>
    %196 = arith.sitofp %195 : vector<1x160xi32> to vector<1x160xf32>
    %c1_133 = arith.constant 1 : index
    %c0_134 = arith.constant 0 : index
    %197 = vector.load %arg14[%c1_133, %c0_134] : memref<5x160xf32, #tpu.memory_space<vmem>>, vector<1x160xf32>
    tpu.vector_store %arg14[%c1_133, %c0_134], %192 {strides = array<i32>} : memref<5x160xf32, #tpu.memory_space<vmem>>, vector<1x160xf32>,
    %c1_135 = arith.constant 1 : index
    %c0_136 = arith.constant 0 : index
    %c0_137 = arith.constant 0 : index
    %198 = vector.load %arg10[%c1_135, %c0_136, %c0_137] : memref<5x160x10xf32, #tpu.memory_space<vmem>>, vector<1x160x10xf32>
    %199 = vector.shape_cast %198 : vector<1x160x10xf32> to vector<160x10xf32>
    %cst_138 = arith.constant dense<0.000000e+00> : vector<1x10xf32>
    %200 = tpu.matmul %196, %199, %cst_138 {dimension_numbers = #tpu.dot_dimension_numbers<[1], [0], [0], [1], [0, 0, 1, 1], [], []>} : vector<1x160xf32>, vector<160x10xf32>, vector<1x10xf32> -> vector<1x10xf32>
    %201 = arith.addf %176, %200 : vector<1x10xf32>
    %202 = vector.extract_strided_slice %150 {offsets = [4, 0], sizes = [1, 160], strides = [1, 1]} : vector<10x160xf32> to vector<1x160xf32>
    %203 = vector.extract_strided_slice %150 {offsets = [5, 0], sizes = [1, 160], strides = [1, 1]} : vector<10x160xf32> to vector<1x160xf32>
    %204 = arith.maximumf %202, %203 : vector<1x160xf32>
    %c0_139 = arith.constant 0 : index
    %c0_140 = arith.constant 0 : index
    %205 = vector.load %arg9[%c0_139, %c0_140] : memref<1x160xf32, #tpu.memory_space<vmem>>, vector<1x160xf32>
    %206 = arith.addf %204, %205 : vector<1x160xf32>
    %c2_141 = arith.constant 2 : index
    %c0_142 = arith.constant 0 : index
    %207 = vector.load %arg14[%c2_141, %c0_142] : memref<5x160xf32, #tpu.memory_space<vmem>>, vector<1x160xf32>
    %cst_143 = arith.constant 1.000000e+00 : f32
    %208 = vector.broadcast %cst_143 : f32 to vector<1x160xf32>
    %209 = arith.cmpf ogt, %207, %208 : vector<1x160xf32>
    %210 = arith.extui %209 : vector<1x160xi1> to vector<1x160xi32>
    %211 = arith.sitofp %210 : vector<1x160xi32> to vector<1x160xf32>
    %cst_144 = arith.constant 0.899999976 : f32
    %212 = vector.broadcast %cst_144 : f32 to vector<1x160xf32>
    %213 = arith.mulf %212, %207 : vector<1x160xf32>
    %214 = arith.addf %213, %206 : vector<1x160xf32>
    %cst_145 = arith.constant 1.000000e+00 : f32
    %215 = vector.broadcast %cst_145 : f32 to vector<1x160xf32>
    %216 = arith.mulf %211, %215 : vector<1x160xf32>
    %217 = arith.subf %214, %216 : vector<1x160xf32>
    %cst_146 = arith.constant 1.000000e+00 : f32
    %218 = vector.broadcast %cst_146 : f32 to vector<1x160xf32>
    %219 = arith.cmpf ogt, %217, %218 : vector<1x160xf32>
    %220 = arith.extui %219 : vector<1x160xi1> to vector<1x160xi32>
    %221 = arith.sitofp %220 : vector<1x160xi32> to vector<1x160xf32>
    %c2_147 = arith.constant 2 : index
    %c0_148 = arith.constant 0 : index
    %222 = vector.load %arg14[%c2_147, %c0_148] : memref<5x160xf32, #tpu.memory_space<vmem>>, vector<1x160xf32>
    tpu.vector_store %arg14[%c2_147, %c0_148], %217 {strides = array<i32>} : memref<5x160xf32, #tpu.memory_space<vmem>>, vector<1x160xf32>,
    %c2_149 = arith.constant 2 : index
    %c0_150 = arith.constant 0 : index
    %c0_151 = arith.constant 0 : index
    %223 = vector.load %arg10[%c2_149, %c0_150, %c0_151] : memref<5x160x10xf32, #tpu.memory_space<vmem>>, vector<1x160x10xf32>
    %224 = vector.shape_cast %223 : vector<1x160x10xf32> to vector<160x10xf32>
    %cst_152 = arith.constant dense<0.000000e+00> : vector<1x10xf32>
    %225 = tpu.matmul %221, %224, %cst_152 {dimension_numbers = #tpu.dot_dimension_numbers<[1], [0], [0], [1], [0, 0, 1, 1], [], []>} : vector<1x160xf32>, vector<160x10xf32>, vector<1x10xf32> -> vector<1x10xf32>
    %226 = arith.addf %201, %225 : vector<1x10xf32>
    %227 = vector.extract_strided_slice %150 {offsets = [6, 0], sizes = [1, 160], strides = [1, 1]} : vector<10x160xf32> to vector<1x160xf32>
    %228 = vector.extract_strided_slice %150 {offsets = [7, 0], sizes = [1, 160], strides = [1, 1]} : vector<10x160xf32> to vector<1x160xf32>
    %229 = arith.maximumf %227, %228 : vector<1x160xf32>
    %c0_153 = arith.constant 0 : index
    %c0_154 = arith.constant 0 : index
    %230 = vector.load %arg9[%c0_153, %c0_154] : memref<1x160xf32, #tpu.memory_space<vmem>>, vector<1x160xf32>
    %231 = arith.addf %229, %230 : vector<1x160xf32>
    %c3_155 = arith.constant 3 : index
    %c0_156 = arith.constant 0 : index
    %232 = vector.load %arg14[%c3_155, %c0_156] : memref<5x160xf32, #tpu.memory_space<vmem>>, vector<1x160xf32>
    %cst_157 = arith.constant 1.000000e+00 : f32
    %233 = vector.broadcast %cst_157 : f32 to vector<1x160xf32>
    %234 = arith.cmpf ogt, %232, %233 : vector<1x160xf32>
    %235 = arith.extui %234 : vector<1x160xi1> to vector<1x160xi32>
    %236 = arith.sitofp %235 : vector<1x160xi32> to vector<1x160xf32>
    %cst_158 = arith.constant 0.899999976 : f32
    %237 = vector.broadcast %cst_158 : f32 to vector<1x160xf32>
    %238 = arith.mulf %237, %232 : vector<1x160xf32>
    %239 = arith.addf %238, %231 : vector<1x160xf32>
    %cst_159 = arith.constant 1.000000e+00 : f32
    %240 = vector.broadcast %cst_159 : f32 to vector<1x160xf32>
    %241 = arith.mulf %236, %240 : vector<1x160xf32>
    %242 = arith.subf %239, %241 : vector<1x160xf32>
    %cst_160 = arith.constant 1.000000e+00 : f32
    %243 = vector.broadcast %cst_160 : f32 to vector<1x160xf32>
    %244 = arith.cmpf ogt, %242, %243 : vector<1x160xf32>
    %245 = arith.extui %244 : vector<1x160xi1> to vector<1x160xi32>
    %246 = arith.sitofp %245 : vector<1x160xi32> to vector<1x160xf32>
    %c3_161 = arith.constant 3 : index
    %c0_162 = arith.constant 0 : index
    %247 = vector.load %arg14[%c3_161, %c0_162] : memref<5x160xf32, #tpu.memory_space<vmem>>, vector<1x160xf32>
    tpu.vector_store %arg14[%c3_161, %c0_162], %242 {strides = array<i32>} : memref<5x160xf32, #tpu.memory_space<vmem>>, vector<1x160xf32>,
    %c3_163 = arith.constant 3 : index
    %c0_164 = arith.constant 0 : index
    %c0_165 = arith.constant 0 : index
    %248 = vector.load %arg10[%c3_163, %c0_164, %c0_165] : memref<5x160x10xf32, #tpu.memory_space<vmem>>, vector<1x160x10xf32>
    %249 = vector.shape_cast %248 : vector<1x160x10xf32> to vector<160x10xf32>
    %cst_166 = arith.constant dense<0.000000e+00> : vector<1x10xf32>
    %250 = tpu.matmul %246, %249, %cst_166 {dimension_numbers = #tpu.dot_dimension_numbers<[1], [0], [0], [1], [0, 0, 1, 1], [], []>} : vector<1x160xf32>, vector<160x10xf32>, vector<1x10xf32> -> vector<1x10xf32>
    %251 = arith.addf %226, %250 : vector<1x10xf32>
    %252 = vector.extract_strided_slice %150 {offsets = [8, 0], sizes = [1, 160], strides = [1, 1]} : vector<10x160xf32> to vector<1x160xf32>
    %253 = vector.extract_strided_slice %150 {offsets = [9, 0], sizes = [1, 160], strides = [1, 1]} : vector<10x160xf32> to vector<1x160xf32>
    %254 = arith.maximumf %252, %253 : vector<1x160xf32>
    %c0_167 = arith.constant 0 : index
    %c0_168 = arith.constant 0 : index
    %255 = vector.load %arg9[%c0_167, %c0_168] : memref<1x160xf32, #tpu.memory_space<vmem>>, vector<1x160xf32>
    %256 = arith.addf %254, %255 : vector<1x160xf32>
    %c4_169 = arith.constant 4 : index
    %c0_170 = arith.constant 0 : index
    %257 = vector.load %arg14[%c4_169, %c0_170] : memref<5x160xf32, #tpu.memory_space<vmem>>, vector<1x160xf32>
    %cst_171 = arith.constant 1.000000e+00 : f32
    %258 = vector.broadcast %cst_171 : f32 to vector<1x160xf32>
    %259 = arith.cmpf ogt, %257, %258 : vector<1x160xf32>
    %260 = arith.extui %259 : vector<1x160xi1> to vector<1x160xi32>
    %261 = arith.sitofp %260 : vector<1x160xi32> to vector<1x160xf32>
    %cst_172 = arith.constant 0.899999976 : f32
    %262 = vector.broadcast %cst_172 : f32 to vector<1x160xf32>
    %263 = arith.mulf %262, %257 : vector<1x160xf32>
    %264 = arith.addf %263, %256 : vector<1x160xf32>
    %cst_173 = arith.constant 1.000000e+00 : f32
    %265 = vector.broadcast %cst_173 : f32 to vector<1x160xf32>
    %266 = arith.mulf %261, %265 : vector<1x160xf32>
    %267 = arith.subf %264, %266 : vector<1x160xf32>
    %cst_174 = arith.constant 1.000000e+00 : f32
    %268 = vector.broadcast %cst_174 : f32 to vector<1x160xf32>
    %269 = arith.cmpf ogt, %267, %268 : vector<1x160xf32>
    %270 = arith.extui %269 : vector<1x160xi1> to vector<1x160xi32>
    %271 = arith.sitofp %270 : vector<1x160xi32> to vector<1x160xf32>
    %c4_175 = arith.constant 4 : index
    %c0_176 = arith.constant 0 : index
    %272 = vector.load %arg14[%c4_175, %c0_176] : memref<5x160xf32, #tpu.memory_space<vmem>>, vector<1x160xf32>
    tpu.vector_store %arg14[%c4_175, %c0_176], %267 {strides = array<i32>} : memref<5x160xf32, #tpu.memory_space<vmem>>, vector<1x160xf32>,
    %c4_177 = arith.constant 4 : index
    %c0_178 = arith.constant 0 : index
    %c0_179 = arith.constant 0 : index
    %273 = vector.load %arg10[%c4_177, %c0_178, %c0_179] : memref<5x160x10xf32, #tpu.memory_space<vmem>>, vector<1x160x10xf32>
    %274 = vector.shape_cast %273 : vector<1x160x10xf32> to vector<160x10xf32>
    %cst_180 = arith.constant dense<0.000000e+00> : vector<1x10xf32>
    %275 = tpu.matmul %271, %274, %cst_180 {dimension_numbers = #tpu.dot_dimension_numbers<[1], [0], [0], [1], [0, 0, 1, 1], [], []>} : vector<1x160xf32>, vector<160x10xf32>, vector<1x10xf32> -> vector<1x10xf32>
    %276 = arith.addf %251, %275 : vector<1x10xf32>
    %c0_181 = arith.constant 0 : index
    %c0_182 = arith.constant 0 : index
    %277 = vector.load %arg15[%c0_181, %c0_182] : memref<1x10xf32, #tpu.memory_space<vmem>>, vector<1x10xf32>
    %cst_183 = arith.constant 1.000000e+00 : f32
    %278 = vector.broadcast %cst_183 : f32 to vector<1x10xf32>
    %279 = arith.cmpf ogt, %277, %278 : vector<1x10xf32>
    %280 = arith.extui %279 : vector<1x10xi1> to vector<1x10xi32>
    %281 = arith.sitofp %280 : vector<1x10xi32> to vector<1x10xf32>
    %cst_184 = arith.constant 0.899999976 : f32
    %282 = vector.broadcast %cst_184 : f32 to vector<1x10xf32>
    %283 = arith.mulf %282, %277 : vector<1x10xf32>
    %284 = arith.addf %283, %276 : vector<1x10xf32>
    %cst_185 = arith.constant 1.000000e+00 : f32
    %285 = vector.broadcast %cst_185 : f32 to vector<1x10xf32>
    %286 = arith.mulf %281, %285 : vector<1x10xf32>
    %287 = arith.subf %284, %286 : vector<1x10xf32>
    %cst_186 = arith.constant 1.000000e+00 : f32
    %288 = vector.broadcast %cst_186 : f32 to vector<1x10xf32>
    %289 = arith.cmpf ogt, %287, %288 : vector<1x10xf32>
    %290 = arith.extui %289 : vector<1x10xi1> to vector<1x10xi32>
    %291 = arith.sitofp %290 : vector<1x10xi32> to vector<1x10xf32>
    %c0_187 = arith.constant 0 : index
    %c0_188 = arith.constant 0 : index
    %292 = vector.load %arg15[%c0_187, %c0_188] : memref<1x10xf32, #tpu.memory_space<vmem>>, vector<1x10xf32>
    tpu.vector_store %arg15[%c0_187, %c0_188], %287 {strides = array<i32>} : memref<1x10xf32, #tpu.memory_space<vmem>>, vector<1x10xf32>,
    %c0_189 = arith.constant 0 : index
    %293 = arith.index_cast %arg1 : i32 to index
    %c0_190 = arith.constant 0 : index
    %294 = vector.load %arg12[%c0_189, %293, %c0_190] : memref<1x3x10xf32, #tpu.memory_space<vmem>>, vector<1x1x10xf32>
    %295 = vector.shape_cast %294 : vector<1x1x10xf32> to vector<1x10xf32>
    %296 = vector.shape_cast %291 : vector<1x10xf32> to vector<1x1x10xf32>
    tpu.vector_store %arg12[%c0_189, %293, %c0_190], %296 {strides = array<i32>} : memref<1x3x10xf32, #tpu.memory_space<vmem>>, vector<1x1x10xf32>,
    return
  }
  func.func @transform_0(%arg0: i32, %arg1: i32) -> (i32, i32, i32, i32) {
    %c0_i32 = arith.constant 0 : i32
    %c0_i32_0 = arith.constant 0 : i32
    %c0_i32_1 = arith.constant 0 : i32
    return %arg1, %arg0, %c0_i32, %c0_i32_0 : i32, i32, i32, i32
  }
  func.func @transform_1(%arg0: i32, %arg1: i32) -> (i32, i32, i32, i32) {
    %c0_i32 = arith.constant 0 : i32
    %c0_i32_0 = arith.constant 0 : i32
    %c0_i32_1 = arith.constant 0 : i32
    return %arg1, %arg0, %c0_i32, %c0_i32_0 : i32, i32, i32, i32
  }
  func.func @transform_2(%arg0: i32, %arg1: i32) -> (i32, i32, i32) {
    %c0_i32 = arith.constant 0 : i32
    %c0_i32_0 = arith.constant 0 : i32
    %c0_i32_1 = arith.constant 0 : i32
    %c0_i32_2 = arith.constant 0 : i32
    return %c0_i32, %c0_i32_0, %c0_i32_1 : i32, i32, i32
  }
  func.func @transform_3(%arg0: i32, %arg1: i32) -> (i32, i32, i32) {
    %c0_i32 = arith.constant 0 : i32
    %c0_i32_0 = arith.constant 0 : i32
    %c0_i32_1 = arith.constant 0 : i32
    %c0_i32_2 = arith.constant 0 : i32
    return %c0_i32, %c0_i32_0, %c0_i32_1 : i32, i32, i32
  }
  func.func @transform_4(%arg0: i32, %arg1: i32) -> (i32, i32) {
    %c0_i32 = arith.constant 0 : i32
    %c0_i32_0 = arith.constant 0 : i32
    %c0_i32_1 = arith.constant 0 : i32
    return %c0_i32, %c0_i32_0 : i32, i32
  }
  func.func @transform_5(%arg0: i32, %arg1: i32) -> (i32, i32, i32) {
    %c0_i32 = arith.constant 0 : i32
    %c0_i32_0 = arith.constant 0 : i32
    %c0_i32_1 = arith.constant 0 : i32
    %c0_i32_2 = arith.constant 0 : i32
    return %c0_i32, %c0_i32_0, %c0_i32_1 : i32, i32, i32
  }
  func.func @transform_6(%arg0: i32, %arg1: i32) -> (i32, i32, i32) {
    %c0_i32 = arith.constant 0 : i32
    %c0_i32_0 = arith.constant 0 : i32
    %c0_i32_1 = arith.constant 0 : i32
    %c0_i32_2 = arith.constant 0 : i32
    return %c0_i32, %c0_i32_0, %c0_i32_1 : i32, i32, i32
  }
  func.func @transform_7(%arg0: i32, %arg1: i32) -> (i32, i32) {
    %c0_i32 = arith.constant 0 : i32
    %c0_i32_0 = arith.constant 0 : i32
    %c0_i32_1 = arith.constant 0 : i32
    return %c0_i32, %c0_i32_0 : i32, i32
  }
  func.func @transform_8(%arg0: i32, %arg1: i32) -> (i32, i32, i32) {
    %c0_i32 = arith.constant 0 : i32
    %c0_i32_0 = arith.constant 0 : i32
    %c0_i32_1 = arith.constant 0 : i32
    %c0_i32_2 = arith.constant 0 : i32
    return %c0_i32, %c0_i32_0, %c0_i32_1 : i32, i32, i32
  }
  func.func @transform_9(%arg0: i32, %arg1: i32) -> (i32, i32) {
    %c0_i32 = arith.constant 0 : i32
    %c0_i32_0 = arith.constant 0 : i32
    %c0_i32_1 = arith.constant 0 : i32
    return %c0_i32, %c0_i32_0 : i32, i32
  }
  func.func @transform_10(%arg0: i32, %arg1: i32) -> (i32, i32, i32) {
    %c0_i32 = arith.constant 0 : i32
    %c0_i32_0 = arith.constant 0 : i32
    %c0_i32_1 = arith.constant 0 : i32
    return %arg0, %c0_i32, %c0_i32_0 : i32, i32, i32
  }
}

</mosaic_0001>

<llo_original>
// kernel: snn_forward.1
$region0: #{snn_forward.1}
  #allocation0 [shape = 'u32[]', space=smem, size = 0x4, offset = 0x4, fixed_abs, tag = 'smem constant byte address 0x4 - core index']
  #allocation1 [shape = 'u32[72,128]{1,0:T(1,128)}', space=vmem, size = 0x9000, scoped, tag = 'internal scratch']
  #allocation2 [shape = 'f32[15,180]{1,0:T(8,128)}', space=vmem, size = 0x4000, scoped, tag = 'scratch operand']
  #allocation3 [shape = 'f32[5,160]{1,0:T(8,128)}', space=vmem, size = 0x2000, scoped, tag = 'scratch operand']
  #allocation4 [shape = 'f32[1,10]{1,0:T(1,128)}', space=vmem, size = 0x200, scoped, tag = 'scratch operand']
  %s0 = inlined_call_operand.vmem [shape: f32[3,2,17,68], index: 0, kind: input, shape index: {}]
  %s1 = inlined_call_operand.vmem [shape: f32[3,2,17,68], index: 1, kind: input, shape index: {}]
  %s2 = inlined_call_operand.vmem [shape: f32[5,68,180], index: 2, kind: input, shape index: {}]
  %s3 = inlined_call_operand.vmem [shape: f32[5,68,180], index: 3, kind: input, shape index: {}]
  %s4 = inlined_call_operand.vmem [shape: f32[1,180], index: 4, kind: input, shape index: {}]
  %s5 = inlined_call_operand.vmem [shape: f32[5,180,160], index: 5, kind: input, shape index: {}]
  %s6 = inlined_call_operand.vmem [shape: f32[5,180,160], index: 6, kind: input, shape index: {}]
  %s7 = inlined_call_operand.vmem [shape: f32[1,160], index: 7, kind: input, shape index: {}]
  %s8 = inlined_call_operand.vmem [shape: f32[5,160,10], index: 8, kind: input, shape index: {}]
  %s9 = inlined_call_operand.vmem [shape: f32[1,10], index: 9, kind: input, shape index: {}]
  %s10 = inlined_call_operand.vmem [shape: f32[2,3,10], index: 10, kind: output, shape index: {}]
  %s11 = sld [smem:[#allocation0]]
  $region77: #{snn_forward.1} parent=0
    _
  %s13 = ssub.s32 1, %s11
  %s14 = scalar_select 0, %s13, %s11
  loop: start=0, step=1, limit=8
  $region2: #{snn_forward.1} parent=0 // loop_pre_header
    _
  $region3: #{snn_forward.1} parent=0 // loop_header
    %s16 = sphi 0, %s20
    %p17 = scmp.ge.s32.totalorder %s16, 8
    %s23 = sphi 0, %s35
    %s24 = sphi 0, %s31
    %s25 = sphi 0, %s23
    %s26 = sphi 0, %s24
    %s27 = sphi 0, %s25
    %s28 = sphi 0, %s26
    %s40 = sphi 0, %s42
    %s43 = sphi 0, %s40
    %s44 = sphi 0, %s43
    %s60 = sphi 0, %s44
    %s68 = sphi 0, %s70
    %s71 = sphi 0, %s68
    %s72 = sphi 0, %s71
    %s88 = sphi 0, %s72
    %s92 = sphi 0, %s92
    %s94 = sphi 0, %s92
    %s95 = sphi 0, %s94
    %s109 = sphi 0, %s95
    %s113 = sphi 0, %s113
    %s115 = sphi 0, %s113
    %s116 = sphi 0, %s115
    %s130 = sphi 0, %s116
    %s134 = sphi 0, %s134
    %s136 = sphi 0, %s134
    %s137 = sphi 0, %s136
    %s151 = sphi 0, %s137
    %s155 = sphi 0, %s155
    %s157 = sphi 0, %s155
    %s158 = sphi 0, %s157
    %s172 = sphi 0, %s158
    %s176 = sphi 0, %s176
    %s178 = sphi 0, %s176
    %s179 = sphi 0, %s178
    %s193 = sphi 0, %s179
    %s197 = sphi 0, %s197
    %s199 = sphi 0, %s197
    %s200 = sphi 0, %s199
    %s214 = sphi 0, %s200
    %s218 = sphi 0, %s218
    %s220 = sphi 0, %s218
    %s221 = sphi 0, %s220
    %s235 = sphi 0, %s221
    %s239 = sphi 0, %s239
    %s241 = sphi 0, %s239
    %s242 = sphi 0, %s241
    %s256 = sphi 0, %s242
    %s262 = sphi 0, %s264
    %s265 = sphi 0, %s262
    %s266 = sphi 0, %s265
    %s282 = sphi 0, %s266
  $region4: #{snn_forward.1} parent=0 // loop_header_branch
    %19 = sbr.rel (%p17) target = $region8
  $region5: #{snn_forward.1} parent=0 // loop_body
    %s21 = ssub.s32 %s16, 1
    %s22 = ssub.s32 %s16, 2
    %s29 = sadd.s32 1, %s24
    %p30 = scmp.ge.s32.totalorder %s29, 3
    %s31 = scalar_select %p30, 0, %s29
    %s32 = sadd.s32 1, %s23
    %s33 = scalar_select %p30, %s32, %s23
    %p34 = scmp.ge.s32.totalorder %s33, 2
    %s35 = scalar_select %p34, 0, %s33
    %s36 = ssub.s32 %s24, %s31
    %s37 = ssub.s32 %s23, %s35
    %s38 = sor.u32 %s36, %s37
    %p39 = scmp.eq.s32.totalorder %s38, 0
    %s41 = sadd.s32 %s40, 1
    %s42 = scalar_select %p39, %s40, %s41
    %p45 = pneg %p39
    %p46 = scmp.eq.s32.totalorder %s16, 5
    %p47 = por %p45, %p46
    %p48 = scmp.ne.s32.totalorder %s40, %s43
    %p49 = scmp.eq.s32.totalorder %s16, 0
    %p50 = por %p48, %p49
    %p51 = scmp.ne.s32.totalorder %s40, %s43
    %p52 = scmp.eq.s32.totalorder %s21, 5
    %p53 = por %p51, %p52
    %p54 = scmp.ne.s32.totalorder %s43, %s44
    %p55 = scmp.eq.s32.totalorder %s21, 0
    %p56 = por %p54, %p55
    %p57 = scmp.ne.s32.totalorder %s43, %s44
    %p58 = scmp.eq.s32.totalorder %s22, 5
    %p59 = por %p57, %p58
    %p61 = scmp.ne.s32.totalorder %s44, %s60
    %p62 = scmp.eq.s32.totalorder %s22, 0
    %p63 = por %p61, %p62
    %s64 = ssub.s32 %s24, %s31
    %s65 = ssub.s32 %s23, %s35
    %s66 = sor.u32 %s64, %s65
    %p67 = scmp.eq.s32.totalorder %s66, 0
    %s69 = sadd.s32 %s68, 1
    %s70 = scalar_select %p67, %s68, %s69
    %p73 = pneg %p67
    %p74 = scmp.eq.s32.totalorder %s16, 5
    %p75 = por %p73, %p74
    %p76 = scmp.ne.s32.totalorder %s68, %s71
    %p77 = scmp.eq.s32.totalorder %s16, 0
    %p78 = por %p76, %p77
    %p79 = scmp.ne.s32.totalorder %s68, %s71
    %p80 = scmp.eq.s32.totalorder %s21, 5
    %p81 = por %p79, %p80
    %p82 = scmp.ne.s32.totalorder %s71, %s72
    %p83 = scmp.eq.s32.totalorder %s21, 0
    %p84 = por %p82, %p83
    %p85 = scmp.ne.s32.totalorder %s71, %s72
    %p86 = scmp.eq.s32.totalorder %s22, 5
    %p87 = por %p85, %p86
    %p89 = scmp.ne.s32.totalorder %s72, %s88
    %p90 = scmp.eq.s32.totalorder %s22, 0
    %p91 = por %p89, %p90
    %s93 = sadd.s32 %s92, 1
    %p96 = scmp.eq.s32.totalorder %s16, 5
    %p97 = scmp.ne.s32.totalorder %s92, %s94
    %p98 = scmp.eq.s32.totalorder %s16, 0
    %p99 = por %p97, %p98
    %p100 = scmp.ne.s32.totalorder %s92, %s94
    %p101 = scmp.eq.s32.totalorder %s21, 5
    %p102 = por %p100, %p101
    %p103 = scmp.ne.s32.totalorder %s94, %s95
    %p104 = scmp.eq.s32.totalorder %s21, 0
    %p105 = por %p103, %p104
    %p106 = scmp.ne.s32.totalorder %s94, %s95
    %p107 = scmp.eq.s32.totalorder %s22, 5
    %p108 = por %p106, %p107
    %p110 = scmp.ne.s32.totalorder %s95, %s109
    %p111 = scmp.eq.s32.totalorder %s22, 0
    %p112 = por %p110, %p111
    %s114 = sadd.s32 %s113, 1
    %p117 = scmp.eq.s32.totalorder %s16, 5
    %p118 = scmp.ne.s32.totalorder %s113, %s115
    %p119 = scmp.eq.s32.totalorder %s16, 0
    %p120 = por %p118, %p119
    %p121 = scmp.ne.s32.totalorder %s113, %s115
    %p122 = scmp.eq.s32.totalorder %s21, 5
    %p123 = por %p121, %p122
    %p124 = scmp.ne.s32.totalorder %s115, %s116
    %p125 = scmp.eq.s32.totalorder %s21, 0
    %p126 = por %p124, %p125
    %p127 = scmp.ne.s32.totalorder %s115, %s116
    %p128 = scmp.eq.s32.totalorder %s22, 5
    %p129 = por %p127, %p128
    %p131 = scmp.ne.s32.totalorder %s116, %s130
    %p132 = scmp.eq.s32.totalorder %s22, 0
    %p133 = por %p131, %p132
    %s135 = sadd.s32 %s134, 1
    %p138 = scmp.eq.s32.totalorder %s16, 5
    %p139 = scmp.ne.s32.totalorder %s134, %s136
    %p140 = scmp.eq.s32.totalorder %s16, 0
    %p141 = por %p139, %p140
    %p142 = scmp.ne.s32.totalorder %s134, %s136
    %p143 = scmp.eq.s32.totalorder %s21, 5
    %p144 = por %p142, %p143
    %p145 = scmp.ne.s32.totalorder %s136, %s137
    %p146 = scmp.eq.s32.totalorder %s21, 0
    %p147 = por %p145, %p146
    %p148 = scmp.ne.s32.totalorder %s136, %s137
    %p149 = scmp.eq.s32.totalorder %s22, 5
    %p150 = por %p148, %p149
    %p152 = scmp.ne.s32.totalorder %s137, %s151
    %p153 = scmp.eq.s32.totalorder %s22, 0
    %p154 = por %p152, %p153
    %s156 = sadd.s32 %s155, 1
    %p159 = scmp.eq.s32.totalorder %s16, 5
    %p160 = scmp.ne.s32.totalorder %s155, %s157
    %p161 = scmp.eq.s32.totalorder %s16, 0
    %p162 = por %p160, %p161
    %p163 = scmp.ne.s32.totalorder %s155, %s157
    %p164 = scmp.eq.s32.totalorder %s21, 5
    %p165 = por %p163, %p164
    %p166 = scmp.ne.s32.totalorder %s157, %s158
    %p167 = scmp.eq.s32.totalorder %s21, 0
    %p168 = por %p166, %p167
    %p169 = scmp.ne.s32.totalorder %s157, %s158
    %p170 = scmp.eq.s32.totalorder %s22, 5
    %p171 = por %p169, %p170
    %p173 = scmp.ne.s32.totalorder %s158, %s172
    %p174 = scmp.eq.s32.totalorder %s22, 0
    %p175 = por %p173, %p174
    %s177 = sadd.s32 %s176, 1
    %p180 = scmp.eq.s32.totalorder %s16, 5
    %p181 = scmp.ne.s32.totalorder %s176, %s178
    %p182 = scmp.eq.s32.totalorder %s16, 0
    %p183 = por %p181, %p182
    %p184 = scmp.ne.s32.totalorder %s176, %s178
    %p185 = scmp.eq.s32.totalorder %s21, 5
    %p186 = por %p184, %p185
    %p187 = scmp.ne.s32.totalorder %s178, %s179
    %p188 = scmp.eq.s32.totalorder %s21, 0
    %p189 = por %p187, %p188
    %p190 = scmp.ne.s32.totalorder %s178, %s179
    %p191 = scmp.eq.s32.totalorder %s22, 5
    %p192 = por %p190, %p191
    %p194 = scmp.ne.s32.totalorder %s179, %s193
    %p195 = scmp.eq.s32.totalorder %s22, 0
    %p196 = por %p194, %p195
    %s198 = sadd.s32 %s197, 1
    %p201 = scmp.eq.s32.totalorder %s16, 5
    %p202 = scmp.ne.s32.totalorder %s197, %s199
    %p203 = scmp.eq.s32.totalorder %s16, 0
    %p204 = por %p202, %p203
    %p205 = scmp.ne.s32.totalorder %s197, %s199
    %p206 = scmp.eq.s32.totalorder %s21, 5
    %p207 = por %p205, %p206
    %p208 = scmp.ne.s32.totalorder %s199, %s200
    %p209 = scmp.eq.s32.totalorder %s21, 0
    %p210 = por %p208, %p209
    %p211 = scmp.ne.s32.totalorder %s199, %s200
    %p212 = scmp.eq.s32.totalorder %s22, 5
    %p213 = por %p211, %p212
    %p215 = scmp.ne.s32.totalorder %s200, %s214
    %p216 = scmp.eq.s32.totalorder %s22, 0
    %p217 = por %p215, %p216
    %s219 = sadd.s32 %s218, 1
    %p222 = scmp.eq.s32.totalorder %s16, 5
    %p223 = scmp.ne.s32.totalorder %s218, %s220
    %p224 = scmp.eq.s32.totalorder %s16, 0
    %p225 = por %p223, %p224
    %p226 = scmp.ne.s32.totalorder %s218, %s220
    %p227 = scmp.eq.s32.totalorder %s21, 5
    %p228 = por %p226, %p227
    %p229 = scmp.ne.s32.totalorder %s220, %s221
    %p230 = scmp.eq.s32.totalorder %s21, 0
    %p231 = por %p229, %p230
    %p232 = scmp.ne.s32.totalorder %s220, %s221
    %p233 = scmp.eq.s32.totalorder %s22, 5
    %p234 = por %p232, %p233
    %p236 = scmp.ne.s32.totalorder %s221, %s235
    %p237 = scmp.eq.s32.totalorder %s22, 0
    %p238 = por %p236, %p237
    %s240 = sadd.s32 %s239, 1
    %p243 = scmp.eq.s32.totalorder %s16, 5
    %p244 = scmp.ne.s32.totalorder %s239, %s241
    %p245 = scmp.eq.s32.totalorder %s16, 0
    %p246 = por %p244, %p245
    %p247 = scmp.ne.s32.totalorder %s239, %s241
    %p248 = scmp.eq.s32.totalorder %s21, 5
    %p249 = por %p247, %p248
    %p250 = scmp.ne.s32.totalorder %s241, %s242
    %p251 = scmp.eq.s32.totalorder %s21, 0
    %p252 = por %p250, %p251
    %p253 = scmp.ne.s32.totalorder %s241, %s242
    %p254 = scmp.eq.s32.totalorder %s22, 5
    %p255 = por %p253, %p254
    %p257 = scmp.ne.s32.totalorder %s242, %s256
    %p258 = scmp.eq.s32.totalorder %s22, 0
    %p259 = por %p257, %p258
    %s260 = ssub.s32 %s23, %s35
    %p261 = scmp.eq.s32.totalorder %s260, 0
    %s263 = sadd.s32 %s262, 1
    %s264 = scalar_select %p261, %s262, %s263
    %p267 = pneg %p261
    %p268 = scmp.eq.s32.totalorder %s16, 5
    %p269 = por %p267, %p268
    %p270 = scmp.ne.s32.totalorder %s262, %s265
    %p271 = scmp.eq.s32.totalorder %s16, 0
    %p272 = por %p270, %p271
    %p273 = scmp.ne.s32.totalorder %s262, %s265
    %p274 = scmp.eq.s32.totalorder %s21, 5
    %p275 = por %p273, %p274
    %p276 = scmp.ne.s32.totalorder %s265, %s266
    %p277 = scmp.eq.s32.totalorder %s21, 0
    %p278 = por %p276, %p277
    %p279 = scmp.ne.s32.totalorder %s265, %s266
    %p280 = scmp.eq.s32.totalorder %s22, 5
    %p281 = por %p279, %p280
    %p283 = scmp.ne.s32.totalorder %s266, %s282
    %p284 = scmp.eq.s32.totalorder %s22, 0
    %p285 = por %p283, %p284
    %p286 = scmp.le.s32.totalorder 1, %s16
    %p287 = scmp.lt.s32.totalorder %s16, 7
    %p288 = pnand %p286, %p287
    %p289 = pneg %p288
    // Predicated region
    $region9: #{snn_forward.1} parent=5 // pred_check
      _
    $region10: #{snn_forward.1} parent=5 // pred_check_branch
      %291 = sbr.rel (%p288) target = $region12
    $region11: #{snn_forward.1} parent=5 // pred_region
      %s292 = ssub.s32 %s16, 1
      // Predicated region
      $region13: #{snn_forward.1} parent=11 // pred_check
        %p293 = pneg %p105
      $region14: #{snn_forward.1} parent=11 // pred_check_branch
        %295 = sbr.rel (%p293) target = $region16
      $region15: #{snn_forward.1} parent=11 // pred_region
        _
      $region16: #{snn_forward.1} parent=11 // pred_fallthru
        _
      // Predicated region
      $region17: #{snn_forward.1} parent=11 // pred_check
        %p296 = pneg %p126
      $region18: #{snn_forward.1} parent=11 // pred_check_branch
        %298 = sbr.rel (%p296) target = $region20
      $region19: #{snn_forward.1} parent=11 // pred_region
        _
      $region20: #{snn_forward.1} parent=11 // pred_fallthru
        _
      // Predicated region
      $region21: #{snn_forward.1} parent=11 // pred_check
        %p299 = pneg %p147
      $region22: #{snn_forward.1} parent=11 // pred_check_branch
        %301 = sbr.rel (%p299) target = $region24
      $region23: #{snn_forward.1} parent=11 // pred_region
        _
      $region24: #{snn_forward.1} parent=11 // pred_fallthru
        _
      // Predicated region
      $region25: #{snn_forward.1} parent=11 // pred_check
        %p302 = pneg %p168
      $region26: #{snn_forward.1} parent=11 // pred_check_branch
        %304 = sbr.rel (%p302) target = $region28
      $region27: #{snn_forward.1} parent=11 // pred_region
        _
      $region28: #{snn_forward.1} parent=11 // pred_fallthru
        _
      // Predicated region
      $region29: #{snn_forward.1} parent=11 // pred_check
        %p305 = pneg %p189
      $region30: #{snn_forward.1} parent=11 // pred_check_branch
        %307 = sbr.rel (%p305) target = $region32
      $region31: #{snn_forward.1} parent=11 // pred_region
        _
      $region32: #{snn_forward.1} parent=11 // pred_fallthru
        _
      // Predicated region
      $region33: #{snn_forward.1} parent=11 // pred_check
        %p308 = pneg %p210
      $region34: #{snn_forward.1} parent=11 // pred_check_branch
        %310 = sbr.rel (%p308) target = $region36
      $region35: #{snn_forward.1} parent=11 // pred_region
        _
      $region36: #{snn_forward.1} parent=11 // pred_fallthru
        _
      // Predicated region
      $region37: #{snn_forward.1} parent=11 // pred_check
        %p311 = pneg %p231
      $region38: #{snn_forward.1} parent=11 // pred_check_branch
        %313 = sbr.rel (%p311) target = $region40
      $region39: #{snn_forward.1} parent=11 // pred_region
        _
      $region40: #{snn_forward.1} parent=11 // pred_fallthru
        _
      // Predicated region
      $region41: #{snn_forward.1} parent=11 // pred_check
        %p314 = pneg %p252
      $region42: #{snn_forward.1} parent=11 // pred_check_branch
        %316 = sbr.rel (%p314) target = $region44
      $region43: #{snn_forward.1} parent=11 // pred_region
        _
      $region44: #{snn_forward.1} parent=11 // pred_fallthru
        _
    $region12: #{snn_forward.1} parent=5 // pred_fallthru
      _
    %p317 = scmp.lt.s32.totalorder %s16, 6
    // Predicated region
    $region45: #{snn_forward.1} parent=5 // pred_check
      %p318 = pneg %p317
    $region46: #{snn_forward.1} parent=5 // pred_check_branch
      %320 = sbr.rel (%p318) target = $region48
    $region47: #{snn_forward.1} parent=5 // pred_region
      // Predicated region
      $region49: #{snn_forward.1} parent=47 // pred_check
        %p321 = pneg %p50
      $region50: #{snn_forward.1} parent=47 // pred_check_branch
        %323 = sbr.rel (%p321) target = $region52
      $region51: #{snn_forward.1} parent=47 // pred_region
        %p324 = scmp.lt.s32.totalorder %s24, 2
        %s325 = scalar_select %p324, %s24, 2
        %p326 = scmp.lt.s32.totalorder %s23, 1
        %s327 = scalar_select %p326, %s23, 1
        %s328 = smul.addr %s327, 3
        %s329 = smul.addr %s325, 6
        %s330 = sadd.s32 %s328, %s329
        %s331 = smul.addr %s330, 8
        %s332 = scalar_lea.vmem %s0, %s331
      $region52: #{snn_forward.1} parent=47 // pred_fallthru
        _
      // Predicated region
      $region53: #{snn_forward.1} parent=47 // pred_check
        %p333 = pneg %p78
      $region54: #{snn_forward.1} parent=47 // pred_check_branch
        %335 = sbr.rel (%p333) target = $region56
      $region55: #{snn_forward.1} parent=47 // pred_region
        %p336 = scmp.lt.s32.totalorder %s24, 2
        %s337 = scalar_select %p336, %s24, 2
        %p338 = scmp.lt.s32.totalorder %s23, 1
        %s339 = scalar_select %p338, %s23, 1
        %s340 = smul.addr %s339, 3
        %s341 = smul.addr %s337, 6
        %s342 = sadd.s32 %s340, %s341
        %s343 = smul.addr %s342, 8
        %s344 = scalar_lea.vmem %s1, %s343
      $region56: #{snn_forward.1} parent=47 // pred_fallthru
        _
    $region48: #{snn_forward.1} parent=5 // pred_fallthru
      _
    %p345 = scmp.le.s32.totalorder 1, %s16
    %p346 = scmp.lt.s32.totalorder %s16, 7
    %p347 = pnand %p345, %p346
    %p348 = pneg %p347
    // Predicated region
    $region57: #{snn_forward.1} parent=5 // pred_check
      _
    $region58: #{snn_forward.1} parent=5 // pred_check_branch
      %350 = sbr.rel (%p347) target = $region60
    $region59: #{snn_forward.1} parent=5 // pred_region
      %s351 = ssub.s32 %s16, 1
      %p352 = scmp.lt.s32.totalorder %s26, 2
      %s353 = scalar_select %p352, %s26, 2
      %p354 = scmp.lt.s32.totalorder %s25, 1
      %s355 = scalar_select %p354, %s25, 1
      %s356 = smul.addr %s355, 3
      %s357 = smul.addr %s353, 6
      %s358 = sadd.s32 %s356, %s357
      %s359 = smul.addr %s358, 8
      %s360 = scalar_lea.vmem %s0, %s359
      %p361 = pneg %p56
      %p362 = pneg %p53
      %p363 = scmp.lt.s32.totalorder %s26, 2
      %s364 = scalar_select %p363, %s26, 2
      %p365 = scmp.lt.s32.totalorder %s25, 1
      %s366 = scalar_select %p365, %s25, 1
      %s367 = smul.addr %s366, 3
      %s368 = smul.addr %s364, 6
      %s369 = sadd.s32 %s367, %s368
      %s370 = smul.addr %s369, 8
      %s371 = scalar_lea.vmem %s1, %s370
      %p372 = pneg %p84
      %p373 = pneg %p81
      %p374 = pneg %p105
      %p375 = pneg %p102
      %p376 = pneg %p126
      %p377 = pneg %p123
      %p378 = pneg %p147
      %p379 = pneg %p144
      %p380 = pneg %p168
      %p381 = pneg %p165
      %p382 = pneg %p189
      %p383 = pneg %p186
      %p384 = pneg %p210
      %p385 = pneg %p207
      %p386 = pneg %p231
      %p387 = pneg %p228
      %p388 = pneg %p252
      %p389 = pneg %p249
      %p390 = pneg %p278
      %p391 = pneg %p275
      %p392 = scmp.lt.s32.totalorder %s25, 1
      %s393 = scalar_select %p392, %s25, 1
      %s394 = smul.addr %s393, 4
      %s395 = scalar_lea.vmem %s10, %s394
      %p396 = scmp.lt.s32.totalorder %s26, 2
      %s397 = scalar_select %p396, %s26, 2
      %p398 = scmp.lt.s32.totalorder %s25, 1
      %s399 = scalar_select %p398, %s25, 1
      %s400 = smul.addr %s399, 3
      %s401 = smul.addr %s397, 6
      %s402 = sadd.s32 %s400, %s401
      %s403 = smul.addr %s402, 8
      %s404 = scalar_lea.vmem %s0, %s403
      %p405 = scmp.lt.s32.totalorder %s26, 2
      %s406 = scalar_select %p405, %s26, 2
      %p407 = scmp.lt.s32.totalorder %s25, 1
      %s408 = scalar_select %p407, %s25, 1
      %s409 = smul.addr %s408, 3
      %s410 = smul.addr %s406, 6
      %s411 = sadd.s32 %s409, %s410
      %s412 = smul.addr %s411, 8
      %s413 = scalar_lea.vmem %s1, %s412
      %p414 = scmp.lt.s32.totalorder %s25, 1
      %s415 = scalar_select %p414, %s25, 1
      %s416 = smul.addr %s415, 4
      %s417 = scalar_lea.vmem %s10, %s416
      %p418 = scmp.eq.s32.totalorder %s26, 0
      // Predicated region
      $region61: #{snn_forward.1} parent=59 // pred_check
        %p419 = pneg %p418
      $region62: #{snn_forward.1} parent=59 // pred_check_branch
        %421 = sbr.rel (%p419) target = $region64
      $region63: #{snn_forward.1} parent=59 // pred_region
        %422 = vst [vmem:[#allocation2] sm:$0xff] 0.0
        %vm423 = vcmask 424960
        %424 = vst.msk [vmem:[#allocation2 + $0x8] sm:$0xff] %vm423, 0.0
        %425 = vst [vmem:[#allocation2 + $0x10] sm:$0x7f] 0.0
        %vm426 = vcmask 423936
        %427 = vst.msk [vmem:[#allocation2 + $0x18] sm:$0x7f] %vm426, 0.0
        %428 = vst [vmem:[#allocation3] sm:$0x1f] 0.0
        %vm429 = vcmask 258048
        %430 = vst.msk [vmem:[#allocation3 + $0x8] sm:$0x1f] %vm429, 0.0
        %vm431 = vcmask 73728
        %432 = vst.msk [vmem:[#allocation4] sm:$0x1] %vm431, 0.0
      $region64: #{snn_forward.1} parent=59 // pred_fallthru
        _
      %v433 = vld [vmem:[%s404] sm:$0xff]
      %v434 = vld [vmem:[%s404 + $0x8] sm:$0xff]
      %v435 = vld [vmem:[%s404 + $0x10] sm:$0x1]
      %v436 = vld [vmem:[%s413] sm:$0xff]
      %v437 = vld [vmem:[%s413 + $0x8] sm:$0xff]
      %v438 = vld [vmem:[%s413 + $0x10] sm:$0x1]
      %v439 = vld [vmem:[%s2] sm:$0xff]
      %v440 = vld [vmem:[%s2 + $0x8] sm:$0xff]
      %v441 = vld [vmem:[%s2 + $0x10] sm:$0xff]
      %v442 = vld [vmem:[%s2 + $0x18] sm:$0xff]
      %v443 = vld [vmem:[%s2 + $0x20] sm:$0xff]
      %v444 = vld [vmem:[%s2 + $0x28] sm:$0xff]
      %v445 = vld [vmem:[%s2 + $0x30] sm:$0xff]
      %v446 = vld [vmem:[%s2 + $0x38] sm:$0xff]
      %v447 = vld [vmem:[%s2 + $0x40] sm:$0xff]
      %v448 = vld [vmem:[%s2 + $0x48] sm:$0xff]
      %v449 = vld [vmem:[%s2 + $0x50] sm:$0xff]
      %v450 = vld [vmem:[%s2 + $0x58] sm:$0xff]
      %v451 = vld [vmem:[%s2 + $0x60] sm:$0xff]
      %v452 = vld [vmem:[%s2 + $0x68] sm:$0xff]
      %v453 = vld [vmem:[%s2 + $0x70] sm:$0xff]
      %v454 = vld [vmem:[%s2 + $0x78] sm:$0xff]
      %v455 = vld [vmem:[%s2 + $0x80] sm:$0xf]
      %v456 = vld [vmem:[%s2 + $0x88] sm:$0xf]
      %v457 = vld [vmem:[%s3] sm:$0xff]
      %v458 = vld [vmem:[%s3 + $0x8] sm:$0xff]
      %v459 = vld [vmem:[%s3 + $0x10] sm:$0xff]
      %v460 = vld [vmem:[%s3 + $0x18] sm:$0xff]
      %v461 = vld [vmem:[%s3 + $0x20] sm:$0xff]
      %v462 = vld [vmem:[%s3 + $0x28] sm:$0xff]
      %v463 = vld [vmem:[%s3 + $0x30] sm:$0xff]
      %v464 = vld [vmem:[%s3 + $0x38] sm:$0xff]
      %v465 = vld [vmem:[%s3 + $0x40] sm:$0xff]
      %v466 = vld [vmem:[%s3 + $0x48] sm:$0xff]
      %v467 = vld [vmem:[%s3 + $0x50] sm:$0xff]
      %v468 = vld [vmem:[%s3 + $0x58] sm:$0xff]
      %v469 = vld [vmem:[%s3 + $0x60] sm:$0xff]
      %v470 = vld [vmem:[%s3 + $0x68] sm:$0xff]
      %v471 = vld [vmem:[%s3 + $0x70] sm:$0xff]
      %v472 = vld [vmem:[%s3 + $0x78] sm:$0xff]
      %v473 = vld [vmem:[%s3 + $0x80] sm:$0xf]
      %v474 = vld [vmem:[%s3 + $0x88] sm:$0xf]
      %s475 = scalar_lea.vmem %s2, 144
      %v476 = vld [vmem:[%s475] sm:$0xff]
      %v477 = vld [vmem:[%s475 + $0x8] sm:$0xff]
      %v478 = vld [vmem:[%s475 + $0x10] sm:$0xff]
      %v479 = vld [vmem:[%s475 + $0x18] sm:$0xff]
      %v480 = vld [vmem:[%s475 + $0x20] sm:$0xff]
      %v481 = vld [vmem:[%s475 + $0x28] sm:$0xff]
      %v482 = vld [vmem:[%s475 + $0x30] sm:$0xff]
      %v483 = vld [vmem:[%s475 + $0x38] sm:$0xff]
      %v484 = vld [vmem:[%s475 + $0x40] sm:$0xff]
      %v485 = vld [vmem:[%s475 + $0x48] sm:$0xff]
      %v486 = vld [vmem:[%s475 + $0x50] sm:$0xff]
      %v487 = vld [vmem:[%s475 + $0x58] sm:$0xff]
      %v488 = vld [vmem:[%s475 + $0x60] sm:$0xff]
      %v489 = vld [vmem:[%s475 + $0x68] sm:$0xff]
      %v490 = vld [vmem:[%s475 + $0x70] sm:$0xff]
      %v491 = vld [vmem:[%s475 + $0x78] sm:$0xff]
      %v492 = vld [vmem:[%s475 + $0x80] sm:$0xf]
      %v493 = vld [vmem:[%s475 + $0x88] sm:$0xf]
      %s494 = scalar_lea.vmem %s3, 144
      %v495 = vld [vmem:[%s494] sm:$0xff]
      %v496 = vld [vmem:[%s494 + $0x8] sm:$0xff]
      %v497 = vld [vmem:[%s494 + $0x10] sm:$0xff]
      %v498 = vld [vmem:[%s494 + $0x18] sm:$0xff]
      %v499 = vld [vmem:[%s494 + $0x20] sm:$0xff]
      %v500 = vld [vmem:[%s494 + $0x28] sm:$0xff]
      %v501 = vld [vmem:[%s494 + $0x30] sm:$0xff]
      %v502 = vld [vmem:[%s494 + $0x38] sm:$0xff]
      %v503 = vld [vmem:[%s494 + $0x40] sm:$0xff]
      %v504 = vld [vmem:[%s494 + $0x48] sm:$0xff]
      %v505 = vld [vmem:[%s494 + $0x50] sm:$0xff]
      %v506 = vld [vmem:[%s494 + $0x58] sm:$0xff]
      %v507 = vld [vmem:[%s494 + $0x60] sm:$0xff]
      %v508 = vld [vmem:[%s494 + $0x68] sm:$0xff]
      %v509 = vld [vmem:[%s494 + $0x70] sm:$0xff]
      %v510 = vld [vmem:[%s494 + $0x78] sm:$0xff]
      %v511 = vld [vmem:[%s494 + $0x80] sm:$0xf]
      %v512 = vld [vmem:[%s494 + $0x88] sm:$0xf]
      %vm513 = vcmask 556032
      %v515 = vsel %vm513, %v436, 0
      %v518 = vsel %vm513, %v437, 0
      %vm520 = vcmask 1043456
      %v522 = vsel %vm520, %v492, 0
      %v525 = vsel %vm520, %v493, 0
      %527 = vmatpush.msra.mxu0 0.0
      %528 = vmatpush.msra.mxu0 0.0
      %529 = vmatpush.msra.mxu0 0.0
      %530 = vmatpush.msra.mxu0 0.0
      %531 = vmatpush.msra.mxu0 0.0
      %532 = vmatpush.msra.mxu0 0.0
      %533 = vmatpush.msra.mxu0 0.0
      %534 = vmatpush.msra.mxu0 %v522
      %535 = vmatpush.msra.mxu0 %v490
      %536 = vmatpush.msra.mxu0 %v488
      %537 = vmatpush.msra.mxu0 %v486
      %538 = vmatpush.msra.mxu0 %v484
      %539 = vmatpush.msra.mxu0 %v482
      %540 = vmatpush.msra.mxu0 %v480
      %541 = vmatpush.msra.mxu0 %v478
      %542 = vmatpush.msra.mxu0 %v476
      %543 = vmatmul.f32.gmra.mxu0 %v515
      %v544 = vpop.f32.mrf.mxu0
      %v545 = vadd.f32 0.0, %v544
      %546 = vmatmul.f32.gmra.mxu0 %v518
      %v547 = vpop.f32.mrf.mxu0
      %v548 = vadd.f32 0.0, %v547
      %549 = vdwg.mxu0
      %550 = vmatpush.msra.mxu0 0.0
      %551 = vmatpush.msra.mxu0 0.0
      %552 = vmatpush.msra.mxu0 0.0
      %553 = vmatpush.msra.mxu0 0.0
      %554 = vmatpush.msra.mxu0 0.0
      %555 = vmatpush.msra.mxu0 0.0
      %556 = vmatpush.msra.mxu0 0.0
      %557 = vmatpush.msra.mxu0 %v525
      %558 = vmatpush.msra.mxu0 %v491
      %559 = vmatpush.msra.mxu0 %v489
      %560 = vmatpush.msra.mxu0 %v487
      %561 = vmatpush.msra.mxu0 %v485
      %562 = vmatpush.msra.mxu0 %v483
      %563 = vmatpush.msra.mxu0 %v481
      %564 = vmatpush.msra.mxu0 %v479
      %565 = vmatpush.msra.mxu0 %v477
      %566 = vmatmul.f32.gmra.mxu0 %v515
      %v567 = vpop.f32.mrf.mxu0
      %v568 = vadd.f32 0.0, %v567
      %569 = vmatmul.f32.gmra.mxu0 %v518
      %v570 = vpop.f32.mrf.mxu0
      %v571 = vadd.f32 0.0, %v570
      %572 = vdwg.mxu0
      %v574 = vsel %vm513, %v433, 0
      %v577 = vsel %vm513, %v434, 0
      %v580 = vsel %vm520, %v455, 0
      %v583 = vsel %vm520, %v456, 0
      %585 = vmatpush.msra.mxu0 0.0
      %586 = vmatpush.msra.mxu0 0.0
      %587 = vmatpush.msra.mxu0 0.0
      %588 = vmatpush.msra.mxu0 0.0
      %589 = vmatpush.msra.mxu0 0.0
      %590 = vmatpush.msra.mxu0 0.0
      %591 = vmatpush.msra.mxu0 0.0
      %592 = vmatpush.msra.mxu0 %v580
      %593 = vmatpush.msra.mxu0 %v453
      %594 = vmatpush.msra.mxu0 %v451
      %595 = vmatpush.msra.mxu0 %v449
      %596 = vmatpush.msra.mxu0 %v447
      %597 = vmatpush.msra.mxu0 %v445
      %598 = vmatpush.msra.mxu0 %v443
      %599 = vmatpush.msra.mxu0 %v441
      %600 = vmatpush.msra.mxu0 %v439
      %601 = vmatmul.f32.gmra.mxu0 %v574
      %v602 = vpop.f32.mrf.mxu0
      %v603 = vadd.f32 %v545, %v602
      %604 = vmatmul.f32.gmra.mxu0 %v577
      %v605 = vpop.f32.mrf.mxu0
      %v606 = vadd.f32 %v548, %v605
      %607 = vdwg.mxu0
      %608 = vmatpush.msra.mxu0 0.0
      %609 = vmatpush.msra.mxu0 0.0
      %610 = vmatpush.msra.mxu0 0.0
      %611 = vmatpush.msra.mxu0 0.0
      %612 = vmatpush.msra.mxu0 0.0
      %613 = vmatpush.msra.mxu0 0.0
      %614 = vmatpush.msra.mxu0 0.0
      %615 = vmatpush.msra.mxu0 %v583
      %616 = vmatpush.msra.mxu0 %v454
      %617 = vmatpush.msra.mxu0 %v452
      %618 = vmatpush.msra.mxu0 %v450
      %619 = vmatpush.msra.mxu0 %v448
      %620 = vmatpush.msra.mxu0 %v446
      %621 = vmatpush.msra.mxu0 %v444
      %622 = vmatpush.msra.mxu0 %v442
      %623 = vmatpush.msra.mxu0 %v440
      %624 = vmatmul.f32.gmra.mxu0 %v574
      %v625 = vpop.f32.mrf.mxu0
      %v626 = vadd.f32 %v568, %v625
      %627 = vmatmul.f32.gmra.mxu0 %v577
      %v628 = vpop.f32.mrf.mxu0
      %v629 = vadd.f32 %v571, %v628
      %630 = vdwg.mxu0
      %v632 = vsel %vm520, %v511, 0
      %v635 = vsel %vm520, %v512, 0
      %637 = vmatpush.msra.mxu0 0.0
      %638 = vmatpush.msra.mxu0 0.0
      %639 = vmatpush.msra.mxu0 0.0
      %640 = vmatpush.msra.mxu0 0.0
      %641 = vmatpush.msra.mxu0 0.0
      %642 = vmatpush.msra.mxu0 0.0
      %643 = vmatpush.msra.mxu0 0.0
      %644 = vmatpush.msra.mxu0 %v632
      %645 = vmatpush.msra.mxu0 %v509
      %646 = vmatpush.msra.mxu0 %v507
      %647 = vmatpush.msra.mxu0 %v505
      %648 = vmatpush.msra.mxu0 %v503
      %649 = vmatpush.msra.mxu0 %v501
      %650 = vmatpush.msra.mxu0 %v499
      %651 = vmatpush.msra.mxu0 %v497
      %652 = vmatpush.msra.mxu0 %v495
      %653 = vmatmul.f32.gmra.mxu0 %v515
      %v654 = vpop.f32.mrf.mxu0
      %v655 = vadd.f32 0.0, %v654
      %656 = vmatmul.f32.gmra.mxu0 %v518
      %v657 = vpop.f32.mrf.mxu0
      %v658 = vadd.f32 0.0, %v657
      %659 = vdwg.mxu0
      %660 = vmatpush.msra.mxu0 0.0
      %661 = vmatpush.msra.mxu0 0.0
      %662 = vmatpush.msra.mxu0 0.0
      %663 = vmatpush.msra.mxu0 0.0
      %664 = vmatpush.msra.mxu0 0.0
      %665 = vmatpush.msra.mxu0 0.0
      %666 = vmatpush.msra.mxu0 0.0
      %667 = vmatpush.msra.mxu0 %v635
      %668 = vmatpush.msra.mxu0 %v510
      %669 = vmatpush.msra.mxu0 %v508
      %670 = vmatpush.msra.mxu0 %v506
      %671 = vmatpush.msra.mxu0 %v504
      %672 = vmatpush.msra.mxu0 %v502
      %673 = vmatpush.msra.mxu0 %v500
      %674 = vmatpush.msra.mxu0 %v498
      %675 = vmatpush.msra.mxu0 %v496
      %676 = vmatmul.f32.gmra.mxu0 %v515
      %v677 = vpop.f32.mrf.mxu0
      %v678 = vadd.f32 0.0, %v677
      %679 = vmatmul.f32.gmra.mxu0 %v518
      %v680 = vpop.f32.mrf.mxu0
      %v681 = vadd.f32 0.0, %v680
      %682 = vdwg.mxu0
      %v684 = vsel %vm520, %v473, 0
      %v687 = vsel %vm520, %v474, 0
      %689 = vmatpush.msra.mxu0 0.0
      %690 = vmatpush.msra.mxu0 0.0
      %691 = vmatpush.msra.mxu0 0.0
      %692 = vmatpush.msra.mxu0 0.0
      %693 = vmatpush.msra.mxu0 0.0
      %694 = vmatpush.msra.mxu0 0.0
      %695 = vmatpush.msra.mxu0 0.0
      %696 = vmatpush.msra.mxu0 %v684
      %697 = vmatpush.msra.mxu0 %v471
      %698 = vmatpush.msra.mxu0 %v469
      %699 = vmatpush.msra.mxu0 %v467
      %700 = vmatpush.msra.mxu0 %v465
      %701 = vmatpush.msra.mxu0 %v463
      %702 = vmatpush.msra.mxu0 %v461
      %703 = vmatpush.msra.mxu0 %v459
      %704 = vmatpush.msra.mxu0 %v457
      %705 = vmatmul.f32.gmra.mxu0 %v574
      %v706 = vpop.f32.mrf.mxu0
      %v707 = vadd.f32 %v655, %v706
      %708 = vmatmul.f32.gmra.mxu0 %v577
      %v709 = vpop.f32.mrf.mxu0
      %v710 = vadd.f32 %v658, %v709
      %711 = vdwg.mxu0
      %712 = vmatpush.msra.mxu0 0.0
      %713 = vmatpush.msra.mxu0 0.0
      %714 = vmatpush.msra.mxu0 0.0
      %715 = vmatpush.msra.mxu0 0.0
      %716 = vmatpush.msra.mxu0 0.0
      %717 = vmatpush.msra.mxu0 0.0
      %718 = vmatpush.msra.mxu0 0.0
      %719 = vmatpush.msra.mxu0 %v687
      %720 = vmatpush.msra.mxu0 %v472
      %721 = vmatpush.msra.mxu0 %v470
      %722 = vmatpush.msra.mxu0 %v468
      %723 = vmatpush.msra.mxu0 %v466
      %724 = vmatpush.msra.mxu0 %v464
      %725 = vmatpush.msra.mxu0 %v462
      %726 = vmatpush.msra.mxu0 %v460
      %727 = vmatpush.msra.mxu0 %v458
      %728 = vmatmul.f32.gmra.mxu0 %v574
      %v729 = vpop.f32.mrf.mxu0
      %v730 = vadd.f32 %v678, %v729
      %731 = vmatmul.f32.gmra.mxu0 %v577
      %v732 = vpop.f32.mrf.mxu0
      %v733 = vadd.f32 %v681, %v732
      %734 = vdwg.mxu0
      %vm735 = vcmask 1046528
      %v736 = vrot.slane %v433, 1
      %v737 = vrot.slane %v434, 1
      %v738 = vsel %vm735, %v736, %v737
      %v739 = vsel %vm513, %v738, 0
      %v741 = vsel %vm513, %v737, 0
      %743 = vmatpush.msra.mxu0 0.0
      %744 = vmatpush.msra.mxu0 0.0
      %745 = vmatpush.msra.mxu0 0.0
      %746 = vmatpush.msra.mxu0 0.0
      %747 = vmatpush.msra.mxu0 0.0
      %748 = vmatpush.msra.mxu0 0.0
      %749 = vmatpush.msra.mxu0 0.0
      %750 = vmatpush.msra.mxu0 %v522
      %751 = vmatpush.msra.mxu0 %v490
      %752 = vmatpush.msra.mxu0 %v488
      %753 = vmatpush.msra.mxu0 %v486
      %754 = vmatpush.msra.mxu0 %v484
      %755 = vmatpush.msra.mxu0 %v482
      %756 = vmatpush.msra.mxu0 %v480
      %757 = vmatpush.msra.mxu0 %v478
      %758 = vmatpush.msra.mxu0 %v476
      %759 = vmatmul.f32.gmra.mxu0 %v739
      %v760 = vpop.f32.mrf.mxu0
      %v761 = vadd.f32 0.0, %v760
      %762 = vmatmul.f32.gmra.mxu0 %v741
      %v763 = vpop.f32.mrf.mxu0
      %v764 = vadd.f32 0.0, %v763
      %765 = vdwg.mxu0
      %766 = vmatpush.msra.mxu0 0.0
      %767 = vmatpush.msra.mxu0 0.0
      %768 = vmatpush.msra.mxu0 0.0
      %769 = vmatpush.msra.mxu0 0.0
      %770 = vmatpush.msra.mxu0 0.0
      %771 = vmatpush.msra.mxu0 0.0
      %772 = vmatpush.msra.mxu0 0.0
      %773 = vmatpush.msra.mxu0 %v525
      %774 = vmatpush.msra.mxu0 %v491
      %775 = vmatpush.msra.mxu0 %v489
      %776 = vmatpush.msra.mxu0 %v487
      %777 = vmatpush.msra.mxu0 %v485
      %778 = vmatpush.msra.mxu0 %v483
      %779 = vmatpush.msra.mxu0 %v481
      %780 = vmatpush.msra.mxu0 %v479
      %781 = vmatpush.msra.mxu0 %v477
      %782 = vmatmul.f32.gmra.mxu0 %v739
      %v783 = vpop.f32.mrf.mxu0
      %v784 = vadd.f32 0.0, %v783
      %785 = vmatmul.f32.gmra.mxu0 %v741
      %v786 = vpop.f32.mrf.mxu0
      %v787 = vadd.f32 0.0, %v786
      %788 = vdwg.mxu0
      %789 = vmatpush.msra.mxu0 0.0
      %790 = vmatpush.msra.mxu0 0.0
      %791 = vmatpush.msra.mxu0 0.0
      %792 = vmatpush.msra.mxu0 0.0
      %793 = vmatpush.msra.mxu0 0.0
      %794 = vmatpush.msra.mxu0 0.0
      %795 = vmatpush.msra.mxu0 0.0
      %796 = vmatpush.msra.mxu0 %v580
      %797 = vmatpush.msra.mxu0 %v453
      %798 = vmatpush.msra.mxu0 %v451
      %799 = vmatpush.msra.mxu0 %v449
      %800 = vmatpush.msra.mxu0 %v447
      %801 = vmatpush.msra.mxu0 %v445
      %802 = vmatpush.msra.mxu0 %v443
      %803 = vmatpush.msra.mxu0 %v441
      %804 = vmatpush.msra.mxu0 %v439
      %805 = vmatmul.f32.gmra.mxu0 %v515
      %v806 = vpop.f32.mrf.mxu0
      %v807 = vadd.f32 %v761, %v806
      %808 = vmatmul.f32.gmra.mxu0 %v518
      %v809 = vpop.f32.mrf.mxu0
      %v810 = vadd.f32 %v764, %v809
      %811 = vdwg.mxu0
      %812 = vmatpush.msra.mxu0 0.0
      %813 = vmatpush.msra.mxu0 0.0
      %814 = vmatpush.msra.mxu0 0.0
      %815 = vmatpush.msra.mxu0 0.0
      %816 = vmatpush.msra.mxu0 0.0
      %817 = vmatpush.msra.mxu0 0.0
      %818 = vmatpush.msra.mxu0 0.0
      %819 = vmatpush.msra.mxu0 %v583
      %820 = vmatpush.msra.mxu0 %v454
      %821 = vmatpush.msra.mxu0 %v452
      %822 = vmatpush.msra.mxu0 %v450
      %823 = vmatpush.msra.mxu0 %v448
      %824 = vmatpush.msra.mxu0 %v446
      %825 = vmatpush.msra.mxu0 %v444
      %826 = vmatpush.msra.mxu0 %v442
      %827 = vmatpush.msra.mxu0 %v440
      %828 = vmatmul.f32.gmra.mxu0 %v515
      %v829 = vpop.f32.mrf.mxu0
      %v830 = vadd.f32 %v784, %v829
      %831 = vmatmul.f32.gmra.mxu0 %v518
      %v832 = vpop.f32.mrf.mxu0
      %v833 = vadd.f32 %v787, %v832
      %834 = vdwg.mxu0
      %835 = vmatpush.msra.mxu0 0.0
      %836 = vmatpush.msra.mxu0 0.0
      %837 = vmatpush.msra.mxu0 0.0
      %838 = vmatpush.msra.mxu0 0.0
      %839 = vmatpush.msra.mxu0 0.0
      %840 = vmatpush.msra.mxu0 0.0
      %841 = vmatpush.msra.mxu0 0.0
      %842 = vmatpush.msra.mxu0 %v632
      %843 = vmatpush.msra.mxu0 %v509
      %844 = vmatpush.msra.mxu0 %v507
      %845 = vmatpush.msra.mxu0 %v505
      %846 = vmatpush.msra.mxu0 %v503
      %847 = vmatpush.msra.mxu0 %v501
      %848 = vmatpush.msra.mxu0 %v499
      %849 = vmatpush.msra.mxu0 %v497
      %850 = vmatpush.msra.mxu0 %v495
      %851 = vmatmul.f32.gmra.mxu0 %v739
      %v852 = vpop.f32.mrf.mxu0
      %v853 = vadd.f32 0.0, %v852
      %854 = vmatmul.f32.gmra.mxu0 %v741
      %v855 = vpop.f32.mrf.mxu0
      %v856 = vadd.f32 0.0, %v855
      %857 = vdwg.mxu0
      %858 = vmatpush.msra.mxu0 0.0
      %859 = vmatpush.msra.mxu0 0.0
      %860 = vmatpush.msra.mxu0 0.0
      %861 = vmatpush.msra.mxu0 0.0
      %862 = vmatpush.msra.mxu0 0.0
      %863 = vmatpush.msra.mxu0 0.0
      %864 = vmatpush.msra.mxu0 0.0
      %865 = vmatpush.msra.mxu0 %v635
      %866 = vmatpush.msra.mxu0 %v510
      %867 = vmatpush.msra.mxu0 %v508
      %868 = vmatpush.msra.mxu0 %v506
      %869 = vmatpush.msra.mxu0 %v504
      %870 = vmatpush.msra.mxu0 %v502
      %871 = vmatpush.msra.mxu0 %v500
      %872 = vmatpush.msra.mxu0 %v498
      %873 = vmatpush.msra.mxu0 %v496
      %874 = vmatmul.f32.gmra.mxu0 %v739
      %v875 = vpop.f32.mrf.mxu0
      %v876 = vadd.f32 0.0, %v875
      %877 = vmatmul.f32.gmra.mxu0 %v741
      %v878 = vpop.f32.mrf.mxu0
      %v879 = vadd.f32 0.0, %v878
      %880 = vdwg.mxu0
      %881 = vmatpush.msra.mxu0 0.0
      %882 = vmatpush.msra.mxu0 0.0
      %883 = vmatpush.msra.mxu0 0.0
      %884 = vmatpush.msra.mxu0 0.0
      %885 = vmatpush.msra.mxu0 0.0
      %886 = vmatpush.msra.mxu0 0.0
      %887 = vmatpush.msra.mxu0 0.0
      %888 = vmatpush.msra.mxu0 %v684
      %889 = vmatpush.msra.mxu0 %v471
      %890 = vmatpush.msra.mxu0 %v469
      %891 = vmatpush.msra.mxu0 %v467
      %892 = vmatpush.msra.mxu0 %v465
      %893 = vmatpush.msra.mxu0 %v463
      %894 = vmatpush.msra.mxu0 %v461
      %895 = vmatpush.msra.mxu0 %v459
      %896 = vmatpush.msra.mxu0 %v457
      %897 = vmatmul.f32.gmra.mxu0 %v515
      %v898 = vpop.f32.mrf.mxu0
      %v899 = vadd.f32 %v853, %v898
      %900 = vmatmul.f32.gmra.mxu0 %v518
      %v901 = vpop.f32.mrf.mxu0
      %v902 = vadd.f32 %v856, %v901
      %903 = vdwg.mxu0
      %904 = vmatpush.msra.mxu0 0.0
      %905 = vmatpush.msra.mxu0 0.0
      %906 = vmatpush.msra.mxu0 0.0
      %907 = vmatpush.msra.mxu0 0.0
      %908 = vmatpush.msra.mxu0 0.0
      %909 = vmatpush.msra.mxu0 0.0
      %910 = vmatpush.msra.mxu0 0.0
      %911 = vmatpush.msra.mxu0 %v687
      %912 = vmatpush.msra.mxu0 %v472
      %913 = vmatpush.msra.mxu0 %v470
      %914 = vmatpush.msra.mxu0 %v468
      %915 = vmatpush.msra.mxu0 %v466
      %916 = vmatpush.msra.mxu0 %v464
      %917 = vmatpush.msra.mxu0 %v462
      %918 = vmatpush.msra.mxu0 %v460
      %919 = vmatpush.msra.mxu0 %v458
      %920 = vmatmul.f32.gmra.mxu0 %v515
      %v921 = vpop.f32.mrf.mxu0
      %v922 = vadd.f32 %v876, %v921
      %923 = vmatmul.f32.gmra.mxu0 %v518
      %v924 = vpop.f32.mrf.mxu0
      %v925 = vadd.f32 %v879, %v924
      %926 = vdwg.mxu0
      %s927 = scalar_lea.vmem %s2, 288
      %v928 = vld [vmem:[%s927] sm:$0xff]
      %v929 = vld [vmem:[%s927 + $0x8] sm:$0xff]
      %v930 = vld [vmem:[%s927 + $0x10] sm:$0xff]
      %v931 = vld [vmem:[%s927 + $0x18] sm:$0xff]
      %v932 = vld [vmem:[%s927 + $0x20] sm:$0xff]
      %v933 = vld [vmem:[%s927 + $0x28] sm:$0xff]
      %v934 = vld [vmem:[%s927 + $0x30] sm:$0xff]
      %v935 = vld [vmem:[%s927 + $0x38] sm:$0xff]
      %v936 = vld [vmem:[%s927 + $0x40] sm:$0xff]
      %v937 = vld [vmem:[%s927 + $0x48] sm:$0xff]
      %v938 = vld [vmem:[%s927 + $0x50] sm:$0xff]
      %v939 = vld [vmem:[%s927 + $0x58] sm:$0xff]
      %v940 = vld [vmem:[%s927 + $0x60] sm:$0xff]
      %v941 = vld [vmem:[%s927 + $0x68] sm:$0xff]
      %v942 = vld [vmem:[%s927 + $0x70] sm:$0xff]
      %v943 = vld [vmem:[%s927 + $0x78] sm:$0xff]
      %v944 = vld [vmem:[%s927 + $0x80] sm:$0xf]
      %v945 = vld [vmem:[%s927 + $0x88] sm:$0xf]
      %s946 = scalar_lea.vmem %s3, 288
      %v947 = vld [vmem:[%s946] sm:$0xff]
      %v948 = vld [vmem:[%s946 + $0x8] sm:$0xff]
      %v949 = vld [vmem:[%s946 + $0x10] sm:$0xff]
      %v950 = vld [vmem:[%s946 + $0x18] sm:$0xff]
      %v951 = vld [vmem:[%s946 + $0x20] sm:$0xff]
      %v952 = vld [vmem:[%s946 + $0x28] sm:$0xff]
      %v953 = vld [vmem:[%s946 + $0x30] sm:$0xff]
      %v954 = vld [vmem:[%s946 + $0x38] sm:$0xff]
      %v955 = vld [vmem:[%s946 + $0x40] sm:$0xff]
      %v956 = vld [vmem:[%s946 + $0x48] sm:$0xff]
      %v957 = vld [vmem:[%s946 + $0x50] sm:$0xff]
      %v958 = vld [vmem:[%s946 + $0x58] sm:$0xff]
      %v959 = vld [vmem:[%s946 + $0x60] sm:$0xff]
      %v960 = vld [vmem:[%s946 + $0x68] sm:$0xff]
      %v961 = vld [vmem:[%s946 + $0x70] sm:$0xff]
      %v962 = vld [vmem:[%s946 + $0x78] sm:$0xff]
      %v963 = vld [vmem:[%s946 + $0x80] sm:$0xf]
      %v964 = vld [vmem:[%s946 + $0x88] sm:$0xf]
      %v966 = vsel %vm520, %v944, 0
      %v969 = vsel %vm520, %v945, 0
      %971 = vmatpush.msra.mxu0 0.0
      %972 = vmatpush.msra.mxu0 0.0
      %973 = vmatpush.msra.mxu0 0.0
      %974 = vmatpush.msra.mxu0 0.0
      %975 = vmatpush.msra.mxu0 0.0
      %976 = vmatpush.msra.mxu0 0.0
      %977 = vmatpush.msra.mxu0 0.0
      %978 = vmatpush.msra.mxu0 %v966
      %979 = vmatpush.msra.mxu0 %v942
      %980 = vmatpush.msra.mxu0 %v940
      %981 = vmatpush.msra.mxu0 %v938
      %982 = vmatpush.msra.mxu0 %v936
      %983 = vmatpush.msra.mxu0 %v934
      %984 = vmatpush.msra.mxu0 %v932
      %985 = vmatpush.msra.mxu0 %v930
      %986 = vmatpush.msra.mxu0 %v928
      %987 = vmatmul.f32.gmra.mxu0 %v739
      %v988 = vpop.f32.mrf.mxu0
      %v989 = vadd.f32 0.0, %v988
      %990 = vmatmul.f32.gmra.mxu0 %v741
      %v991 = vpop.f32.mrf.mxu0
      %v992 = vadd.f32 0.0, %v991
      %993 = vdwg.mxu0
      %994 = vmatpush.msra.mxu0 0.0
      %995 = vmatpush.msra.mxu0 0.0
      %996 = vmatpush.msra.mxu0 0.0
      %997 = vmatpush.msra.mxu0 0.0
      %998 = vmatpush.msra.mxu0 0.0
      %999 = vmatpush.msra.mxu0 0.0
      %1000 = vmatpush.msra.mxu0 0.0
      %1001 = vmatpush.msra.mxu0 %v969
      %1002 = vmatpush.msra.mxu0 %v943
      %1003 = vmatpush.msra.mxu0 %v941
      %1004 = vmatpush.msra.mxu0 %v939
      %1005 = vmatpush.msra.mxu0 %v937
      %1006 = vmatpush.msra.mxu0 %v935
      %1007 = vmatpush.msra.mxu0 %v933
      %1008 = vmatpush.msra.mxu0 %v931
      %1009 = vmatpush.msra.mxu0 %v929
      %1010 = vmatmul.f32.gmra.mxu0 %v739
      %v1011 = vpop.f32.mrf.mxu0
      %v1012 = vadd.f32 0.0, %v1011
      %1013 = vmatmul.f32.gmra.mxu0 %v741
      %v1014 = vpop.f32.mrf.mxu0
      %v1015 = vadd.f32 0.0, %v1014
      %1016 = vdwg.mxu0
      %v1017 = vadd.f32 %v603, %v989
      %v1018 = vadd.f32 %v626, %v1012
      %v1019 = vadd.f32 %v606, %v992
      %v1020 = vadd.f32 %v629, %v1015
      %v1022 = vsel %vm520, %v963, 0
      %v1025 = vsel %vm520, %v964, 0
      %1027 = vmatpush.msra.mxu0 0.0
      %1028 = vmatpush.msra.mxu0 0.0
      %1029 = vmatpush.msra.mxu0 0.0
      %1030 = vmatpush.msra.mxu0 0.0
      %1031 = vmatpush.msra.mxu0 0.0
      %1032 = vmatpush.msra.mxu0 0.0
      %1033 = vmatpush.msra.mxu0 0.0
      %1034 = vmatpush.msra.mxu0 %v1022
      %1035 = vmatpush.msra.mxu0 %v961
      %1036 = vmatpush.msra.mxu0 %v959
      %1037 = vmatpush.msra.mxu0 %v957
      %1038 = vmatpush.msra.mxu0 %v955
      %1039 = vmatpush.msra.mxu0 %v953
      %1040 = vmatpush.msra.mxu0 %v951
      %1041 = vmatpush.msra.mxu0 %v949
      %1042 = vmatpush.msra.mxu0 %v947
      %1043 = vmatmul.f32.gmra.mxu0 %v739
      %v1044 = vpop.f32.mrf.mxu0
      %v1045 = vadd.f32 0.0, %v1044
      %1046 = vmatmul.f32.gmra.mxu0 %v741
      %v1047 = vpop.f32.mrf.mxu0
      %v1048 = vadd.f32 0.0, %v1047
      %1049 = vdwg.mxu0
      %1050 = vmatpush.msra.mxu0 0.0
      %1051 = vmatpush.msra.mxu0 0.0
      %1052 = vmatpush.msra.mxu0 0.0
      %1053 = vmatpush.msra.mxu0 0.0
      %1054 = vmatpush.msra.mxu0 0.0
      %1055 = vmatpush.msra.mxu0 0.0
      %1056 = vmatpush.msra.mxu0 0.0
      %1057 = vmatpush.msra.mxu0 %v1025
      %1058 = vmatpush.msra.mxu0 %v962
      %1059 = vmatpush.msra.mxu0 %v960
      %1060 = vmatpush.msra.mxu0 %v958
      %1061 = vmatpush.msra.mxu0 %v956
      %1062 = vmatpush.msra.mxu0 %v954
      %1063 = vmatpush.msra.mxu0 %v952
      %1064 = vmatpush.msra.mxu0 %v950
      %1065 = vmatpush.msra.mxu0 %v948
      %1066 = vmatmul.f32.gmra.mxu0 %v739
      %v1067 = vpop.f32.mrf.mxu0
      %v1068 = vadd.f32 0.0, %v1067
      %1069 = vmatmul.f32.gmra.mxu0 %v741
      %v1070 = vpop.f32.mrf.mxu0
      %v1071 = vadd.f32 0.0, %v1070
      %1072 = vdwg.mxu0
      %v1073 = vadd.f32 %v707, %v1045
      %v1074 = vadd.f32 %v730, %v1068
      %v1075 = vadd.f32 %v710, %v1048
      %v1076 = vadd.f32 %v733, %v1071
      %v1077 = vrot.slane %v436, 1
      %v1078 = vrot.slane %v437, 1
      %v1079 = vsel %vm735, %v1077, %v1078
      %v1080 = vsel %vm513, %v1079, 0
      %v1082 = vsel %vm513, %v1078, 0
      %1084 = vmatpush.msra.mxu0 0.0
      %1085 = vmatpush.msra.mxu0 0.0
      %1086 = vmatpush.msra.mxu0 0.0
      %1087 = vmatpush.msra.mxu0 0.0
      %1088 = vmatpush.msra.mxu0 0.0
      %1089 = vmatpush.msra.mxu0 0.0
      %1090 = vmatpush.msra.mxu0 0.0
      %1091 = vmatpush.msra.mxu0 %v966
      %1092 = vmatpush.msra.mxu0 %v942
      %1093 = vmatpush.msra.mxu0 %v940
      %1094 = vmatpush.msra.mxu0 %v938
      %1095 = vmatpush.msra.mxu0 %v936
      %1096 = vmatpush.msra.mxu0 %v934
      %1097 = vmatpush.msra.mxu0 %v932
      %1098 = vmatpush.msra.mxu0 %v930
      %1099 = vmatpush.msra.mxu0 %v928
      %1100 = vmatmul.f32.gmra.mxu0 %v1080
      %v1101 = vpop.f32.mrf.mxu0
      %v1102 = vadd.f32 0.0, %v1101
      %1103 = vmatmul.f32.gmra.mxu0 %v1082
      %v1104 = vpop.f32.mrf.mxu0
      %v1105 = vadd.f32 0.0, %v1104
      %1106 = vdwg.mxu0
      %1107 = vmatpush.msra.mxu0 0.0
      %1108 = vmatpush.msra.mxu0 0.0
      %1109 = vmatpush.msra.mxu0 0.0
      %1110 = vmatpush.msra.mxu0 0.0
      %1111 = vmatpush.msra.mxu0 0.0
      %1112 = vmatpush.msra.mxu0 0.0
      %1113 = vmatpush.msra.mxu0 0.0
      %1114 = vmatpush.msra.mxu0 %v969
      %1115 = vmatpush.msra.mxu0 %v943
      %1116 = vmatpush.msra.mxu0 %v941
      %1117 = vmatpush.msra.mxu0 %v939
      %1118 = vmatpush.msra.mxu0 %v937
      %1119 = vmatpush.msra.mxu0 %v935
      %1120 = vmatpush.msra.mxu0 %v933
      %1121 = vmatpush.msra.mxu0 %v931
      %1122 = vmatpush.msra.mxu0 %v929
      %1123 = vmatmul.f32.gmra.mxu0 %v1080
      %v1124 = vpop.f32.mrf.mxu0
      %v1125 = vadd.f32 0.0, %v1124
      %1126 = vmatmul.f32.gmra.mxu0 %v1082
      %v1127 = vpop.f32.mrf.mxu0
      %v1128 = vadd.f32 0.0, %v1127
      %1129 = vdwg.mxu0
      %v1130 = vadd.f32 %v807, %v1102
      %v1131 = vadd.f32 %v830, %v1125
      %v1132 = vadd.f32 %v810, %v1105
      %v1133 = vadd.f32 %v833, %v1128
      %1134 = vmatpush.msra.mxu0 0.0
      %1135 = vmatpush.msra.mxu0 0.0
      %1136 = vmatpush.msra.mxu0 0.0
      %1137 = vmatpush.msra.mxu0 0.0
      %1138 = vmatpush.msra.mxu0 0.0
      %1139 = vmatpush.msra.mxu0 0.0
      %1140 = vmatpush.msra.mxu0 0.0
      %1141 = vmatpush.msra.mxu0 %v1022
      %1142 = vmatpush.msra.mxu0 %v961
      %1143 = vmatpush.msra.mxu0 %v959
      %1144 = vmatpush.msra.mxu0 %v957
      %1145 = vmatpush.msra.mxu0 %v955
      %1146 = vmatpush.msra.mxu0 %v953
      %1147 = vmatpush.msra.mxu0 %v951
      %1148 = vmatpush.msra.mxu0 %v949
      %1149 = vmatpush.msra.mxu0 %v947
      %1150 = vmatmul.f32.gmra.mxu0 %v1080
      %v1151 = vpop.f32.mrf.mxu0
      %v1152 = vadd.f32 0.0, %v1151
      %1153 = vmatmul.f32.gmra.mxu0 %v1082
      %v1154 = vpop.f32.mrf.mxu0
      %v1155 = vadd.f32 0.0, %v1154
      %1156 = vdwg.mxu0
      %1157 = vmatpush.msra.mxu0 0.0
      %1158 = vmatpush.msra.mxu0 0.0
      %1159 = vmatpush.msra.mxu0 0.0
      %1160 = vmatpush.msra.mxu0 0.0
      %1161 = vmatpush.msra.mxu0 0.0
      %1162 = vmatpush.msra.mxu0 0.0
      %1163 = vmatpush.msra.mxu0 0.0
      %1164 = vmatpush.msra.mxu0 %v1025
      %1165 = vmatpush.msra.mxu0 %v962
      %1166 = vmatpush.msra.mxu0 %v960
      %1167 = vmatpush.msra.mxu0 %v958
      %1168 = vmatpush.msra.mxu0 %v956
      %1169 = vmatpush.msra.mxu0 %v954
      %1170 = vmatpush.msra.mxu0 %v952
      %1171 = vmatpush.msra.mxu0 %v950
      %1172 = vmatpush.msra.mxu0 %v948
      %1173 = vmatmul.f32.gmra.mxu0 %v1080
      %v1174 = vpop.f32.mrf.mxu0
      %v1175 = vadd.f32 0.0, %v1174
      %1176 = vmatmul.f32.gmra.mxu0 %v1082
      %v1177 = vpop.f32.mrf.mxu0
      %v1178 = vadd.f32 0.0, %v1177
      %1179 = vdwg.mxu0
      %v1180 = vadd.f32 %v899, %v1152
      %v1181 = vadd.f32 %v922, %v1175
      %v1182 = vadd.f32 %v902, %v1155
      %v1183 = vadd.f32 %v925, %v1178
      %s1184 = scalar_lea.vmem %s2, 432
      %v1185 = vld [vmem:[%s1184] sm:$0xff]
      %v1186 = vld [vmem:[%s1184 + $0x8] sm:$0xff]
      %v1187 = vld [vmem:[%s1184 + $0x10] sm:$0xff]
      %v1188 = vld [vmem:[%s1184 + $0x18] sm:$0xff]
      %v1189 = vld [vmem:[%s1184 + $0x20] sm:$0xff]
      %v1190 = vld [vmem:[%s1184 + $0x28] sm:$0xff]
      %v1191 = vld [vmem:[%s1184 + $0x30] sm:$0xff]
      %v1192 = vld [vmem:[%s1184 + $0x38] sm:$0xff]
      %v1193 = vld [vmem:[%s1184 + $0x40] sm:$0xff]
      %v1194 = vld [vmem:[%s1184 + $0x48] sm:$0xff]
      %v1195 = vld [vmem:[%s1184 + $0x50] sm:$0xff]
      %v1196 = vld [vmem:[%s1184 + $0x58] sm:$0xff]
      %v1197 = vld [vmem:[%s1184 + $0x60] sm:$0xff]
      %v1198 = vld [vmem:[%s1184 + $0x68] sm:$0xff]
      %v1199 = vld [vmem:[%s1184 + $0x70] sm:$0xff]
      %v1200 = vld [vmem:[%s1184 + $0x78] sm:$0xff]
      %v1201 = vld [vmem:[%s1184 + $0x80] sm:$0xf]
      %v1202 = vld [vmem:[%s1184 + $0x88] sm:$0xf]
      %s1203 = scalar_lea.vmem %s3, 432
      %v1204 = vld [vmem:[%s1203] sm:$0xff]
      %v1205 = vld [vmem:[%s1203 + $0x8] sm:$0xff]
      %v1206 = vld [vmem:[%s1203 + $0x10] sm:$0xff]
      %v1207 = vld [vmem:[%s1203 + $0x18] sm:$0xff]
      %v1208 = vld [vmem:[%s1203 + $0x20] sm:$0xff]
      %v1209 = vld [vmem:[%s1203 + $0x28] sm:$0xff]
      %v1210 = vld [vmem:[%s1203 + $0x30] sm:$0xff]
      %v1211 = vld [vmem:[%s1203 + $0x38] sm:$0xff]
      %v1212 = vld [vmem:[%s1203 + $0x40] sm:$0xff]
      %v1213 = vld [vmem:[%s1203 + $0x48] sm:$0xff]
      %v1214 = vld [vmem:[%s1203 + $0x50] sm:$0xff]
      %v1215 = vld [vmem:[%s1203 + $0x58] sm:$0xff]
      %v1216 = vld [vmem:[%s1203 + $0x60] sm:$0xff]
      %v1217 = vld [vmem:[%s1203 + $0x68] sm:$0xff]
      %v1218 = vld [vmem:[%s1203 + $0x70] sm:$0xff]
      %v1219 = vld [vmem:[%s1203 + $0x78] sm:$0xff]
      %v1220 = vld [vmem:[%s1203 + $0x80] sm:$0xf]
      %v1221 = vld [vmem:[%s1203 + $0x88] sm:$0xf]
      %v1223 = vsel %vm520, %v1201, 0
      %v1226 = vsel %vm520, %v1202, 0
      %1228 = vmatpush.msra.mxu0 0.0
      %1229 = vmatpush.msra.mxu0 0.0
      %1230 = vmatpush.msra.mxu0 0.0
      %1231 = vmatpush.msra.mxu0 0.0
      %1232 = vmatpush.msra.mxu0 0.0
      %1233 = vmatpush.msra.mxu0 0.0
      %1234 = vmatpush.msra.mxu0 0.0
      %1235 = vmatpush.msra.mxu0 %v1223
      %1236 = vmatpush.msra.mxu0 %v1199
      %1237 = vmatpush.msra.mxu0 %v1197
      %1238 = vmatpush.msra.mxu0 %v1195
      %1239 = vmatpush.msra.mxu0 %v1193
      %1240 = vmatpush.msra.mxu0 %v1191
      %1241 = vmatpush.msra.mxu0 %v1189
      %1242 = vmatpush.msra.mxu0 %v1187
      %1243 = vmatpush.msra.mxu0 %v1185
      %1244 = vmatmul.f32.gmra.mxu0 %v1080
      %v1245 = vpop.f32.mrf.mxu0
      %v1246 = vadd.f32 0.0, %v1245
      %1247 = vmatmul.f32.gmra.mxu0 %v1082
      %v1248 = vpop.f32.mrf.mxu0
      %v1249 = vadd.f32 0.0, %v1248
      %1250 = vdwg.mxu0
      %1251 = vmatpush.msra.mxu0 0.0
      %1252 = vmatpush.msra.mxu0 0.0
      %1253 = vmatpush.msra.mxu0 0.0
      %1254 = vmatpush.msra.mxu0 0.0
      %1255 = vmatpush.msra.mxu0 0.0
      %1256 = vmatpush.msra.mxu0 0.0
      %1257 = vmatpush.msra.mxu0 0.0
      %1258 = vmatpush.msra.mxu0 %v1226
      %1259 = vmatpush.msra.mxu0 %v1200
      %1260 = vmatpush.msra.mxu0 %v1198
      %1261 = vmatpush.msra.mxu0 %v1196
      %1262 = vmatpush.msra.mxu0 %v1194
      %1263 = vmatpush.msra.mxu0 %v1192
      %1264 = vmatpush.msra.mxu0 %v1190
      %1265 = vmatpush.msra.mxu0 %v1188
      %1266 = vmatpush.msra.mxu0 %v1186
      %1267 = vmatmul.f32.gmra.mxu0 %v1080
      %v1268 = vpop.f32.mrf.mxu0
      %v1269 = vadd.f32 0.0, %v1268
      %1270 = vmatmul.f32.gmra.mxu0 %v1082
      %v1271 = vpop.f32.mrf.mxu0
      %v1272 = vadd.f32 0.0, %v1271
      %1273 = vdwg.mxu0
      %v1274 = vadd.f32 %v1017, %v1246
      %v1275 = vadd.f32 %v1018, %v1269
      %v1276 = vadd.f32 %v1019, %v1249
      %v1277 = vadd.f32 %v1020, %v1272
      %v1279 = vsel %vm520, %v1220, 0
      %v1282 = vsel %vm520, %v1221, 0
      %1284 = vmatpush.msra.mxu0 0.0
      %1285 = vmatpush.msra.mxu0 0.0
      %1286 = vmatpush.msra.mxu0 0.0
      %1287 = vmatpush.msra.mxu0 0.0
      %1288 = vmatpush.msra.mxu0 0.0
      %1289 = vmatpush.msra.mxu0 0.0
      %1290 = vmatpush.msra.mxu0 0.0
      %1291 = vmatpush.msra.mxu0 %v1279
      %1292 = vmatpush.msra.mxu0 %v1218
      %1293 = vmatpush.msra.mxu0 %v1216
      %1294 = vmatpush.msra.mxu0 %v1214
      %1295 = vmatpush.msra.mxu0 %v1212
      %1296 = vmatpush.msra.mxu0 %v1210
      %1297 = vmatpush.msra.mxu0 %v1208
      %1298 = vmatpush.msra.mxu0 %v1206
      %1299 = vmatpush.msra.mxu0 %v1204
      %1300 = vmatmul.f32.gmra.mxu0 %v1080
      %v1301 = vpop.f32.mrf.mxu0
      %v1302 = vadd.f32 0.0, %v1301
      %1303 = vmatmul.f32.gmra.mxu0 %v1082
      %v1304 = vpop.f32.mrf.mxu0
      %v1305 = vadd.f32 0.0, %v1304
      %1306 = vdwg.mxu0
      %1307 = vmatpush.msra.mxu0 0.0
      %1308 = vmatpush.msra.mxu0 0.0
      %1309 = vmatpush.msra.mxu0 0.0
      %1310 = vmatpush.msra.mxu0 0.0
      %1311 = vmatpush.msra.mxu0 0.0
      %1312 = vmatpush.msra.mxu0 0.0
      %1313 = vmatpush.msra.mxu0 0.0
      %1314 = vmatpush.msra.mxu0 %v1282
      %1315 = vmatpush.msra.mxu0 %v1219
      %1316 = vmatpush.msra.mxu0 %v1217
      %1317 = vmatpush.msra.mxu0 %v1215
      %1318 = vmatpush.msra.mxu0 %v1213
      %1319 = vmatpush.msra.mxu0 %v1211
      %1320 = vmatpush.msra.mxu0 %v1209
      %1321 = vmatpush.msra.mxu0 %v1207
      %1322 = vmatpush.msra.mxu0 %v1205
      %1323 = vmatmul.f32.gmra.mxu0 %v1080
      %v1324 = vpop.f32.mrf.mxu0
      %v1325 = vadd.f32 0.0, %v1324
      %1326 = vmatmul.f32.gmra.mxu0 %v1082
      %v1327 = vpop.f32.mrf.mxu0
      %v1328 = vadd.f32 0.0, %v1327
      %1329 = vdwg.mxu0
      %v1330 = vadd.f32 %v1073, %v1302
      %v1331 = vadd.f32 %v1074, %v1325
      %v1332 = vadd.f32 %v1075, %v1305
      %v1333 = vadd.f32 %v1076, %v1328
      %vm1335 = vcmask 1045504
      %v1336 = vrot.slane %v433, 2
      %v1337 = vrot.slane %v434, 2
      %v1338 = vsel %vm1335, %v1336, %v1337
      %v1339 = vrot.slane %v435, 2
      %v1340 = vsel %vm1335, %v1337, %v1339
      %v1341 = vsel %vm513, %v1338, 0
      %v1343 = vsel %vm513, %v1340, 0
      %1345 = vmatpush.msra.mxu0 0.0
      %1346 = vmatpush.msra.mxu0 0.0
      %1347 = vmatpush.msra.mxu0 0.0
      %1348 = vmatpush.msra.mxu0 0.0
      %1349 = vmatpush.msra.mxu0 0.0
      %1350 = vmatpush.msra.mxu0 0.0
      %1351 = vmatpush.msra.mxu0 0.0
      %1352 = vmatpush.msra.mxu0 %v1223
      %1353 = vmatpush.msra.mxu0 %v1199
      %1354 = vmatpush.msra.mxu0 %v1197
      %1355 = vmatpush.msra.mxu0 %v1195
      %1356 = vmatpush.msra.mxu0 %v1193
      %1357 = vmatpush.msra.mxu0 %v1191
      %1358 = vmatpush.msra.mxu0 %v1189
      %1359 = vmatpush.msra.mxu0 %v1187
      %1360 = vmatpush.msra.mxu0 %v1185
      %1361 = vmatmul.f32.gmra.mxu0 %v1341
      %v1362 = vpop.f32.mrf.mxu0
      %v1363 = vadd.f32 0.0, %v1362
      %1364 = vmatmul.f32.gmra.mxu0 %v1343
      %v1365 = vpop.f32.mrf.mxu0
      %v1366 = vadd.f32 0.0, %v1365
      %1367 = vdwg.mxu0
      %1368 = vmatpush.msra.mxu0 0.0
      %1369 = vmatpush.msra.mxu0 0.0
      %1370 = vmatpush.msra.mxu0 0.0
      %1371 = vmatpush.msra.mxu0 0.0
      %1372 = vmatpush.msra.mxu0 0.0
      %1373 = vmatpush.msra.mxu0 0.0
      %1374 = vmatpush.msra.mxu0 0.0
      %1375 = vmatpush.msra.mxu0 %v1226
      %1376 = vmatpush.msra.mxu0 %v1200
      %1377 = vmatpush.msra.mxu0 %v1198
      %1378 = vmatpush.msra.mxu0 %v1196
      %1379 = vmatpush.msra.mxu0 %v1194
      %1380 = vmatpush.msra.mxu0 %v1192
      %1381 = vmatpush.msra.mxu0 %v1190
      %1382 = vmatpush.msra.mxu0 %v1188
      %1383 = vmatpush.msra.mxu0 %v1186
      %1384 = vmatmul.f32.gmra.mxu0 %v1341
      %v1385 = vpop.f32.mrf.mxu0
      %v1386 = vadd.f32 0.0, %v1385
      %1387 = vmatmul.f32.gmra.mxu0 %v1343
      %v1388 = vpop.f32.mrf.mxu0
      %v1389 = vadd.f32 0.0, %v1388
      %1390 = vdwg.mxu0
      %v1391 = vadd.f32 %v1130, %v1363
      %v1392 = vadd.f32 %v1131, %v1386
      %v1393 = vadd.f32 %v1132, %v1366
      %v1394 = vadd.f32 %v1133, %v1389
      %1395 = vmatpush.msra.mxu0 0.0
      %1396 = vmatpush.msra.mxu0 0.0
      %1397 = vmatpush.msra.mxu0 0.0
      %1398 = vmatpush.msra.mxu0 0.0
      %1399 = vmatpush.msra.mxu0 0.0
      %1400 = vmatpush.msra.mxu0 0.0
      %1401 = vmatpush.msra.mxu0 0.0
      %1402 = vmatpush.msra.mxu0 %v1279
      %1403 = vmatpush.msra.mxu0 %v1218
      %1404 = vmatpush.msra.mxu0 %v1216
      %1405 = vmatpush.msra.mxu0 %v1214
      %1406 = vmatpush.msra.mxu0 %v1212
      %1407 = vmatpush.msra.mxu0 %v1210
      %1408 = vmatpush.msra.mxu0 %v1208
      %1409 = vmatpush.msra.mxu0 %v1206
      %1410 = vmatpush.msra.mxu0 %v1204
      %1411 = vmatmul.f32.gmra.mxu0 %v1341
      %v1412 = vpop.f32.mrf.mxu0
      %v1413 = vadd.f32 0.0, %v1412
      %1414 = vmatmul.f32.gmra.mxu0 %v1343
      %v1415 = vpop.f32.mrf.mxu0
      %v1416 = vadd.f32 0.0, %v1415
      %1417 = vdwg.mxu0
      %1418 = vmatpush.msra.mxu0 0.0
      %1419 = vmatpush.msra.mxu0 0.0
      %1420 = vmatpush.msra.mxu0 0.0
      %1421 = vmatpush.msra.mxu0 0.0
      %1422 = vmatpush.msra.mxu0 0.0
      %1423 = vmatpush.msra.mxu0 0.0
      %1424 = vmatpush.msra.mxu0 0.0
      %1425 = vmatpush.msra.mxu0 %v1282
      %1426 = vmatpush.msra.mxu0 %v1219
      %1427 = vmatpush.msra.mxu0 %v1217
      %1428 = vmatpush.msra.mxu0 %v1215
      %1429 = vmatpush.msra.mxu0 %v1213
      %1430 = vmatpush.msra.mxu0 %v1211
      %1431 = vmatpush.msra.mxu0 %v1209
      %1432 = vmatpush.msra.mxu0 %v1207
      %1433 = vmatpush.msra.mxu0 %v1205
      %1434 = vmatmul.f32.gmra.mxu0 %v1341
      %v1435 = vpop.f32.mrf.mxu0
      %v1436 = vadd.f32 0.0, %v1435
      %1437 = vmatmul.f32.gmra.mxu0 %v1343
      %v1438 = vpop.f32.mrf.mxu0
      %v1439 = vadd.f32 0.0, %v1438
      %1440 = vdwg.mxu0
      %v1441 = vadd.f32 %v1180, %v1413
      %v1442 = vadd.f32 %v1181, %v1436
      %v1443 = vadd.f32 %v1182, %v1416
      %v1444 = vadd.f32 %v1183, %v1439
      %s1445 = scalar_lea.vmem %s2, 576
      %v1446 = vld [vmem:[%s1445] sm:$0xff]
      %v1447 = vld [vmem:[%s1445 + $0x8] sm:$0xff]
      %v1448 = vld [vmem:[%s1445 + $0x10] sm:$0xff]
      %v1449 = vld [vmem:[%s1445 + $0x18] sm:$0xff]
      %v1450 = vld [vmem:[%s1445 + $0x20] sm:$0xff]
      %v1451 = vld [vmem:[%s1445 + $0x28] sm:$0xff]
      %v1452 = vld [vmem:[%s1445 + $0x30] sm:$0xff]
      %v1453 = vld [vmem:[%s1445 + $0x38] sm:$0xff]
      %v1454 = vld [vmem:[%s1445 + $0x40] sm:$0xff]
      %v1455 = vld [vmem:[%s1445 + $0x48] sm:$0xff]
      %v1456 = vld [vmem:[%s1445 + $0x50] sm:$0xff]
      %v1457 = vld [vmem:[%s1445 + $0x58] sm:$0xff]
      %v1458 = vld [vmem:[%s1445 + $0x60] sm:$0xff]
      %v1459 = vld [vmem:[%s1445 + $0x68] sm:$0xff]
      %v1460 = vld [vmem:[%s1445 + $0x70] sm:$0xff]
      %v1461 = vld [vmem:[%s1445 + $0x78] sm:$0xff]
      %v1462 = vld [vmem:[%s1445 + $0x80] sm:$0xf]
      %v1463 = vld [vmem:[%s1445 + $0x88] sm:$0xf]
      %s1464 = scalar_lea.vmem %s3, 576
      %v1465 = vld [vmem:[%s1464] sm:$0xff]
      %v1466 = vld [vmem:[%s1464 + $0x8] sm:$0xff]
      %v1467 = vld [vmem:[%s1464 + $0x10] sm:$0xff]
      %v1468 = vld [vmem:[%s1464 + $0x18] sm:$0xff]
      %v1469 = vld [vmem:[%s1464 + $0x20] sm:$0xff]
      %v1470 = vld [vmem:[%s1464 + $0x28] sm:$0xff]
      %v1471 = vld [vmem:[%s1464 + $0x30] sm:$0xff]
      %v1472 = vld [vmem:[%s1464 + $0x38] sm:$0xff]
      %v1473 = vld [vmem:[%s1464 + $0x40] sm:$0xff]
      %v1474 = vld [vmem:[%s1464 + $0x48] sm:$0xff]
      %v1475 = vld [vmem:[%s1464 + $0x50] sm:$0xff]
      %v1476 = vld [vmem:[%s1464 + $0x58] sm:$0xff]
      %v1477 = vld [vmem:[%s1464 + $0x60] sm:$0xff]
      %v1478 = vld [vmem:[%s1464 + $0x68] sm:$0xff]
      %v1479 = vld [vmem:[%s1464 + $0x70] sm:$0xff]
      %v1480 = vld [vmem:[%s1464 + $0x78] sm:$0xff]
      %v1481 = vld [vmem:[%s1464 + $0x80] sm:$0xf]
      %v1482 = vld [vmem:[%s1464 + $0x88] sm:$0xf]
      %v1484 = vsel %vm520, %v1462, 0
      %v1487 = vsel %vm520, %v1463, 0
      %1489 = vmatpush.msra.mxu0 0.0
      %1490 = vmatpush.msra.mxu0 0.0
      %1491 = vmatpush.msra.mxu0 0.0
      %1492 = vmatpush.msra.mxu0 0.0
      %1493 = vmatpush.msra.mxu0 0.0
      %1494 = vmatpush.msra.mxu0 0.0
      %1495 = vmatpush.msra.mxu0 0.0
      %1496 = vmatpush.msra.mxu0 %v1484
      %1497 = vmatpush.msra.mxu0 %v1460
      %1498 = vmatpush.msra.mxu0 %v1458
      %1499 = vmatpush.msra.mxu0 %v1456
      %1500 = vmatpush.msra.mxu0 %v1454
      %1501 = vmatpush.msra.mxu0 %v1452
      %1502 = vmatpush.msra.mxu0 %v1450
      %1503 = vmatpush.msra.mxu0 %v1448
      %1504 = vmatpush.msra.mxu0 %v1446
      %1505 = vmatmul.f32.gmra.mxu0 %v1341
      %v1506 = vpop.f32.mrf.mxu0
      %v1507 = vadd.f32 0.0, %v1506
      %1508 = vmatmul.f32.gmra.mxu0 %v1343
      %v1509 = vpop.f32.mrf.mxu0
      %v1510 = vadd.f32 0.0, %v1509
      %1511 = vdwg.mxu0
      %1512 = vmatpush.msra.mxu0 0.0
      %1513 = vmatpush.msra.mxu0 0.0
      %1514 = vmatpush.msra.mxu0 0.0
      %1515 = vmatpush.msra.mxu0 0.0
      %1516 = vmatpush.msra.mxu0 0.0
      %1517 = vmatpush.msra.mxu0 0.0
      %1518 = vmatpush.msra.mxu0 0.0
      %1519 = vmatpush.msra.mxu0 %v1487
      %1520 = vmatpush.msra.mxu0 %v1461
      %1521 = vmatpush.msra.mxu0 %v1459
      %1522 = vmatpush.msra.mxu0 %v1457
      %1523 = vmatpush.msra.mxu0 %v1455
      %1524 = vmatpush.msra.mxu0 %v1453
      %1525 = vmatpush.msra.mxu0 %v1451
      %1526 = vmatpush.msra.mxu0 %v1449
      %1527 = vmatpush.msra.mxu0 %v1447
      %1528 = vmatmul.f32.gmra.mxu0 %v1341
      %v1529 = vpop.f32.mrf.mxu0
      %v1530 = vadd.f32 0.0, %v1529
      %1531 = vmatmul.f32.gmra.mxu0 %v1343
      %v1532 = vpop.f32.mrf.mxu0
      %v1533 = vadd.f32 0.0, %v1532
      %1534 = vdwg.mxu0
      %v1535 = vadd.f32 %v1274, %v1507
      %v1536 = vadd.f32 %v1275, %v1530
      %v1537 = vadd.f32 %v1276, %v1510
      %v1538 = vadd.f32 %v1277, %v1533
      %v1540 = vsel %vm520, %v1481, 0
      %v1543 = vsel %vm520, %v1482, 0
      %1545 = vmatpush.msra.mxu0 0.0
      %1546 = vmatpush.msra.mxu0 0.0
      %1547 = vmatpush.msra.mxu0 0.0
      %1548 = vmatpush.msra.mxu0 0.0
      %1549 = vmatpush.msra.mxu0 0.0
      %1550 = vmatpush.msra.mxu0 0.0
      %1551 = vmatpush.msra.mxu0 0.0
      %1552 = vmatpush.msra.mxu0 %v1540
      %1553 = vmatpush.msra.mxu0 %v1479
      %1554 = vmatpush.msra.mxu0 %v1477
      %1555 = vmatpush.msra.mxu0 %v1475
      %1556 = vmatpush.msra.mxu0 %v1473
      %1557 = vmatpush.msra.mxu0 %v1471
      %1558 = vmatpush.msra.mxu0 %v1469
      %1559 = vmatpush.msra.mxu0 %v1467
      %1560 = vmatpush.msra.mxu0 %v1465
      %1561 = vmatmul.f32.gmra.mxu0 %v1341
      %v1562 = vpop.f32.mrf.mxu0
      %v1563 = vadd.f32 0.0, %v1562
      %1564 = vmatmul.f32.gmra.mxu0 %v1343
      %v1565 = vpop.f32.mrf.mxu0
      %v1566 = vadd.f32 0.0, %v1565
      %1567 = vdwg.mxu0
      %1568 = vmatpush.msra.mxu0 0.0
      %1569 = vmatpush.msra.mxu0 0.0
      %1570 = vmatpush.msra.mxu0 0.0
      %1571 = vmatpush.msra.mxu0 0.0
      %1572 = vmatpush.msra.mxu0 0.0
      %1573 = vmatpush.msra.mxu0 0.0
      %1574 = vmatpush.msra.mxu0 0.0
      %1575 = vmatpush.msra.mxu0 %v1543
      %1576 = vmatpush.msra.mxu0 %v1480
      %1577 = vmatpush.msra.mxu0 %v1478
      %1578 = vmatpush.msra.mxu0 %v1476
      %1579 = vmatpush.msra.mxu0 %v1474
      %1580 = vmatpush.msra.mxu0 %v1472
      %1581 = vmatpush.msra.mxu0 %v1470
      %1582 = vmatpush.msra.mxu0 %v1468
      %1583 = vmatpush.msra.mxu0 %v1466
      %1584 = vmatmul.f32.gmra.mxu0 %v1341
      %v1585 = vpop.f32.mrf.mxu0
      %v1586 = vadd.f32 0.0, %v1585
      %1587 = vmatmul.f32.gmra.mxu0 %v1343
      %v1588 = vpop.f32.mrf.mxu0
      %v1589 = vadd.f32 0.0, %v1588
      %1590 = vdwg.mxu0
      %v1591 = vadd.f32 %v1330, %v1563
      %v1592 = vadd.f32 %v1331, %v1586
      %v1593 = vadd.f32 %v1332, %v1566
      %v1594 = vadd.f32 %v1333, %v1589
      %v1596 = vrot.slane %v436, 2
      %v1597 = vrot.slane %v437, 2
      %v1598 = vsel %vm1335, %v1596, %v1597
      %v1599 = vrot.slane %v438, 2
      %v1600 = vsel %vm1335, %v1597, %v1599
      %v1601 = vsel %vm513, %v1598, 0
      %v1603 = vsel %vm513, %v1600, 0
      %1605 = vmatpush.msra.mxu0 0.0
      %1606 = vmatpush.msra.mxu0 0.0
      %1607 = vmatpush.msra.mxu0 0.0
      %1608 = vmatpush.msra.mxu0 0.0
      %1609 = vmatpush.msra.mxu0 0.0
      %1610 = vmatpush.msra.mxu0 0.0
      %1611 = vmatpush.msra.mxu0 0.0
      %1612 = vmatpush.msra.mxu0 %v1484
      %1613 = vmatpush.msra.mxu0 %v1460
      %1614 = vmatpush.msra.mxu0 %v1458
      %1615 = vmatpush.msra.mxu0 %v1456
      %1616 = vmatpush.msra.mxu0 %v1454
      %1617 = vmatpush.msra.mxu0 %v1452
      %1618 = vmatpush.msra.mxu0 %v1450
      %1619 = vmatpush.msra.mxu0 %v1448
      %1620 = vmatpush.msra.mxu0 %v1446
      %1621 = vmatmul.f32.gmra.mxu0 %v1601
      %v1622 = vpop.f32.mrf.mxu0
      %v1623 = vadd.f32 0.0, %v1622
      %1624 = vmatmul.f32.gmra.mxu0 %v1603
      %v1625 = vpop.f32.mrf.mxu0
      %v1626 = vadd.f32 0.0, %v1625
      %1627 = vdwg.mxu0
      %1628 = vmatpush.msra.mxu0 0.0
      %1629 = vmatpush.msra.mxu0 0.0
      %1630 = vmatpush.msra.mxu0 0.0
      %1631 = vmatpush.msra.mxu0 0.0
      %1632 = vmatpush.msra.mxu0 0.0
      %1633 = vmatpush.msra.mxu0 0.0
      %1634 = vmatpush.msra.mxu0 0.0
      %1635 = vmatpush.msra.mxu0 %v1487
      %1636 = vmatpush.msra.mxu0 %v1461
      %1637 = vmatpush.msra.mxu0 %v1459
      %1638 = vmatpush.msra.mxu0 %v1457
      %1639 = vmatpush.msra.mxu0 %v1455
      %1640 = vmatpush.msra.mxu0 %v1453
      %1641 = vmatpush.msra.mxu0 %v1451
      %1642 = vmatpush.msra.mxu0 %v1449
      %1643 = vmatpush.msra.mxu0 %v1447
      %1644 = vmatmul.f32.gmra.mxu0 %v1601
      %v1645 = vpop.f32.mrf.mxu0
      %v1646 = vadd.f32 0.0, %v1645
      %1647 = vmatmul.f32.gmra.mxu0 %v1603
      %v1648 = vpop.f32.mrf.mxu0
      %v1649 = vadd.f32 0.0, %v1648
      %1650 = vdwg.mxu0
      %v1651 = vadd.f32 %v1391, %v1623
      %v1652 = vadd.f32 %v1392, %v1646
      %v1653 = vadd.f32 %v1393, %v1626
      %v1654 = vadd.f32 %v1394, %v1649
      %1655 = vmatpush.msra.mxu0 0.0
      %1656 = vmatpush.msra.mxu0 0.0
      %1657 = vmatpush.msra.mxu0 0.0
      %1658 = vmatpush.msra.mxu0 0.0
      %1659 = vmatpush.msra.mxu0 0.0
      %1660 = vmatpush.msra.mxu0 0.0
      %1661 = vmatpush.msra.mxu0 0.0
      %1662 = vmatpush.msra.mxu0 %v1540
      %1663 = vmatpush.msra.mxu0 %v1479
      %1664 = vmatpush.msra.mxu0 %v1477
      %1665 = vmatpush.msra.mxu0 %v1475
      %1666 = vmatpush.msra.mxu0 %v1473
      %1667 = vmatpush.msra.mxu0 %v1471
      %1668 = vmatpush.msra.mxu0 %v1469
      %1669 = vmatpush.msra.mxu0 %v1467
      %1670 = vmatpush.msra.mxu0 %v1465
      %1671 = vmatmul.f32.gmra.mxu0 %v1601
      %v1672 = vpop.f32.mrf.mxu0
      %v1673 = vadd.f32 0.0, %v1672
      %1674 = vmatmul.f32.gmra.mxu0 %v1603
      %v1675 = vpop.f32.mrf.mxu0
      %v1676 = vadd.f32 0.0, %v1675
      %1677 = vdwg.mxu0
      %1678 = vmatpush.msra.mxu0 0.0
      %1679 = vmatpush.msra.mxu0 0.0
      %1680 = vmatpush.msra.mxu0 0.0
      %1681 = vmatpush.msra.mxu0 0.0
      %1682 = vmatpush.msra.mxu0 0.0
      %1683 = vmatpush.msra.mxu0 0.0
      %1684 = vmatpush.msra.mxu0 0.0
      %1685 = vmatpush.msra.mxu0 %v1543
      %1686 = vmatpush.msra.mxu0 %v1480
      %1687 = vmatpush.msra.mxu0 %v1478
      %1688 = vmatpush.msra.mxu0 %v1476
      %1689 = vmatpush.msra.mxu0 %v1474
      %1690 = vmatpush.msra.mxu0 %v1472
      %1691 = vmatpush.msra.mxu0 %v1470
      %1692 = vmatpush.msra.mxu0 %v1468
      %1693 = vmatpush.msra.mxu0 %v1466
      %1694 = vmatmul.f32.gmra.mxu0 %v1601
      %v1695 = vpop.f32.mrf.mxu0
      %v1696 = vadd.f32 0.0, %v1695
      %1697 = vmatmul.f32.gmra.mxu0 %v1603
      %v1698 = vpop.f32.mrf.mxu0
      %v1699 = vadd.f32 0.0, %v1698
      %1700 = vdwg.mxu0
      %v1701 = vadd.f32 %v1441, %v1673
      %v1702 = vadd.f32 %v1442, %v1696
      %v1703 = vadd.f32 %v1443, %v1676
      %v1704 = vadd.f32 %v1444, %v1699
      %v1705 = vmax.f32 %v1535, %v1591
      %v1706 = vmax.f32 %v1536, %v1592
      %v1707 = vmax.f32 %v1537, %v1593
      %v1708 = vmax.f32 %v1538, %v1594
      %v1709 = vmax.f32 %v1651, %v1701
      %v1710 = vmax.f32 %v1652, %v1702
      %v1711 = vmax.f32 %v1653, %v1703
      %v1712 = vmax.f32 %v1654, %v1704
      %v1713 = vmax.f32 %v1705, %v1709
      %v1714 = vmax.f32 %v1706, %v1710
      %v1715 = vmax.f32 %v1707, %v1711
      %v1716 = vmax.f32 %v1708, %v1712
      %v1717 = vld [vmem:[%s4] sm:$0x3]
      %v1719 = vperm.slane %v1717, 0
      %v1720 = vperm.slane %v1717, 1
      %v1723 = vadd.f32 %v1713, %v1719
      %v1724 = vadd.f32 %v1714, %v1720
      %v1725 = vadd.f32 %v1715, %v1719
      %v1726 = vadd.f32 %v1716, %v1720
      %v1727 = vld [vmem:[#allocation2] sm:$0xff]
      %v1728 = vld [vmem:[#allocation2 + $0x8] sm:$0xff]
      %v1729 = vld [vmem:[#allocation2 + $0x10] sm:$0x7f]
      %v1730 = vld [vmem:[#allocation2 + $0x18] sm:$0x7f]
      %vm1731 = vcmp.gt.f32.partialorder %v1727, 1.0
      %vm1732 = vcmp.gt.f32.partialorder %v1728, 1.0
      %vm1733 = vcmp.gt.f32.partialorder %v1729, 1.0
      %vm1734 = vcmp.gt.f32.partialorder %v1730, 1.0
      %v1735 = vsel %vm1731, 1, 0
      %v1736 = vsel %vm1732, 1, 0
      %v1737 = vsel %vm1733, 1, 0
      %v1738 = vsel %vm1734, 1, 0
      %v1739 = vcvt.s32.f32 %v1735
      %v1740 = vcvt.s32.f32 %v1736
      %v1741 = vcvt.s32.f32 %v1737
      %v1742 = vcvt.s32.f32 %v1738
      %v1743 = vmul.f32 %v1727, 0.9
      %v1744 = vmul.f32 %v1728, 0.9
      %v1745 = vmul.f32 %v1729, 0.9
      %v1746 = vmul.f32 %v1730, 0.9
      %v1747 = vadd.f32 %v1743, %v1723
      %v1748 = vadd.f32 %v1744, %v1724
      %v1749 = vadd.f32 %v1745, %v1725
      %v1750 = vadd.f32 %v1746, %v1726
      %v1751 = vsub.f32 %v1747, %v1739
      %v1752 = vsub.f32 %v1748, %v1740
      %v1753 = vsub.f32 %v1749, %v1741
      %v1754 = vsub.f32 %v1750, %v1742
      %vm1755 = vcmp.gt.f32.partialorder %v1751, 1.0
      %vm1756 = vcmp.gt.f32.partialorder %v1752, 1.0
      %vm1757 = vcmp.gt.f32.partialorder %v1753, 1.0
      %vm1758 = vcmp.gt.f32.partialorder %v1754, 1.0
      %v1759 = vsel %vm1755, 1, 0
      %v1760 = vsel %vm1756, 1, 0
      %v1761 = vsel %vm1757, 1, 0
      %v1762 = vsel %vm1758, 1, 0
      %v1763 = vcvt.s32.f32 %v1759
      %v1764 = vcvt.s32.f32 %v1760
      %v1765 = vcvt.s32.f32 %v1761
      %v1766 = vcvt.s32.f32 %v1762
      %1767 = vst [vmem:[#allocation2] sm:$0xff] %v1751
      %vm1768 = vcmask 424960
      %1769 = vst.msk [vmem:[#allocation2 + $0x8] sm:$0xff] %vm1768, %v1752
      %1770 = vst [vmem:[#allocation2 + $0x10] sm:$0x7f] %v1753
      %vm1771 = vcmask 423936
      %1772 = vst.msk [vmem:[#allocation2 + $0x18] sm:$0x7f] %vm1771, %v1754
      %v1773 = vld [vmem:[%s5] sm:$0xff]
      %v1774 = vld [vmem:[%s5 + $0x8] sm:$0xff]
      %v1775 = vld [vmem:[%s5 + $0x10] sm:$0xff]
      %v1776 = vld [vmem:[%s5 + $0x18] sm:$0xff]
      %v1777 = vld [vmem:[%s5 + $0x20] sm:$0xff]
      %v1778 = vld [vmem:[%s5 + $0x28] sm:$0xff]
      %v1779 = vld [vmem:[%s5 + $0x30] sm:$0xff]
      %v1780 = vld [vmem:[%s5 + $0x38] sm:$0xff]
      %v1781 = vld [vmem:[%s5 + $0x40] sm:$0xff]
      %v1782 = vld [vmem:[%s5 + $0x48] sm:$0xff]
      %v1783 = vld [vmem:[%s5 + $0x50] sm:$0xff]
      %v1784 = vld [vmem:[%s5 + $0x58] sm:$0xff]
      %v1785 = vld [vmem:[%s5 + $0x60] sm:$0xff]
      %v1786 = vld [vmem:[%s5 + $0x68] sm:$0xff]
      %v1787 = vld [vmem:[%s5 + $0x70] sm:$0xff]
      %v1788 = vld [vmem:[%s5 + $0x78] sm:$0xff]
      %v1789 = vld [vmem:[%s5 + $0x80] sm:$0xff]
      %v1790 = vld [vmem:[%s5 + $0x88] sm:$0xff]
      %v1791 = vld [vmem:[%s5 + $0x90] sm:$0xff]
      %v1792 = vld [vmem:[%s5 + $0x98] sm:$0xff]
      %v1793 = vld [vmem:[%s5 + $0xa0] sm:$0xff]
      %v1794 = vld [vmem:[%s5 + $0xa8] sm:$0xff]
      %v1795 = vld [vmem:[%s5 + $0xb0] sm:$0xff]
      %v1796 = vld [vmem:[%s5 + $0xb8] sm:$0xff]
      %v1797 = vld [vmem:[%s5 + $0xc0] sm:$0xff]
      %v1798 = vld [vmem:[%s5 + $0xc8] sm:$0xff]
      %v1799 = vld [vmem:[%s5 + $0xd0] sm:$0xff]
      %v1800 = vld [vmem:[%s5 + $0xd8] sm:$0xff]
      %v1801 = vld [vmem:[%s5 + $0xe0] sm:$0xff]
      %v1802 = vld [vmem:[%s5 + $0xe8] sm:$0xff]
      %v1803 = vld [vmem:[%s5 + $0xf0] sm:$0xff]
      %v1804 = vld [vmem:[%s5 + $0xf8] sm:$0xff]
      %v1805 = vld [vmem:[%s5 + $0x100] sm:$0xff]
      %v1806 = vld [vmem:[%s5 + $0x108] sm:$0xff]
      %v1807 = vld [vmem:[%s5 + $0x110] sm:$0xff]
      %v1808 = vld [vmem:[%s5 + $0x118] sm:$0xff]
      %v1809 = vld [vmem:[%s5 + $0x120] sm:$0xff]
      %v1810 = vld [vmem:[%s5 + $0x128] sm:$0xff]
      %v1811 = vld [vmem:[%s5 + $0x130] sm:$0xff]
      %v1812 = vld [vmem:[%s5 + $0x138] sm:$0xff]
      %v1813 = vld [vmem:[%s5 + $0x140] sm:$0xff]
      %v1814 = vld [vmem:[%s5 + $0x148] sm:$0xff]
      %v1815 = vld [vmem:[%s5 + $0x150] sm:$0xff]
      %v1816 = vld [vmem:[%s5 + $0x158] sm:$0xff]
      %v1817 = vld [vmem:[%s5 + $0x160] sm:$0xf]
      %v1818 = vld [vmem:[%s5 + $0x168] sm:$0xf]
      %v1819 = vld [vmem:[%s6] sm:$0xff]
      %v1820 = vld [vmem:[%s6 + $0x8] sm:$0xff]
      %v1821 = vld [vmem:[%s6 + $0x10] sm:$0xff]
      %v1822 = vld [vmem:[%s6 + $0x18] sm:$0xff]
      %v1823 = vld [vmem:[%s6 + $0x20] sm:$0xff]
      %v1824 = vld [vmem:[%s6 + $0x28] sm:$0xff]
      %v1825 = vld [vmem:[%s6 + $0x30] sm:$0xff]
      %v1826 = vld [vmem:[%s6 + $0x38] sm:$0xff]
      %v1827 = vld [vmem:[%s6 + $0x40] sm:$0xff]
      %v1828 = vld [vmem:[%s6 + $0x48] sm:$0xff]
      %v1829 = vld [vmem:[%s6 + $0x50] sm:$0xff]
      %v1830 = vld [vmem:[%s6 + $0x58] sm:$0xff]
      %v1831 = vld [vmem:[%s6 + $0x60] sm:$0xff]
      %v1832 = vld [vmem:[%s6 + $0x68] sm:$0xff]
      %v1833 = vld [vmem:[%s6 + $0x70] sm:$0xff]
      %v1834 = vld [vmem:[%s6 + $0x78] sm:$0xff]
      %v1835 = vld [vmem:[%s6 + $0x80] sm:$0xff]
      %v1836 = vld [vmem:[%s6 + $0x88] sm:$0xff]
      %v1837 = vld [vmem:[%s6 + $0x90] sm:$0xff]
      %v1838 = vld [vmem:[%s6 + $0x98] sm:$0xff]
      %v1839 = vld [vmem:[%s6 + $0xa0] sm:$0xff]
      %v1840 = vld [vmem:[%s6 + $0xa8] sm:$0xff]
      %v1841 = vld [vmem:[%s6 + $0xb0] sm:$0xff]
      %v1842 = vld [vmem:[%s6 + $0xb8] sm:$0xff]
      %v1843 = vld [vmem:[%s6 + $0xc0] sm:$0xff]
      %v1844 = vld [vmem:[%s6 + $0xc8] sm:$0xff]
      %v1845 = vld [vmem:[%s6 + $0xd0] sm:$0xff]
      %v1846 = vld [vmem:[%s6 + $0xd8] sm:$0xff]
      %v1847 = vld [vmem:[%s6 + $0xe0] sm:$0xff]
      %v1848 = vld [vmem:[%s6 + $0xe8] sm:$0xff]
      %v1849 = vld [vmem:[%s6 + $0xf0] sm:$0xff]
      %v1850 = vld [vmem:[%s6 + $0xf8] sm:$0xff]
      %v1851 = vld [vmem:[%s6 + $0x100] sm:$0xff]
      %v1852 = vld [vmem:[%s6 + $0x108] sm:$0xff]
      %v1853 = vld [vmem:[%s6 + $0x110] sm:$0xff]
      %v1854 = vld [vmem:[%s6 + $0x118] sm:$0xff]
      %v1855 = vld [vmem:[%s6 + $0x120] sm:$0xff]
      %v1856 = vld [vmem:[%s6 + $0x128] sm:$0xff]
      %v1857 = vld [vmem:[%s6 + $0x130] sm:$0xff]
      %v1858 = vld [vmem:[%s6 + $0x138] sm:$0xff]
      %v1859 = vld [vmem:[%s6 + $0x140] sm:$0xff]
      %v1860 = vld [vmem:[%s6 + $0x148] sm:$0xff]
      %v1861 = vld [vmem:[%s6 + $0x150] sm:$0xff]
      %v1862 = vld [vmem:[%s6 + $0x158] sm:$0xff]
      %v1863 = vld [vmem:[%s6 + $0x160] sm:$0xf]
      %v1864 = vld [vmem:[%s6 + $0x168] sm:$0xf]
      %s1865 = scalar_lea.vmem %s5, 368
      %v1866 = vld [vmem:[%s1865] sm:$0xff]
      %v1867 = vld [vmem:[%s1865 + $0x8] sm:$0xff]
      %v1868 = vld [vmem:[%s1865 + $0x10] sm:$0xff]
      %v1869 = vld [vmem:[%s1865 + $0x18] sm:$0xff]
      %v1870 = vld [vmem:[%s1865 + $0x20] sm:$0xff]
      %v1871 = vld [vmem:[%s1865 + $0x28] sm:$0xff]
      %v1872 = vld [vmem:[%s1865 + $0x30] sm:$0xff]
      %v1873 = vld [vmem:[%s1865 + $0x38] sm:$0xff]
      %v1874 = vld [vmem:[%s1865 + $0x40] sm:$0xff]
      %v1875 = vld [vmem:[%s1865 + $0x48] sm:$0xff]
      %v1876 = vld [vmem:[%s1865 + $0x50] sm:$0xff]
      %v1877 = vld [vmem:[%s1865 + $0x58] sm:$0xff]
      %v1878 = vld [vmem:[%s1865 + $0x60] sm:$0xff]
      %v1879 = vld [vmem:[%s1865 + $0x68] sm:$0xff]
      %v1880 = vld [vmem:[%s1865 + $0x70] sm:$0xff]
      %v1881 = vld [vmem:[%s1865 + $0x78] sm:$0xff]
      %v1882 = vld [vmem:[%s1865 + $0x80] sm:$0xff]
      %v1883 = vld [vmem:[%s1865 + $0x88] sm:$0xff]
      %v1884 = vld [vmem:[%s1865 + $0x90] sm:$0xff]
      %v1885 = vld [vmem:[%s1865 + $0x98] sm:$0xff]
      %v1886 = vld [vmem:[%s1865 + $0xa0] sm:$0xff]
      %v1887 = vld [vmem:[%s1865 + $0xa8] sm:$0xff]
      %v1888 = vld [vmem:[%s1865 + $0xb0] sm:$0xff]
      %v1889 = vld [vmem:[%s1865 + $0xb8] sm:$0xff]
      %v1890 = vld [vmem:[%s1865 + $0xc0] sm:$0xff]
      %v1891 = vld [vmem:[%s1865 + $0xc8] sm:$0xff]
      %v1892 = vld [vmem:[%s1865 + $0xd0] sm:$0xff]
      %v1893 = vld [vmem:[%s1865 + $0xd8] sm:$0xff]
      %v1894 = vld [vmem:[%s1865 + $0xe0] sm:$0xff]
      %v1895 = vld [vmem:[%s1865 + $0xe8] sm:$0xff]
      %v1896 = vld [vmem:[%s1865 + $0xf0] sm:$0xff]
      %v1897 = vld [vmem:[%s1865 + $0xf8] sm:$0xff]
      %v1898 = vld [vmem:[%s1865 + $0x100] sm:$0xff]
      %v1899 = vld [vmem:[%s1865 + $0x108] sm:$0xff]
      %v1900 = vld [vmem:[%s1865 + $0x110] sm:$0xff]
      %v1901 = vld [vmem:[%s1865 + $0x118] sm:$0xff]
      %v1902 = vld [vmem:[%s1865 + $0x120] sm:$0xff]
      %v1903 = vld [vmem:[%s1865 + $0x128] sm:$0xff]
      %v1904 = vld [vmem:[%s1865 + $0x130] sm:$0xff]
      %v1905 = vld [vmem:[%s1865 + $0x138] sm:$0xff]
      %v1906 = vld [vmem:[%s1865 + $0x140] sm:$0xff]
      %v1907 = vld [vmem:[%s1865 + $0x148] sm:$0xff]
      %v1908 = vld [vmem:[%s1865 + $0x150] sm:$0xff]
      %v1909 = vld [vmem:[%s1865 + $0x158] sm:$0xff]
      %v1910 = vld [vmem:[%s1865 + $0x160] sm:$0xf]
      %v1911 = vld [vmem:[%s1865 + $0x168] sm:$0xf]
      %v1916 = vrot.slane %v1763, 1
      %v1917 = vrot.slane %v1765, 1
      %v1918 = vsel %vm735, %v1916, %v1917
      %v1919 = vrot.slane %v1764, 1
      %v1920 = vrot.slane %v1766, 1
      %v1921 = vsel %vm735, %v1919, %v1920
      %v1924 = vsel %vm1768, %v1921, 0
      %v1926 = vsel %vm1768, %v1920, 0
      %v1929 = vsel %vm520, %v1910, 0
      %v1932 = vsel %vm520, %v1911, 0
      %1934 = vmatpush.msra.mxu0 %v1896
      %1935 = vmatpush.msra.mxu0 %v1894
      %1936 = vmatpush.msra.mxu0 %v1892
      %1937 = vmatpush.msra.mxu0 %v1890
      %1938 = vmatpush.msra.mxu0 %v1888
      %1939 = vmatpush.msra.mxu0 %v1886
      %1940 = vmatpush.msra.mxu0 %v1884
      %1941 = vmatpush.msra.mxu0 %v1882
      %1942 = vmatpush.msra.mxu0 %v1880
      %1943 = vmatpush.msra.mxu0 %v1878
      %1944 = vmatpush.msra.mxu0 %v1876
      %1945 = vmatpush.msra.mxu0 %v1874
      %1946 = vmatpush.msra.mxu0 %v1872
      %1947 = vmatpush.msra.mxu0 %v1870
      %1948 = vmatpush.msra.mxu0 %v1868
      %1949 = vmatpush.msra.mxu0 %v1866
      %1950 = vmatmul.f32.gmra.mxu0 %v1918
      %v1951 = vpop.f32.mrf.mxu0
      %v1952 = vadd.f32 0.0, %v1951
      %1953 = vmatmul.f32.gmra.mxu0 %v1917
      %v1954 = vpop.f32.mrf.mxu0
      %v1955 = vadd.f32 0.0, %v1954
      %1956 = vdwg.mxu0
      %1957 = vmatpush.msra.mxu0 0.0
      %1958 = vmatpush.msra.mxu0 0.0
      %1959 = vmatpush.msra.mxu0 0.0
      %1960 = vmatpush.msra.mxu0 0.0
      %1961 = vmatpush.msra.mxu0 0.0
      %1962 = vmatpush.msra.mxu0 0.0
      %1963 = vmatpush.msra.mxu0 0.0
      %1964 = vmatpush.msra.mxu0 0.0
      %1965 = vmatpush.msra.mxu0 0.0
      %1966 = vmatpush.msra.mxu0 %v1929
      %1967 = vmatpush.msra.mxu0 %v1908
      %1968 = vmatpush.msra.mxu0 %v1906
      %1969 = vmatpush.msra.mxu0 %v1904
      %1970 = vmatpush.msra.mxu0 %v1902
      %1971 = vmatpush.msra.mxu0 %v1900
      %1972 = vmatpush.msra.mxu0 %v1898
      %1973 = vmatmul.f32.gmra.mxu0 %v1924
      %v1974 = vpop.f32.mrf.mxu0
      %v1975 = vadd.f32 %v1952, %v1974
      %1976 = vmatmul.f32.gmra.mxu0 %v1926
      %v1977 = vpop.f32.mrf.mxu0
      %v1978 = vadd.f32 %v1955, %v1977
      %1979 = vdwg.mxu0
      %1980 = vmatpush.msra.mxu0 %v1897
      %1981 = vmatpush.msra.mxu0 %v1895
      %1982 = vmatpush.msra.mxu0 %v1893
      %1983 = vmatpush.msra.mxu0 %v1891
      %1984 = vmatpush.msra.mxu0 %v1889
      %1985 = vmatpush.msra.mxu0 %v1887
      %1986 = vmatpush.msra.mxu0 %v1885
      %1987 = vmatpush.msra.mxu0 %v1883
      %1988 = vmatpush.msra.mxu0 %v1881
      %1989 = vmatpush.msra.mxu0 %v1879
      %1990 = vmatpush.msra.mxu0 %v1877
      %1991 = vmatpush.msra.mxu0 %v1875
      %1992 = vmatpush.msra.mxu0 %v1873
      %1993 = vmatpush.msra.mxu0 %v1871
      %1994 = vmatpush.msra.mxu0 %v1869
      %1995 = vmatpush.msra.mxu0 %v1867
      %1996 = vmatmul.f32.gmra.mxu0 %v1918
      %v1997 = vpop.f32.mrf.mxu0
      %v1998 = vadd.f32 0.0, %v1997
      %1999 = vmatmul.f32.gmra.mxu0 %v1917
      %v2000 = vpop.f32.mrf.mxu0
      %v2001 = vadd.f32 0.0, %v2000
      %2002 = vdwg.mxu0
      %2003 = vmatpush.msra.mxu0 0.0
      %2004 = vmatpush.msra.mxu0 0.0
      %2005 = vmatpush.msra.mxu0 0.0
      %2006 = vmatpush.msra.mxu0 0.0
      %2007 = vmatpush.msra.mxu0 0.0
      %2008 = vmatpush.msra.mxu0 0.0
      %2009 = vmatpush.msra.mxu0 0.0
      %2010 = vmatpush.msra.mxu0 0.0
      %2011 = vmatpush.msra.mxu0 0.0
      %2012 = vmatpush.msra.mxu0 %v1932
      %2013 = vmatpush.msra.mxu0 %v1909
      %2014 = vmatpush.msra.mxu0 %v1907
      %2015 = vmatpush.msra.mxu0 %v1905
      %2016 = vmatpush.msra.mxu0 %v1903
      %2017 = vmatpush.msra.mxu0 %v1901
      %2018 = vmatpush.msra.mxu0 %v1899
      %2019 = vmatmul.f32.gmra.mxu0 %v1924
      %v2020 = vpop.f32.mrf.mxu0
      %v2021 = vadd.f32 %v1998, %v2020
      %2022 = vmatmul.f32.gmra.mxu0 %v1926
      %v2023 = vpop.f32.mrf.mxu0
      %v2024 = vadd.f32 %v2001, %v2023
      %2025 = vdwg.mxu0
      %v2026 = vsel %vm1768, %v1764, 0
      %v2028 = vsel %vm1768, %v1766, 0
      %v2031 = vsel %vm520, %v1817, 0
      %v2034 = vsel %vm520, %v1818, 0
      %2036 = vmatpush.msra.mxu0 %v1803
      %2037 = vmatpush.msra.mxu0 %v1801
      %2038 = vmatpush.msra.mxu0 %v1799
      %2039 = vmatpush.msra.mxu0 %v1797
      %2040 = vmatpush.msra.mxu0 %v1795
      %2041 = vmatpush.msra.mxu0 %v1793
      %2042 = vmatpush.msra.mxu0 %v1791
      %2043 = vmatpush.msra.mxu0 %v1789
      %2044 = vmatpush.msra.mxu0 %v1787
      %2045 = vmatpush.msra.mxu0 %v1785
      %2046 = vmatpush.msra.mxu0 %v1783
      %2047 = vmatpush.msra.mxu0 %v1781
      %2048 = vmatpush.msra.mxu0 %v1779
      %2049 = vmatpush.msra.mxu0 %v1777
      %2050 = vmatpush.msra.mxu0 %v1775
      %2051 = vmatpush.msra.mxu0 %v1773
      %2052 = vmatmul.f32.gmra.mxu0 %v1763
      %v2053 = vpop.f32.mrf.mxu0
      %v2054 = vadd.f32 %v1975, %v2053
      %2055 = vmatmul.f32.gmra.mxu0 %v1765
      %v2056 = vpop.f32.mrf.mxu0
      %v2057 = vadd.f32 %v1978, %v2056
      %2058 = vdwg.mxu0
      %2059 = vmatpush.msra.mxu0 0.0
      %2060 = vmatpush.msra.mxu0 0.0
      %2061 = vmatpush.msra.mxu0 0.0
      %2062 = vmatpush.msra.mxu0 0.0
      %2063 = vmatpush.msra.mxu0 0.0
      %2064 = vmatpush.msra.mxu0 0.0
      %2065 = vmatpush.msra.mxu0 0.0
      %2066 = vmatpush.msra.mxu0 0.0
      %2067 = vmatpush.msra.mxu0 0.0
      %2068 = vmatpush.msra.mxu0 %v2031
      %2069 = vmatpush.msra.mxu0 %v1815
      %2070 = vmatpush.msra.mxu0 %v1813
      %2071 = vmatpush.msra.mxu0 %v1811
      %2072 = vmatpush.msra.mxu0 %v1809
      %2073 = vmatpush.msra.mxu0 %v1807
      %2074 = vmatpush.msra.mxu0 %v1805
      %2075 = vmatmul.f32.gmra.mxu0 %v2026
      %v2076 = vpop.f32.mrf.mxu0
      %v2077 = vadd.f32 %v2054, %v2076
      %2078 = vmatmul.f32.gmra.mxu0 %v2028
      %v2079 = vpop.f32.mrf.mxu0
      %v2080 = vadd.f32 %v2057, %v2079
      %2081 = vdwg.mxu0
      %2082 = vmatpush.msra.mxu0 %v1804
      %2083 = vmatpush.msra.mxu0 %v1802
      %2084 = vmatpush.msra.mxu0 %v1800
      %2085 = vmatpush.msra.mxu0 %v1798
      %2086 = vmatpush.msra.mxu0 %v1796
      %2087 = vmatpush.msra.mxu0 %v1794
      %2088 = vmatpush.msra.mxu0 %v1792
      %2089 = vmatpush.msra.mxu0 %v1790
      %2090 = vmatpush.msra.mxu0 %v1788
      %2091 = vmatpush.msra.mxu0 %v1786
      %2092 = vmatpush.msra.mxu0 %v1784
      %2093 = vmatpush.msra.mxu0 %v1782
      %2094 = vmatpush.msra.mxu0 %v1780
      %2095 = vmatpush.msra.mxu0 %v1778
      %2096 = vmatpush.msra.mxu0 %v1776
      %2097 = vmatpush.msra.mxu0 %v1774
      %2098 = vmatmul.f32.gmra.mxu0 %v1763
      %v2099 = vpop.f32.mrf.mxu0
      %v2100 = vadd.f32 %v2021, %v2099
      %2101 = vmatmul.f32.gmra.mxu0 %v1765
      %v2102 = vpop.f32.mrf.mxu0
      %v2103 = vadd.f32 %v2024, %v2102
      %2104 = vdwg.mxu0
      %2105 = vmatpush.msra.mxu0 0.0
      %2106 = vmatpush.msra.mxu0 0.0
      %2107 = vmatpush.msra.mxu0 0.0
      %2108 = vmatpush.msra.mxu0 0.0
      %2109 = vmatpush.msra.mxu0 0.0
      %2110 = vmatpush.msra.mxu0 0.0
      %2111 = vmatpush.msra.mxu0 0.0
      %2112 = vmatpush.msra.mxu0 0.0
      %2113 = vmatpush.msra.mxu0 0.0
      %2114 = vmatpush.msra.mxu0 %v2034
      %2115 = vmatpush.msra.mxu0 %v1816
      %2116 = vmatpush.msra.mxu0 %v1814
      %2117 = vmatpush.msra.mxu0 %v1812
      %2118 = vmatpush.msra.mxu0 %v1810
      %2119 = vmatpush.msra.mxu0 %v1808
      %2120 = vmatpush.msra.mxu0 %v1806
      %2121 = vmatmul.f32.gmra.mxu0 %v2026
      %v2122 = vpop.f32.mrf.mxu0
      %v2123 = vadd.f32 %v2100, %v2122
      %2124 = vmatmul.f32.gmra.mxu0 %v2028
      %v2125 = vpop.f32.mrf.mxu0
      %v2126 = vadd.f32 %v2103, %v2125
      %2127 = vdwg.mxu0
      %s2128 = scalar_lea.vmem %s6, 368
      %v2129 = vld [vmem:[%s2128] sm:$0xff]
      %v2130 = vld [vmem:[%s2128 + $0x8] sm:$0xff]
      %v2131 = vld [vmem:[%s2128 + $0x10] sm:$0xff]
      %v2132 = vld [vmem:[%s2128 + $0x18] sm:$0xff]
      %v2133 = vld [vmem:[%s2128 + $0x20] sm:$0xff]
      %v2134 = vld [vmem:[%s2128 + $0x28] sm:$0xff]
      %v2135 = vld [vmem:[%s2128 + $0x30] sm:$0xff]
      %v2136 = vld [vmem:[%s2128 + $0x38] sm:$0xff]
      %v2137 = vld [vmem:[%s2128 + $0x40] sm:$0xff]
      %v2138 = vld [vmem:[%s2128 + $0x48] sm:$0xff]
      %v2139 = vld [vmem:[%s2128 + $0x50] sm:$0xff]
      %v2140 = vld [vmem:[%s2128 + $0x58] sm:$0xff]
      %v2141 = vld [vmem:[%s2128 + $0x60] sm:$0xff]
      %v2142 = vld [vmem:[%s2128 + $0x68] sm:$0xff]
      %v2143 = vld [vmem:[%s2128 + $0x70] sm:$0xff]
      %v2144 = vld [vmem:[%s2128 + $0x78] sm:$0xff]
      %v2145 = vld [vmem:[%s2128 + $0x80] sm:$0xff]
      %v2146 = vld [vmem:[%s2128 + $0x88] sm:$0xff]
      %v2147 = vld [vmem:[%s2128 + $0x90] sm:$0xff]
      %v2148 = vld [vmem:[%s2128 + $0x98] sm:$0xff]
      %v2149 = vld [vmem:[%s2128 + $0xa0] sm:$0xff]
      %v2150 = vld [vmem:[%s2128 + $0xa8] sm:$0xff]
      %v2151 = vld [vmem:[%s2128 + $0xb0] sm:$0xff]
      %v2152 = vld [vmem:[%s2128 + $0xb8] sm:$0xff]
      %v2153 = vld [vmem:[%s2128 + $0xc0] sm:$0xff]
      %v2154 = vld [vmem:[%s2128 + $0xc8] sm:$0xff]
      %v2155 = vld [vmem:[%s2128 + $0xd0] sm:$0xff]
      %v2156 = vld [vmem:[%s2128 + $0xd8] sm:$0xff]
      %v2157 = vld [vmem:[%s2128 + $0xe0] sm:$0xff]
      %v2158 = vld [vmem:[%s2128 + $0xe8] sm:$0xff]
      %v2159 = vld [vmem:[%s2128 + $0xf0] sm:$0xff]
      %v2160 = vld [vmem:[%s2128 + $0xf8] sm:$0xff]
      %v2161 = vld [vmem:[%s2128 + $0x100] sm:$0xff]
      %v2162 = vld [vmem:[%s2128 + $0x108] sm:$0xff]
      %v2163 = vld [vmem:[%s2128 + $0x110] sm:$0xff]
      %v2164 = vld [vmem:[%s2128 + $0x118] sm:$0xff]
      %v2165 = vld [vmem:[%s2128 + $0x120] sm:$0xff]
      %v2166 = vld [vmem:[%s2128 + $0x128] sm:$0xff]
      %v2167 = vld [vmem:[%s2128 + $0x130] sm:$0xff]
      %v2168 = vld [vmem:[%s2128 + $0x138] sm:$0xff]
      %v2169 = vld [vmem:[%s2128 + $0x140] sm:$0xff]
      %v2170 = vld [vmem:[%s2128 + $0x148] sm:$0xff]
      %v2171 = vld [vmem:[%s2128 + $0x150] sm:$0xff]
      %v2172 = vld [vmem:[%s2128 + $0x158] sm:$0xff]
      %v2173 = vld [vmem:[%s2128 + $0x160] sm:$0xf]
      %v2174 = vld [vmem:[%s2128 + $0x168] sm:$0xf]
      %v2176 = vsel %vm520, %v2173, 0
      %v2179 = vsel %vm520, %v2174, 0
      %2181 = vmatpush.msra.mxu0 %v2159
      %2182 = vmatpush.msra.mxu0 %v2157
      %2183 = vmatpush.msra.mxu0 %v2155
      %2184 = vmatpush.msra.mxu0 %v2153
      %2185 = vmatpush.msra.mxu0 %v2151
      %2186 = vmatpush.msra.mxu0 %v2149
      %2187 = vmatpush.msra.mxu0 %v2147
      %2188 = vmatpush.msra.mxu0 %v2145
      %2189 = vmatpush.msra.mxu0 %v2143
      %2190 = vmatpush.msra.mxu0 %v2141
      %2191 = vmatpush.msra.mxu0 %v2139
      %2192 = vmatpush.msra.mxu0 %v2137
      %2193 = vmatpush.msra.mxu0 %v2135
      %2194 = vmatpush.msra.mxu0 %v2133
      %2195 = vmatpush.msra.mxu0 %v2131
      %2196 = vmatpush.msra.mxu0 %v2129
      %2197 = vmatmul.f32.gmra.mxu0 %v1918
      %v2198 = vpop.f32.mrf.mxu0
      %v2199 = vadd.f32 0.0, %v2198
      %2200 = vmatmul.f32.gmra.mxu0 %v1917
      %v2201 = vpop.f32.mrf.mxu0
      %v2202 = vadd.f32 0.0, %v2201
      %2203 = vdwg.mxu0
      %2204 = vmatpush.msra.mxu0 0.0
      %2205 = vmatpush.msra.mxu0 0.0
      %2206 = vmatpush.msra.mxu0 0.0
      %2207 = vmatpush.msra.mxu0 0.0
      %2208 = vmatpush.msra.mxu0 0.0
      %2209 = vmatpush.msra.mxu0 0.0
      %2210 = vmatpush.msra.mxu0 0.0
      %2211 = vmatpush.msra.mxu0 0.0
      %2212 = vmatpush.msra.mxu0 0.0
      %2213 = vmatpush.msra.mxu0 %v2176
      %2214 = vmatpush.msra.mxu0 %v2171
      %2215 = vmatpush.msra.mxu0 %v2169
      %2216 = vmatpush.msra.mxu0 %v2167
      %2217 = vmatpush.msra.mxu0 %v2165
      %2218 = vmatpush.msra.mxu0 %v2163
      %2219 = vmatpush.msra.mxu0 %v2161
      %2220 = vmatmul.f32.gmra.mxu0 %v1924
      %v2221 = vpop.f32.mrf.mxu0
      %v2222 = vadd.f32 %v2199, %v2221
      %2223 = vmatmul.f32.gmra.mxu0 %v1926
      %v2224 = vpop.f32.mrf.mxu0
      %v2225 = vadd.f32 %v2202, %v2224
      %2226 = vdwg.mxu0
      %2227 = vmatpush.msra.mxu0 %v2160
      %2228 = vmatpush.msra.mxu0 %v2158
      %2229 = vmatpush.msra.mxu0 %v2156
      %2230 = vmatpush.msra.mxu0 %v2154
      %2231 = vmatpush.msra.mxu0 %v2152
      %2232 = vmatpush.msra.mxu0 %v2150
      %2233 = vmatpush.msra.mxu0 %v2148
      %2234 = vmatpush.msra.mxu0 %v2146
      %2235 = vmatpush.msra.mxu0 %v2144
      %2236 = vmatpush.msra.mxu0 %v2142
      %2237 = vmatpush.msra.mxu0 %v2140
      %2238 = vmatpush.msra.mxu0 %v2138
      %2239 = vmatpush.msra.mxu0 %v2136
      %2240 = vmatpush.msra.mxu0 %v2134
      %2241 = vmatpush.msra.mxu0 %v2132
      %2242 = vmatpush.msra.mxu0 %v2130
      %2243 = vmatmul.f32.gmra.mxu0 %v1918
      %v2244 = vpop.f32.mrf.mxu0
      %v2245 = vadd.f32 0.0, %v2244
      %2246 = vmatmul.f32.gmra.mxu0 %v1917
      %v2247 = vpop.f32.mrf.mxu0
      %v2248 = vadd.f32 0.0, %v2247
      %2249 = vdwg.mxu0
      %2250 = vmatpush.msra.mxu0 0.0
      %2251 = vmatpush.msra.mxu0 0.0
      %2252 = vmatpush.msra.mxu0 0.0
      %2253 = vmatpush.msra.mxu0 0.0
      %2254 = vmatpush.msra.mxu0 0.0
      %2255 = vmatpush.msra.mxu0 0.0
      %2256 = vmatpush.msra.mxu0 0.0
      %2257 = vmatpush.msra.mxu0 0.0
      %2258 = vmatpush.msra.mxu0 0.0
      %2259 = vmatpush.msra.mxu0 %v2179
      %2260 = vmatpush.msra.mxu0 %v2172
      %2261 = vmatpush.msra.mxu0 %v2170
      %2262 = vmatpush.msra.mxu0 %v2168
      %2263 = vmatpush.msra.mxu0 %v2166
      %2264 = vmatpush.msra.mxu0 %v2164
      %2265 = vmatpush.msra.mxu0 %v2162
      %2266 = vmatmul.f32.gmra.mxu0 %v1924
      %v2267 = vpop.f32.mrf.mxu0
      %v2268 = vadd.f32 %v2245, %v2267
      %2269 = vmatmul.f32.gmra.mxu0 %v1926
      %v2270 = vpop.f32.mrf.mxu0
      %v2271 = vadd.f32 %v2248, %v2270
      %2272 = vdwg.mxu0
      %v2274 = vsel %vm520, %v1863, 0
      %v2277 = vsel %vm520, %v1864, 0
      %2279 = vmatpush.msra.mxu0 %v1849
      %2280 = vmatpush.msra.mxu0 %v1847
      %2281 = vmatpush.msra.mxu0 %v1845
      %2282 = vmatpush.msra.mxu0 %v1843
      %2283 = vmatpush.msra.mxu0 %v1841
      %2284 = vmatpush.msra.mxu0 %v1839
      %2285 = vmatpush.msra.mxu0 %v1837
      %2286 = vmatpush.msra.mxu0 %v1835
      %2287 = vmatpush.msra.mxu0 %v1833
      %2288 = vmatpush.msra.mxu0 %v1831
      %2289 = vmatpush.msra.mxu0 %v1829
      %2290 = vmatpush.msra.mxu0 %v1827
      %2291 = vmatpush.msra.mxu0 %v1825
      %2292 = vmatpush.msra.mxu0 %v1823
      %2293 = vmatpush.msra.mxu0 %v1821
      %2294 = vmatpush.msra.mxu0 %v1819
      %2295 = vmatmul.f32.gmra.mxu0 %v1763
      %v2296 = vpop.f32.mrf.mxu0
      %v2297 = vadd.f32 %v2222, %v2296
      %2298 = vmatmul.f32.gmra.mxu0 %v1765
      %v2299 = vpop.f32.mrf.mxu0
      %v2300 = vadd.f32 %v2225, %v2299
      %2301 = vdwg.mxu0
      %2302 = vmatpush.msra.mxu0 0.0
      %2303 = vmatpush.msra.mxu0 0.0
      %2304 = vmatpush.msra.mxu0 0.0
      %2305 = vmatpush.msra.mxu0 0.0
      %2306 = vmatpush.msra.mxu0 0.0
      %2307 = vmatpush.msra.mxu0 0.0
      %2308 = vmatpush.msra.mxu0 0.0
      %2309 = vmatpush.msra.mxu0 0.0
      %2310 = vmatpush.msra.mxu0 0.0
      %2311 = vmatpush.msra.mxu0 %v2274
      %2312 = vmatpush.msra.mxu0 %v1861
      %2313 = vmatpush.msra.mxu0 %v1859
      %2314 = vmatpush.msra.mxu0 %v1857
      %2315 = vmatpush.msra.mxu0 %v1855
      %2316 = vmatpush.msra.mxu0 %v1853
      %2317 = vmatpush.msra.mxu0 %v1851
      %2318 = vmatmul.f32.gmra.mxu0 %v2026
      %v2319 = vpop.f32.mrf.mxu0
      %v2320 = vadd.f32 %v2297, %v2319
      %2321 = vmatmul.f32.gmra.mxu0 %v2028
      %v2322 = vpop.f32.mrf.mxu0
      %v2323 = vadd.f32 %v2300, %v2322
      %2324 = vdwg.mxu0
      %2325 = vmatpush.msra.mxu0 %v1850
      %2326 = vmatpush.msra.mxu0 %v1848
      %2327 = vmatpush.msra.mxu0 %v1846
      %2328 = vmatpush.msra.mxu0 %v1844
      %2329 = vmatpush.msra.mxu0 %v1842
      %2330 = vmatpush.msra.mxu0 %v1840
      %2331 = vmatpush.msra.mxu0 %v1838
      %2332 = vmatpush.msra.mxu0 %v1836
      %2333 = vmatpush.msra.mxu0 %v1834
      %2334 = vmatpush.msra.mxu0 %v1832
      %2335 = vmatpush.msra.mxu0 %v1830
      %2336 = vmatpush.msra.mxu0 %v1828
      %2337 = vmatpush.msra.mxu0 %v1826
      %2338 = vmatpush.msra.mxu0 %v1824
      %2339 = vmatpush.msra.mxu0 %v1822
      %2340 = vmatpush.msra.mxu0 %v1820
      %2341 = vmatmul.f32.gmra.mxu0 %v1763
      %v2342 = vpop.f32.mrf.mxu0
      %v2343 = vadd.f32 %v2268, %v2342
      %2344 = vmatmul.f32.gmra.mxu0 %v1765
      %v2345 = vpop.f32.mrf.mxu0
      %v2346 = vadd.f32 %v2271, %v2345
      %2347 = vdwg.mxu0
      %2348 = vmatpush.msra.mxu0 0.0
      %2349 = vmatpush.msra.mxu0 0.0
      %2350 = vmatpush.msra.mxu0 0.0
      %2351 = vmatpush.msra.mxu0 0.0
      %2352 = vmatpush.msra.mxu0 0.0
      %2353 = vmatpush.msra.mxu0 0.0
      %2354 = vmatpush.msra.mxu0 0.0
      %2355 = vmatpush.msra.mxu0 0.0
      %2356 = vmatpush.msra.mxu0 0.0
      %2357 = vmatpush.msra.mxu0 %v2277
      %2358 = vmatpush.msra.mxu0 %v1862
      %2359 = vmatpush.msra.mxu0 %v1860
      %2360 = vmatpush.msra.mxu0 %v1858
      %2361 = vmatpush.msra.mxu0 %v1856
      %2362 = vmatpush.msra.mxu0 %v1854
      %2363 = vmatpush.msra.mxu0 %v1852
      %2364 = vmatmul.f32.gmra.mxu0 %v2026
      %v2365 = vpop.f32.mrf.mxu0
      %v2366 = vadd.f32 %v2343, %v2365
      %2367 = vmatmul.f32.gmra.mxu0 %v2028
      %v2368 = vpop.f32.mrf.mxu0
      %v2369 = vadd.f32 %v2346, %v2368
      %2370 = vdwg.mxu0
      %s2371 = scalar_lea.vmem %s5, 736
      %v2372 = vld [vmem:[%s2371] sm:$0xff]
      %v2373 = vld [vmem:[%s2371 + $0x8] sm:$0xff]
      %v2374 = vld [vmem:[%s2371 + $0x10] sm:$0xff]
      %v2375 = vld [vmem:[%s2371 + $0x18] sm:$0xff]
      %v2376 = vld [vmem:[%s2371 + $0x20] sm:$0xff]
      %v2377 = vld [vmem:[%s2371 + $0x28] sm:$0xff]
      %v2378 = vld [vmem:[%s2371 + $0x30] sm:$0xff]
      %v2379 = vld [vmem:[%s2371 + $0x38] sm:$0xff]
      %v2380 = vld [vmem:[%s2371 + $0x40] sm:$0xff]
      %v2381 = vld [vmem:[%s2371 + $0x48] sm:$0xff]
      %v2382 = vld [vmem:[%s2371 + $0x50] sm:$0xff]
      %v2383 = vld [vmem:[%s2371 + $0x58] sm:$0xff]
      %v2384 = vld [vmem:[%s2371 + $0x60] sm:$0xff]
      %v2385 = vld [vmem:[%s2371 + $0x68] sm:$0xff]
      %v2386 = vld [vmem:[%s2371 + $0x70] sm:$0xff]
      %v2387 = vld [vmem:[%s2371 + $0x78] sm:$0xff]
      %v2388 = vld [vmem:[%s2371 + $0x80] sm:$0xff]
      %v2389 = vld [vmem:[%s2371 + $0x88] sm:$0xff]
      %v2390 = vld [vmem:[%s2371 + $0x90] sm:$0xff]
      %v2391 = vld [vmem:[%s2371 + $0x98] sm:$0xff]
      %v2392 = vld [vmem:[%s2371 + $0xa0] sm:$0xff]
      %v2393 = vld [vmem:[%s2371 + $0xa8] sm:$0xff]
      %v2394 = vld [vmem:[%s2371 + $0xb0] sm:$0xff]
      %v2395 = vld [vmem:[%s2371 + $0xb8] sm:$0xff]
      %v2396 = vld [vmem:[%s2371 + $0xc0] sm:$0xff]
      %v2397 = vld [vmem:[%s2371 + $0xc8] sm:$0xff]
      %v2398 = vld [vmem:[%s2371 + $0xd0] sm:$0xff]
      %v2399 = vld [vmem:[%s2371 + $0xd8] sm:$0xff]
      %v2400 = vld [vmem:[%s2371 + $0xe0] sm:$0xff]
      %v2401 = vld [vmem:[%s2371 + $0xe8] sm:$0xff]
      %v2402 = vld [vmem:[%s2371 + $0xf0] sm:$0xff]
      %v2403 = vld [vmem:[%s2371 + $0xf8] sm:$0xff]
      %v2404 = vld [vmem:[%s2371 + $0x100] sm:$0xff]
      %v2405 = vld [vmem:[%s2371 + $0x108] sm:$0xff]
      %v2406 = vld [vmem:[%s2371 + $0x110] sm:$0xff]
      %v2407 = vld [vmem:[%s2371 + $0x118] sm:$0xff]
      %v2408 = vld [vmem:[%s2371 + $0x120] sm:$0xff]
      %v2409 = vld [vmem:[%s2371 + $0x128] sm:$0xff]
      %v2410 = vld [vmem:[%s2371 + $0x130] sm:$0xff]
      %v2411 = vld [vmem:[%s2371 + $0x138] sm:$0xff]
      %v2412 = vld [vmem:[%s2371 + $0x140] sm:$0xff]
      %v2413 = vld [vmem:[%s2371 + $0x148] sm:$0xff]
      %v2414 = vld [vmem:[%s2371 + $0x150] sm:$0xff]
      %v2415 = vld [vmem:[%s2371 + $0x158] sm:$0xff]
      %v2416 = vld [vmem:[%s2371 + $0x160] sm:$0xf]
      %v2417 = vld [vmem:[%s2371 + $0x168] sm:$0xf]
      %v2418 = vrot.slane %v1763, 2
      %v2419 = vrot.slane %v1765, 2
      %v2420 = vsel %vm1335, %v2418, %v2419
      %v2421 = vrot.slane %v1764, 2
      %v2422 = vrot.slane %v1766, 2
      %v2423 = vsel %vm1335, %v2421, %v2422
      %v2426 = vsel %vm1768, %v2423, 0
      %v2428 = vsel %vm1768, %v2422, 0
      %v2431 = vsel %vm520, %v2416, 0
      %v2434 = vsel %vm520, %v2417, 0
      %2436 = vmatpush.msra.mxu0 %v2402
      %2437 = vmatpush.msra.mxu0 %v2400
      %2438 = vmatpush.msra.mxu0 %v2398
      %2439 = vmatpush.msra.mxu0 %v2396
      %2440 = vmatpush.msra.mxu0 %v2394
      %2441 = vmatpush.msra.mxu0 %v2392
      %2442 = vmatpush.msra.mxu0 %v2390
      %2443 = vmatpush.msra.mxu0 %v2388
      %2444 = vmatpush.msra.mxu0 %v2386
      %2445 = vmatpush.msra.mxu0 %v2384
      %2446 = vmatpush.msra.mxu0 %v2382
      %2447 = vmatpush.msra.mxu0 %v2380
      %2448 = vmatpush.msra.mxu0 %v2378
      %2449 = vmatpush.msra.mxu0 %v2376
      %2450 = vmatpush.msra.mxu0 %v2374
      %2451 = vmatpush.msra.mxu0 %v2372
      %2452 = vmatmul.f32.gmra.mxu0 %v2420
      %v2453 = vpop.f32.mrf.mxu0
      %v2454 = vadd.f32 0.0, %v2453
      %2455 = vmatmul.f32.gmra.mxu0 %v2419
      %v2456 = vpop.f32.mrf.mxu0
      %v2457 = vadd.f32 0.0, %v2456
      %2458 = vdwg.mxu0
      %2459 = vmatpush.msra.mxu0 0.0
      %2460 = vmatpush.msra.mxu0 0.0
      %2461 = vmatpush.msra.mxu0 0.0
      %2462 = vmatpush.msra.mxu0 0.0
      %2463 = vmatpush.msra.mxu0 0.0
      %2464 = vmatpush.msra.mxu0 0.0
      %2465 = vmatpush.msra.mxu0 0.0
      %2466 = vmatpush.msra.mxu0 0.0
      %2467 = vmatpush.msra.mxu0 0.0
      %2468 = vmatpush.msra.mxu0 %v2431
      %2469 = vmatpush.msra.mxu0 %v2414
      %2470 = vmatpush.msra.mxu0 %v2412
      %2471 = vmatpush.msra.mxu0 %v2410
      %2472 = vmatpush.msra.mxu0 %v2408
      %2473 = vmatpush.msra.mxu0 %v2406
      %2474 = vmatpush.msra.mxu0 %v2404
      %2475 = vmatmul.f32.gmra.mxu0 %v2426
      %v2476 = vpop.f32.mrf.mxu0
      %v2477 = vadd.f32 %v2454, %v2476
      %2478 = vmatmul.f32.gmra.mxu0 %v2428
      %v2479 = vpop.f32.mrf.mxu0
      %v2480 = vadd.f32 %v2457, %v2479
      %2481 = vdwg.mxu0
      %2482 = vmatpush.msra.mxu0 %v2403
      %2483 = vmatpush.msra.mxu0 %v2401
      %2484 = vmatpush.msra.mxu0 %v2399
      %2485 = vmatpush.msra.mxu0 %v2397
      %2486 = vmatpush.msra.mxu0 %v2395
      %2487 = vmatpush.msra.mxu0 %v2393
      %2488 = vmatpush.msra.mxu0 %v2391
      %2489 = vmatpush.msra.mxu0 %v2389
      %2490 = vmatpush.msra.mxu0 %v2387
      %2491 = vmatpush.msra.mxu0 %v2385
      %2492 = vmatpush.msra.mxu0 %v2383
      %2493 = vmatpush.msra.mxu0 %v2381
      %2494 = vmatpush.msra.mxu0 %v2379
      %2495 = vmatpush.msra.mxu0 %v2377
      %2496 = vmatpush.msra.mxu0 %v2375
      %2497 = vmatpush.msra.mxu0 %v2373
      %2498 = vmatmul.f32.gmra.mxu0 %v2420
      %v2499 = vpop.f32.mrf.mxu0
      %v2500 = vadd.f32 0.0, %v2499
      %2501 = vmatmul.f32.gmra.mxu0 %v2419
      %v2502 = vpop.f32.mrf.mxu0
      %v2503 = vadd.f32 0.0, %v2502
      %2504 = vdwg.mxu0
      %2505 = vmatpush.msra.mxu0 0.0
      %2506 = vmatpush.msra.mxu0 0.0
      %2507 = vmatpush.msra.mxu0 0.0
      %2508 = vmatpush.msra.mxu0 0.0
      %2509 = vmatpush.msra.mxu0 0.0
      %2510 = vmatpush.msra.mxu0 0.0
      %2511 = vmatpush.msra.mxu0 0.0
      %2512 = vmatpush.msra.mxu0 0.0
      %2513 = vmatpush.msra.mxu0 0.0
      %2514 = vmatpush.msra.mxu0 %v2434
      %2515 = vmatpush.msra.mxu0 %v2415
      %2516 = vmatpush.msra.mxu0 %v2413
      %2517 = vmatpush.msra.mxu0 %v2411
      %2518 = vmatpush.msra.mxu0 %v2409
      %2519 = vmatpush.msra.mxu0 %v2407
      %2520 = vmatpush.msra.mxu0 %v2405
      %2521 = vmatmul.f32.gmra.mxu0 %v2426
      %v2522 = vpop.f32.mrf.mxu0
      %v2523 = vadd.f32 %v2500, %v2522
      %2524 = vmatmul.f32.gmra.mxu0 %v2428
      %v2525 = vpop.f32.mrf.mxu0
      %v2526 = vadd.f32 %v2503, %v2525
      %2527 = vdwg.mxu0
      %v2528 = vadd.f32 %v2077, %v2477
      %v2529 = vadd.f32 %v2123, %v2523
      %v2530 = vadd.f32 %v2080, %v2480
      %v2531 = vadd.f32 %v2126, %v2526
      %s2532 = scalar_lea.vmem %s6, 736
      %v2533 = vld [vmem:[%s2532] sm:$0xff]
      %v2534 = vld [vmem:[%s2532 + $0x8] sm:$0xff]
      %v2535 = vld [vmem:[%s2532 + $0x10] sm:$0xff]
      %v2536 = vld [vmem:[%s2532 + $0x18] sm:$0xff]
      %v2537 = vld [vmem:[%s2532 + $0x20] sm:$0xff]
      %v2538 = vld [vmem:[%s2532 + $0x28] sm:$0xff]
      %v2539 = vld [vmem:[%s2532 + $0x30] sm:$0xff]
      %v2540 = vld [vmem:[%s2532 + $0x38] sm:$0xff]
      %v2541 = vld [vmem:[%s2532 + $0x40] sm:$0xff]
      %v2542 = vld [vmem:[%s2532 + $0x48] sm:$0xff]
      %v2543 = vld [vmem:[%s2532 + $0x50] sm:$0xff]
      %v2544 = vld [vmem:[%s2532 + $0x58] sm:$0xff]
      %v2545 = vld [vmem:[%s2532 + $0x60] sm:$0xff]
      %v2546 = vld [vmem:[%s2532 + $0x68] sm:$0xff]
      %v2547 = vld [vmem:[%s2532 + $0x70] sm:$0xff]
      %v2548 = vld [vmem:[%s2532 + $0x78] sm:$0xff]
      %v2549 = vld [vmem:[%s2532 + $0x80] sm:$0xff]
      %v2550 = vld [vmem:[%s2532 + $0x88] sm:$0xff]
      %v2551 = vld [vmem:[%s2532 + $0x90] sm:$0xff]
      %v2552 = vld [vmem:[%s2532 + $0x98] sm:$0xff]
      %v2553 = vld [vmem:[%s2532 + $0xa0] sm:$0xff]
      %v2554 = vld [vmem:[%s2532 + $0xa8] sm:$0xff]
      %v2555 = vld [vmem:[%s2532 + $0xb0] sm:$0xff]
      %v2556 = vld [vmem:[%s2532 + $0xb8] sm:$0xff]
      %v2557 = vld [vmem:[%s2532 + $0xc0] sm:$0xff]
      %v2558 = vld [vmem:[%s2532 + $0xc8] sm:$0xff]
      %v2559 = vld [vmem:[%s2532 + $0xd0] sm:$0xff]
      %v2560 = vld [vmem:[%s2532 + $0xd8] sm:$0xff]
      %v2561 = vld [vmem:[%s2532 + $0xe0] sm:$0xff]
      %v2562 = vld [vmem:[%s2532 + $0xe8] sm:$0xff]
      %v2563 = vld [vmem:[%s2532 + $0xf0] sm:$0xff]
      %v2564 = vld [vmem:[%s2532 + $0xf8] sm:$0xff]
      %v2565 = vld [vmem:[%s2532 + $0x100] sm:$0xff]
      %v2566 = vld [vmem:[%s2532 + $0x108] sm:$0xff]
      %v2567 = vld [vmem:[%s2532 + $0x110] sm:$0xff]
      %v2568 = vld [vmem:[%s2532 + $0x118] sm:$0xff]
      %v2569 = vld [vmem:[%s2532 + $0x120] sm:$0xff]
      %v2570 = vld [vmem:[%s2532 + $0x128] sm:$0xff]
      %v2571 = vld [vmem:[%s2532 + $0x130] sm:$0xff]
      %v2572 = vld [vmem:[%s2532 + $0x138] sm:$0xff]
      %v2573 = vld [vmem:[%s2532 + $0x140] sm:$0xff]
      %v2574 = vld [vmem:[%s2532 + $0x148] sm:$0xff]
      %v2575 = vld [vmem:[%s2532 + $0x150] sm:$0xff]
      %v2576 = vld [vmem:[%s2532 + $0x158] sm:$0xff]
      %v2577 = vld [vmem:[%s2532 + $0x160] sm:$0xf]
      %v2578 = vld [vmem:[%s2532 + $0x168] sm:$0xf]
      %v2580 = vsel %vm520, %v2577, 0
      %v2583 = vsel %vm520, %v2578, 0
      %2585 = vmatpush.msra.mxu0 %v2563
      %2586 = vmatpush.msra.mxu0 %v2561
      %2587 = vmatpush.msra.mxu0 %v2559
      %2588 = vmatpush.msra.mxu0 %v2557
      %2589 = vmatpush.msra.mxu0 %v2555
      %2590 = vmatpush.msra.mxu0 %v2553
      %2591 = vmatpush.msra.mxu0 %v2551
      %2592 = vmatpush.msra.mxu0 %v2549
      %2593 = vmatpush.msra.mxu0 %v2547
      %2594 = vmatpush.msra.mxu0 %v2545
      %2595 = vmatpush.msra.mxu0 %v2543
      %2596 = vmatpush.msra.mxu0 %v2541
      %2597 = vmatpush.msra.mxu0 %v2539
      %2598 = vmatpush.msra.mxu0 %v2537
      %2599 = vmatpush.msra.mxu0 %v2535
      %2600 = vmatpush.msra.mxu0 %v2533
      %2601 = vmatmul.f32.gmra.mxu0 %v2420
      %v2602 = vpop.f32.mrf.mxu0
      %v2603 = vadd.f32 0.0, %v2602
      %2604 = vmatmul.f32.gmra.mxu0 %v2419
      %v2605 = vpop.f32.mrf.mxu0
      %v2606 = vadd.f32 0.0, %v2605
      %2607 = vdwg.mxu0
      %2608 = vmatpush.msra.mxu0 0.0
      %2609 = vmatpush.msra.mxu0 0.0
      %2610 = vmatpush.msra.mxu0 0.0
      %2611 = vmatpush.msra.mxu0 0.0
      %2612 = vmatpush.msra.mxu0 0.0
      %2613 = vmatpush.msra.mxu0 0.0
      %2614 = vmatpush.msra.mxu0 0.0
      %2615 = vmatpush.msra.mxu0 0.0
      %2616 = vmatpush.msra.mxu0 0.0
      %2617 = vmatpush.msra.mxu0 %v2580
      %2618 = vmatpush.msra.mxu0 %v2575
      %2619 = vmatpush.msra.mxu0 %v2573
      %2620 = vmatpush.msra.mxu0 %v2571
      %2621 = vmatpush.msra.mxu0 %v2569
      %2622 = vmatpush.msra.mxu0 %v2567
      %2623 = vmatpush.msra.mxu0 %v2565
      %2624 = vmatmul.f32.gmra.mxu0 %v2426
      %v2625 = vpop.f32.mrf.mxu0
      %v2626 = vadd.f32 %v2603, %v2625
      %2627 = vmatmul.f32.gmra.mxu0 %v2428
      %v2628 = vpop.f32.mrf.mxu0
      %v2629 = vadd.f32 %v2606, %v2628
      %2630 = vdwg.mxu0
      %2631 = vmatpush.msra.mxu0 %v2564
      %2632 = vmatpush.msra.mxu0 %v2562
      %2633 = vmatpush.msra.mxu0 %v2560
      %2634 = vmatpush.msra.mxu0 %v2558
      %2635 = vmatpush.msra.mxu0 %v2556
      %2636 = vmatpush.msra.mxu0 %v2554
      %2637 = vmatpush.msra.mxu0 %v2552
      %2638 = vmatpush.msra.mxu0 %v2550
      %2639 = vmatpush.msra.mxu0 %v2548
      %2640 = vmatpush.msra.mxu0 %v2546
      %2641 = vmatpush.msra.mxu0 %v2544
      %2642 = vmatpush.msra.mxu0 %v2542
      %2643 = vmatpush.msra.mxu0 %v2540
      %2644 = vmatpush.msra.mxu0 %v2538
      %2645 = vmatpush.msra.mxu0 %v2536
      %2646 = vmatpush.msra.mxu0 %v2534
      %2647 = vmatmul.f32.gmra.mxu0 %v2420
      %v2648 = vpop.f32.mrf.mxu0
      %v2649 = vadd.f32 0.0, %v2648
      %2650 = vmatmul.f32.gmra.mxu0 %v2419
      %v2651 = vpop.f32.mrf.mxu0
      %v2652 = vadd.f32 0.0, %v2651
      %2653 = vdwg.mxu0
      %2654 = vmatpush.msra.mxu0 0.0
      %2655 = vmatpush.msra.mxu0 0.0
      %2656 = vmatpush.msra.mxu0 0.0
      %2657 = vmatpush.msra.mxu0 0.0
      %2658 = vmatpush.msra.mxu0 0.0
      %2659 = vmatpush.msra.mxu0 0.0
      %2660 = vmatpush.msra.mxu0 0.0
      %2661 = vmatpush.msra.mxu0 0.0
      %2662 = vmatpush.msra.mxu0 0.0
      %2663 = vmatpush.msra.mxu0 %v2583
      %2664 = vmatpush.msra.mxu0 %v2576
      %2665 = vmatpush.msra.mxu0 %v2574
      %2666 = vmatpush.msra.mxu0 %v2572
      %2667 = vmatpush.msra.mxu0 %v2570
      %2668 = vmatpush.msra.mxu0 %v2568
      %2669 = vmatpush.msra.mxu0 %v2566
      %2670 = vmatmul.f32.gmra.mxu0 %v2426
      %v2671 = vpop.f32.mrf.mxu0
      %v2672 = vadd.f32 %v2649, %v2671
      %2673 = vmatmul.f32.gmra.mxu0 %v2428
      %v2674 = vpop.f32.mrf.mxu0
      %v2675 = vadd.f32 %v2652, %v2674
      %2676 = vdwg.mxu0
      %v2677 = vadd.f32 %v2320, %v2626
      %v2678 = vadd.f32 %v2366, %v2672
      %v2679 = vadd.f32 %v2323, %v2629
      %v2680 = vadd.f32 %v2369, %v2675
      %s2681 = scalar_lea.vmem %s5, 1104
      %v2682 = vld [vmem:[%s2681] sm:$0xff]
      %v2683 = vld [vmem:[%s2681 + $0x8] sm:$0xff]
      %v2684 = vld [vmem:[%s2681 + $0x10] sm:$0xff]
      %v2685 = vld [vmem:[%s2681 + $0x18] sm:$0xff]
      %v2686 = vld [vmem:[%s2681 + $0x20] sm:$0xff]
      %v2687 = vld [vmem:[%s2681 + $0x28] sm:$0xff]
      %v2688 = vld [vmem:[%s2681 + $0x30] sm:$0xff]
      %v2689 = vld [vmem:[%s2681 + $0x38] sm:$0xff]
      %v2690 = vld [vmem:[%s2681 + $0x40] sm:$0xff]
      %v2691 = vld [vmem:[%s2681 + $0x48] sm:$0xff]
      %v2692 = vld [vmem:[%s2681 + $0x50] sm:$0xff]
      %v2693 = vld [vmem:[%s2681 + $0x58] sm:$0xff]
      %v2694 = vld [vmem:[%s2681 + $0x60] sm:$0xff]
      %v2695 = vld [vmem:[%s2681 + $0x68] sm:$0xff]
      %v2696 = vld [vmem:[%s2681 + $0x70] sm:$0xff]
      %v2697 = vld [vmem:[%s2681 + $0x78] sm:$0xff]
      %v2698 = vld [vmem:[%s2681 + $0x80] sm:$0xff]
      %v2699 = vld [vmem:[%s2681 + $0x88] sm:$0xff]
      %v2700 = vld [vmem:[%s2681 + $0x90] sm:$0xff]
      %v2701 = vld [vmem:[%s2681 + $0x98] sm:$0xff]
      %v2702 = vld [vmem:[%s2681 + $0xa0] sm:$0xff]
      %v2703 = vld [vmem:[%s2681 + $0xa8] sm:$0xff]
      %v2704 = vld [vmem:[%s2681 + $0xb0] sm:$0xff]
      %v2705 = vld [vmem:[%s2681 + $0xb8] sm:$0xff]
      %v2706 = vld [vmem:[%s2681 + $0xc0] sm:$0xff]
      %v2707 = vld [vmem:[%s2681 + $0xc8] sm:$0xff]
      %v2708 = vld [vmem:[%s2681 + $0xd0] sm:$0xff]
      %v2709 = vld [vmem:[%s2681 + $0xd8] sm:$0xff]
      %v2710 = vld [vmem:[%s2681 + $0xe0] sm:$0xff]
      %v2711 = vld [vmem:[%s2681 + $0xe8] sm:$0xff]
      %v2712 = vld [vmem:[%s2681 + $0xf0] sm:$0xff]
      %v2713 = vld [vmem:[%s2681 + $0xf8] sm:$0xff]
      %v2714 = vld [vmem:[%s2681 + $0x100] sm:$0xff]
      %v2715 = vld [vmem:[%s2681 + $0x108] sm:$0xff]
      %v2716 = vld [vmem:[%s2681 + $0x110] sm:$0xff]
      %v2717 = vld [vmem:[%s2681 + $0x118] sm:$0xff]
      %v2718 = vld [vmem:[%s2681 + $0x120] sm:$0xff]
      %v2719 = vld [vmem:[%s2681 + $0x128] sm:$0xff]
      %v2720 = vld [vmem:[%s2681 + $0x130] sm:$0xff]
      %v2721 = vld [vmem:[%s2681 + $0x138] sm:$0xff]
      %v2722 = vld [vmem:[%s2681 + $0x140] sm:$0xff]
      %v2723 = vld [vmem:[%s2681 + $0x148] sm:$0xff]
      %v2724 = vld [vmem:[%s2681 + $0x150] sm:$0xff]
      %v2725 = vld [vmem:[%s2681 + $0x158] sm:$0xff]
      %v2726 = vld [vmem:[%s2681 + $0x160] sm:$0xf]
      %v2727 = vld [vmem:[%s2681 + $0x168] sm:$0xf]
      %vm2728 = vcmask 1044480
      %v2729 = vrot.slane %v1763, 3
      %v2730 = vrot.slane %v1765, 3
      %v2731 = vsel %vm2728, %v2729, %v2730
      %v2732 = vrot.slane %v1764, 3
      %v2733 = vrot.slane %v1766, 3
      %v2734 = vsel %vm2728, %v2732, %v2733
      %v2737 = vsel %vm1768, %v2734, 0
      %v2739 = vsel %vm1768, %v2733, 0
      %v2742 = vsel %vm520, %v2726, 0
      %v2745 = vsel %vm520, %v2727, 0
      %2747 = vmatpush.msra.mxu0 %v2712
      %2748 = vmatpush.msra.mxu0 %v2710
      %2749 = vmatpush.msra.mxu0 %v2708
      %2750 = vmatpush.msra.mxu0 %v2706
      %2751 = vmatpush.msra.mxu0 %v2704
      %2752 = vmatpush.msra.mxu0 %v2702
      %2753 = vmatpush.msra.mxu0 %v2700
      %2754 = vmatpush.msra.mxu0 %v2698
      %2755 = vmatpush.msra.mxu0 %v2696
      %2756 = vmatpush.msra.mxu0 %v2694
      %2757 = vmatpush.msra.mxu0 %v2692
      %2758 = vmatpush.msra.mxu0 %v2690
      %2759 = vmatpush.msra.mxu0 %v2688
      %2760 = vmatpush.msra.mxu0 %v2686
      %2761 = vmatpush.msra.mxu0 %v2684
      %2762 = vmatpush.msra.mxu0 %v2682
      %2763 = vmatmul.f32.gmra.mxu0 %v2731
      %v2764 = vpop.f32.mrf.mxu0
      %v2765 = vadd.f32 0.0, %v2764
      %2766 = vmatmul.f32.gmra.mxu0 %v2730
      %v2767 = vpop.f32.mrf.mxu0
      %v2768 = vadd.f32 0.0, %v2767
      %2769 = vdwg.mxu0
      %2770 = vmatpush.msra.mxu0 0.0
      %2771 = vmatpush.msra.mxu0 0.0
      %2772 = vmatpush.msra.mxu0 0.0
      %2773 = vmatpush.msra.mxu0 0.0
      %2774 = vmatpush.msra.mxu0 0.0
      %2775 = vmatpush.msra.mxu0 0.0
      %2776 = vmatpush.msra.mxu0 0.0
      %2777 = vmatpush.msra.mxu0 0.0
      %2778 = vmatpush.msra.mxu0 0.0
      %2779 = vmatpush.msra.mxu0 %v2742
      %2780 = vmatpush.msra.mxu0 %v2724
      %2781 = vmatpush.msra.mxu0 %v2722
      %2782 = vmatpush.msra.mxu0 %v2720
      %2783 = vmatpush.msra.mxu0 %v2718
      %2784 = vmatpush.msra.mxu0 %v2716
      %2785 = vmatpush.msra.mxu0 %v2714
      %2786 = vmatmul.f32.gmra.mxu0 %v2737
      %v2787 = vpop.f32.mrf.mxu0
      %v2788 = vadd.f32 %v2765, %v2787
      %2789 = vmatmul.f32.gmra.mxu0 %v2739
      %v2790 = vpop.f32.mrf.mxu0
      %v2791 = vadd.f32 %v2768, %v2790
      %2792 = vdwg.mxu0
      %2793 = vmatpush.msra.mxu0 %v2713
      %2794 = vmatpush.msra.mxu0 %v2711
      %2795 = vmatpush.msra.mxu0 %v2709
      %2796 = vmatpush.msra.mxu0 %v2707
      %2797 = vmatpush.msra.mxu0 %v2705
      %2798 = vmatpush.msra.mxu0 %v2703
      %2799 = vmatpush.msra.mxu0 %v2701
      %2800 = vmatpush.msra.mxu0 %v2699
      %2801 = vmatpush.msra.mxu0 %v2697
      %2802 = vmatpush.msra.mxu0 %v2695
      %2803 = vmatpush.msra.mxu0 %v2693
      %2804 = vmatpush.msra.mxu0 %v2691
      %2805 = vmatpush.msra.mxu0 %v2689
      %2806 = vmatpush.msra.mxu0 %v2687
      %2807 = vmatpush.msra.mxu0 %v2685
      %2808 = vmatpush.msra.mxu0 %v2683
      %2809 = vmatmul.f32.gmra.mxu0 %v2731
      %v2810 = vpop.f32.mrf.mxu0
      %v2811 = vadd.f32 0.0, %v2810
      %2812 = vmatmul.f32.gmra.mxu0 %v2730
      %v2813 = vpop.f32.mrf.mxu0
      %v2814 = vadd.f32 0.0, %v2813
      %2815 = vdwg.mxu0
      %2816 = vmatpush.msra.mxu0 0.0
      %2817 = vmatpush.msra.mxu0 0.0
      %2818 = vmatpush.msra.mxu0 0.0
      %2819 = vmatpush.msra.mxu0 0.0
      %2820 = vmatpush.msra.mxu0 0.0
      %2821 = vmatpush.msra.mxu0 0.0
      %2822 = vmatpush.msra.mxu0 0.0
      %2823 = vmatpush.msra.mxu0 0.0
      %2824 = vmatpush.msra.mxu0 0.0
      %2825 = vmatpush.msra.mxu0 %v2745
      %2826 = vmatpush.msra.mxu0 %v2725
      %2827 = vmatpush.msra.mxu0 %v2723
      %2828 = vmatpush.msra.mxu0 %v2721
      %2829 = vmatpush.msra.mxu0 %v2719
      %2830 = vmatpush.msra.mxu0 %v2717
      %2831 = vmatpush.msra.mxu0 %v2715
      %2832 = vmatmul.f32.gmra.mxu0 %v2737
      %v2833 = vpop.f32.mrf.mxu0
      %v2834 = vadd.f32 %v2811, %v2833
      %2835 = vmatmul.f32.gmra.mxu0 %v2739
      %v2836 = vpop.f32.mrf.mxu0
      %v2837 = vadd.f32 %v2814, %v2836
      %2838 = vdwg.mxu0
      %v2839 = vadd.f32 %v2528, %v2788
      %v2840 = vadd.f32 %v2529, %v2834
      %v2841 = vadd.f32 %v2530, %v2791
      %v2842 = vadd.f32 %v2531, %v2837
      %s2843 = scalar_lea.vmem %s6, 1104
      %v2844 = vld [vmem:[%s2843] sm:$0xff]
      %v2845 = vld [vmem:[%s2843 + $0x8] sm:$0xff]
      %v2846 = vld [vmem:[%s2843 + $0x10] sm:$0xff]
      %v2847 = vld [vmem:[%s2843 + $0x18] sm:$0xff]
      %v2848 = vld [vmem:[%s2843 + $0x20] sm:$0xff]
      %v2849 = vld [vmem:[%s2843 + $0x28] sm:$0xff]
      %v2850 = vld [vmem:[%s2843 + $0x30] sm:$0xff]
      %v2851 = vld [vmem:[%s2843 + $0x38] sm:$0xff]
      %v2852 = vld [vmem:[%s2843 + $0x40] sm:$0xff]
      %v2853 = vld [vmem:[%s2843 + $0x48] sm:$0xff]
      %v2854 = vld [vmem:[%s2843 + $0x50] sm:$0xff]
      %v2855 = vld [vmem:[%s2843 + $0x58] sm:$0xff]
      %v2856 = vld [vmem:[%s2843 + $0x60] sm:$0xff]
      %v2857 = vld [vmem:[%s2843 + $0x68] sm:$0xff]
      %v2858 = vld [vmem:[%s2843 + $0x70] sm:$0xff]
      %v2859 = vld [vmem:[%s2843 + $0x78] sm:$0xff]
      %v2860 = vld [vmem:[%s2843 + $0x80] sm:$0xff]
      %v2861 = vld [vmem:[%s2843 + $0x88] sm:$0xff]
      %v2862 = vld [vmem:[%s2843 + $0x90] sm:$0xff]
      %v2863 = vld [vmem:[%s2843 + $0x98] sm:$0xff]
      %v2864 = vld [vmem:[%s2843 + $0xa0] sm:$0xff]
      %v2865 = vld [vmem:[%s2843 + $0xa8] sm:$0xff]
      %v2866 = vld [vmem:[%s2843 + $0xb0] sm:$0xff]
      %v2867 = vld [vmem:[%s2843 + $0xb8] sm:$0xff]
      %v2868 = vld [vmem:[%s2843 + $0xc0] sm:$0xff]
      %v2869 = vld [vmem:[%s2843 + $0xc8] sm:$0xff]
      %v2870 = vld [vmem:[%s2843 + $0xd0] sm:$0xff]
      %v2871 = vld [vmem:[%s2843 + $0xd8] sm:$0xff]
      %v2872 = vld [vmem:[%s2843 + $0xe0] sm:$0xff]
      %v2873 = vld [vmem:[%s2843 + $0xe8] sm:$0xff]
      %v2874 = vld [vmem:[%s2843 + $0xf0] sm:$0xff]
      %v2875 = vld [vmem:[%s2843 + $0xf8] sm:$0xff]
      %v2876 = vld [vmem:[%s2843 + $0x100] sm:$0xff]
      %v2877 = vld [vmem:[%s2843 + $0x108] sm:$0xff]
      %v2878 = vld [vmem:[%s2843 + $0x110] sm:$0xff]
      %v2879 = vld [vmem:[%s2843 + $0x118] sm:$0xff]
      %v2880 = vld [vmem:[%s2843 + $0x120] sm:$0xff]
      %v2881 = vld [vmem:[%s2843 + $0x128] sm:$0xff]
      %v2882 = vld [vmem:[%s2843 + $0x130] sm:$0xff]
      %v2883 = vld [vmem:[%s2843 + $0x138] sm:$0xff]
      %v2884 = vld [vmem:[%s2843 + $0x140] sm:$0xff]
      %v2885 = vld [vmem:[%s2843 + $0x148] sm:$0xff]
      %v2886 = vld [vmem:[%s2843 + $0x150] sm:$0xff]
      %v2887 = vld [vmem:[%s2843 + $0x158] sm:$0xff]
      %v2888 = vld [vmem:[%s2843 + $0x160] sm:$0xf]
      %v2889 = vld [vmem:[%s2843 + $0x168] sm:$0xf]
      %v2891 = vsel %vm520, %v2888, 0
      %v2894 = vsel %vm520, %v2889, 0
      %2896 = vmatpush.msra.mxu0 %v2874
      %2897 = vmatpush.msra.mxu0 %v2872
      %2898 = vmatpush.msra.mxu0 %v2870
      %2899 = vmatpush.msra.mxu0 %v2868
      %2900 = vmatpush.msra.mxu0 %v2866
      %2901 = vmatpush.msra.mxu0 %v2864
      %2902 = vmatpush.msra.mxu0 %v2862
      %2903 = vmatpush.msra.mxu0 %v2860
      %2904 = vmatpush.msra.mxu0 %v2858
      %2905 = vmatpush.msra.mxu0 %v2856
      %2906 = vmatpush.msra.mxu0 %v2854
      %2907 = vmatpush.msra.mxu0 %v2852
      %2908 = vmatpush.msra.mxu0 %v2850
      %2909 = vmatpush.msra.mxu0 %v2848
      %2910 = vmatpush.msra.mxu0 %v2846
      %2911 = vmatpush.msra.mxu0 %v2844
      %2912 = vmatmul.f32.gmra.mxu0 %v2731
      %v2913 = vpop.f32.mrf.mxu0
      %v2914 = vadd.f32 0.0, %v2913
      %2915 = vmatmul.f32.gmra.mxu0 %v2730
      %v2916 = vpop.f32.mrf.mxu0
      %v2917 = vadd.f32 0.0, %v2916
      %2918 = vdwg.mxu0
      %2919 = vmatpush.msra.mxu0 0.0
      %2920 = vmatpush.msra.mxu0 0.0
      %2921 = vmatpush.msra.mxu0 0.0
      %2922 = vmatpush.msra.mxu0 0.0
      %2923 = vmatpush.msra.mxu0 0.0
      %2924 = vmatpush.msra.mxu0 0.0
      %2925 = vmatpush.msra.mxu0 0.0
      %2926 = vmatpush.msra.mxu0 0.0
      %2927 = vmatpush.msra.mxu0 0.0
      %2928 = vmatpush.msra.mxu0 %v2891
      %2929 = vmatpush.msra.mxu0 %v2886
      %2930 = vmatpush.msra.mxu0 %v2884
      %2931 = vmatpush.msra.mxu0 %v2882
      %2932 = vmatpush.msra.mxu0 %v2880
      %2933 = vmatpush.msra.mxu0 %v2878
      %2934 = vmatpush.msra.mxu0 %v2876
      %2935 = vmatmul.f32.gmra.mxu0 %v2737
      %v2936 = vpop.f32.mrf.mxu0
      %v2937 = vadd.f32 %v2914, %v2936
      %2938 = vmatmul.f32.gmra.mxu0 %v2739
      %v2939 = vpop.f32.mrf.mxu0
      %v2940 = vadd.f32 %v2917, %v2939
      %2941 = vdwg.mxu0
      %2942 = vmatpush.msra.mxu0 %v2875
      %2943 = vmatpush.msra.mxu0 %v2873
      %2944 = vmatpush.msra.mxu0 %v2871
      %2945 = vmatpush.msra.mxu0 %v2869
      %2946 = vmatpush.msra.mxu0 %v2867
      %2947 = vmatpush.msra.mxu0 %v2865
      %2948 = vmatpush.msra.mxu0 %v2863
      %2949 = vmatpush.msra.mxu0 %v2861
      %2950 = vmatpush.msra.mxu0 %v2859
      %2951 = vmatpush.msra.mxu0 %v2857
      %2952 = vmatpush.msra.mxu0 %v2855
      %2953 = vmatpush.msra.mxu0 %v2853
      %2954 = vmatpush.msra.mxu0 %v2851
      %2955 = vmatpush.msra.mxu0 %v2849
      %2956 = vmatpush.msra.mxu0 %v2847
      %2957 = vmatpush.msra.mxu0 %v2845
      %2958 = vmatmul.f32.gmra.mxu0 %v2731
      %v2959 = vpop.f32.mrf.mxu0
      %v2960 = vadd.f32 0.0, %v2959
      %2961 = vmatmul.f32.gmra.mxu0 %v2730
      %v2962 = vpop.f32.mrf.mxu0
      %v2963 = vadd.f32 0.0, %v2962
      %2964 = vdwg.mxu0
      %2965 = vmatpush.msra.mxu0 0.0
      %2966 = vmatpush.msra.mxu0 0.0
      %2967 = vmatpush.msra.mxu0 0.0
      %2968 = vmatpush.msra.mxu0 0.0
      %2969 = vmatpush.msra.mxu0 0.0
      %2970 = vmatpush.msra.mxu0 0.0
      %2971 = vmatpush.msra.mxu0 0.0
      %2972 = vmatpush.msra.mxu0 0.0
      %2973 = vmatpush.msra.mxu0 0.0
      %2974 = vmatpush.msra.mxu0 %v2894
      %2975 = vmatpush.msra.mxu0 %v2887
      %2976 = vmatpush.msra.mxu0 %v2885
      %2977 = vmatpush.msra.mxu0 %v2883
      %2978 = vmatpush.msra.mxu0 %v2881
      %2979 = vmatpush.msra.mxu0 %v2879
      %2980 = vmatpush.msra.mxu0 %v2877
      %2981 = vmatmul.f32.gmra.mxu0 %v2737
      %v2982 = vpop.f32.mrf.mxu0
      %v2983 = vadd.f32 %v2960, %v2982
      %2984 = vmatmul.f32.gmra.mxu0 %v2739
      %v2985 = vpop.f32.mrf.mxu0
      %v2986 = vadd.f32 %v2963, %v2985
      %2987 = vdwg.mxu0
      %v2988 = vadd.f32 %v2677, %v2937
      %v2989 = vadd.f32 %v2678, %v2983
      %v2990 = vadd.f32 %v2679, %v2940
      %v2991 = vadd.f32 %v2680, %v2986
      %s2992 = scalar_lea.vmem %s5, 1472
      %v2993 = vld [vmem:[%s2992] sm:$0xff]
      %v2994 = vld [vmem:[%s2992 + $0x8] sm:$0xff]
      %v2995 = vld [vmem:[%s2992 + $0x10] sm:$0xff]
      %v2996 = vld [vmem:[%s2992 + $0x18] sm:$0xff]
      %v2997 = vld [vmem:[%s2992 + $0x20] sm:$0xff]
      %v2998 = vld [vmem:[%s2992 + $0x28] sm:$0xff]
      %v2999 = vld [vmem:[%s2992 + $0x30] sm:$0xff]
      %v3000 = vld [vmem:[%s2992 + $0x38] sm:$0xff]
      %v3001 = vld [vmem:[%s2992 + $0x40] sm:$0xff]
      %v3002 = vld [vmem:[%s2992 + $0x48] sm:$0xff]
      %v3003 = vld [vmem:[%s2992 + $0x50] sm:$0xff]
      %v3004 = vld [vmem:[%s2992 + $0x58] sm:$0xff]
      %v3005 = vld [vmem:[%s2992 + $0x60] sm:$0xff]
      %v3006 = vld [vmem:[%s2992 + $0x68] sm:$0xff]
      %v3007 = vld [vmem:[%s2992 + $0x70] sm:$0xff]
      %v3008 = vld [vmem:[%s2992 + $0x78] sm:$0xff]
      %v3009 = vld [vmem:[%s2992 + $0x80] sm:$0xff]
      %v3010 = vld [vmem:[%s2992 + $0x88] sm:$0xff]
      %v3011 = vld [vmem:[%s2992 + $0x90] sm:$0xff]
      %v3012 = vld [vmem:[%s2992 + $0x98] sm:$0xff]
      %v3013 = vld [vmem:[%s2992 + $0xa0] sm:$0xff]
      %v3014 = vld [vmem:[%s2992 + $0xa8] sm:$0xff]
      %v3015 = vld [vmem:[%s2992 + $0xb0] sm:$0xff]
      %v3016 = vld [vmem:[%s2992 + $0xb8] sm:$0xff]
      %v3017 = vld [vmem:[%s2992 + $0xc0] sm:$0xff]
      %v3018 = vld [vmem:[%s2992 + $0xc8] sm:$0xff]
      %v3019 = vld [vmem:[%s2992 + $0xd0] sm:$0xff]
      %v3020 = vld [vmem:[%s2992 + $0xd8] sm:$0xff]
      %v3021 = vld [vmem:[%s2992 + $0xe0] sm:$0xff]
      %v3022 = vld [vmem:[%s2992 + $0xe8] sm:$0xff]
      %v3023 = vld [vmem:[%s2992 + $0xf0] sm:$0xff]
      %v3024 = vld [vmem:[%s2992 + $0xf8] sm:$0xff]
      %v3025 = vld [vmem:[%s2992 + $0x100] sm:$0xff]
      %v3026 = vld [vmem:[%s2992 + $0x108] sm:$0xff]
      %v3027 = vld [vmem:[%s2992 + $0x110] sm:$0xff]
      %v3028 = vld [vmem:[%s2992 + $0x118] sm:$0xff]
      %v3029 = vld [vmem:[%s2992 + $0x120] sm:$0xff]
      %v3030 = vld [vmem:[%s2992 + $0x128] sm:$0xff]
      %v3031 = vld [vmem:[%s2992 + $0x130] sm:$0xff]
      %v3032 = vld [vmem:[%s2992 + $0x138] sm:$0xff]
      %v3033 = vld [vmem:[%s2992 + $0x140] sm:$0xff]
      %v3034 = vld [vmem:[%s2992 + $0x148] sm:$0xff]
      %v3035 = vld [vmem:[%s2992 + $0x150] sm:$0xff]
      %v3036 = vld [vmem:[%s2992 + $0x158] sm:$0xff]
      %v3037 = vld [vmem:[%s2992 + $0x160] sm:$0xf]
      %v3038 = vld [vmem:[%s2992 + $0x168] sm:$0xf]
      %v3039 = vrot.slane %v1763, 4
      %v3040 = vrot.slane %v1765, 4
      %v3041 = vsel %vm520, %v3039, %v3040
      %v3042 = vrot.slane %v1764, 4
      %v3043 = vrot.slane %v1766, 4
      %v3044 = vsel %vm520, %v3042, %v3043
      %v3047 = vsel %vm1768, %v3044, 0
      %v3049 = vsel %vm1768, %v3043, 0
      %v3052 = vsel %vm520, %v3037, 0
      %v3055 = vsel %vm520, %v3038, 0
      %3057 = vmatpush.msra.mxu0 %v3023
      %3058 = vmatpush.msra.mxu0 %v3021
      %3059 = vmatpush.msra.mxu0 %v3019
      %3060 = vmatpush.msra.mxu0 %v3017
      %3061 = vmatpush.msra.mxu0 %v3015
      %3062 = vmatpush.msra.mxu0 %v3013
      %3063 = vmatpush.msra.mxu0 %v3011
      %3064 = vmatpush.msra.mxu0 %v3009
      %3065 = vmatpush.msra.mxu0 %v3007
      %3066 = vmatpush.msra.mxu0 %v3005
      %3067 = vmatpush.msra.mxu0 %v3003
      %3068 = vmatpush.msra.mxu0 %v3001
      %3069 = vmatpush.msra.mxu0 %v2999
      %3070 = vmatpush.msra.mxu0 %v2997
      %3071 = vmatpush.msra.mxu0 %v2995
      %3072 = vmatpush.msra.mxu0 %v2993
      %3073 = vmatmul.f32.gmra.mxu0 %v3041
      %v3074 = vpop.f32.mrf.mxu0
      %v3075 = vadd.f32 0.0, %v3074
      %3076 = vmatmul.f32.gmra.mxu0 %v3040
      %v3077 = vpop.f32.mrf.mxu0
      %v3078 = vadd.f32 0.0, %v3077
      %3079 = vdwg.mxu0
      %3080 = vmatpush.msra.mxu0 0.0
      %3081 = vmatpush.msra.mxu0 0.0
      %3082 = vmatpush.msra.mxu0 0.0
      %3083 = vmatpush.msra.mxu0 0.0
      %3084 = vmatpush.msra.mxu0 0.0
      %3085 = vmatpush.msra.mxu0 0.0
      %3086 = vmatpush.msra.mxu0 0.0
      %3087 = vmatpush.msra.mxu0 0.0
      %3088 = vmatpush.msra.mxu0 0.0
      %3089 = vmatpush.msra.mxu0 %v3052
      %3090 = vmatpush.msra.mxu0 %v3035
      %3091 = vmatpush.msra.mxu0 %v3033
      %3092 = vmatpush.msra.mxu0 %v3031
      %3093 = vmatpush.msra.mxu0 %v3029
      %3094 = vmatpush.msra.mxu0 %v3027
      %3095 = vmatpush.msra.mxu0 %v3025
      %3096 = vmatmul.f32.gmra.mxu0 %v3047
      %v3097 = vpop.f32.mrf.mxu0
      %v3098 = vadd.f32 %v3075, %v3097
      %3099 = vmatmul.f32.gmra.mxu0 %v3049
      %v3100 = vpop.f32.mrf.mxu0
      %v3101 = vadd.f32 %v3078, %v3100
      %3102 = vdwg.mxu0
      %3103 = vmatpush.msra.mxu0 %v3024
      %3104 = vmatpush.msra.mxu0 %v3022
      %3105 = vmatpush.msra.mxu0 %v3020
      %3106 = vmatpush.msra.mxu0 %v3018
      %3107 = vmatpush.msra.mxu0 %v3016
      %3108 = vmatpush.msra.mxu0 %v3014
      %3109 = vmatpush.msra.mxu0 %v3012
      %3110 = vmatpush.msra.mxu0 %v3010
      %3111 = vmatpush.msra.mxu0 %v3008
      %3112 = vmatpush.msra.mxu0 %v3006
      %3113 = vmatpush.msra.mxu0 %v3004
      %3114 = vmatpush.msra.mxu0 %v3002
      %3115 = vmatpush.msra.mxu0 %v3000
      %3116 = vmatpush.msra.mxu0 %v2998
      %3117 = vmatpush.msra.mxu0 %v2996
      %3118 = vmatpush.msra.mxu0 %v2994
      %3119 = vmatmul.f32.gmra.mxu0 %v3041
      %v3120 = vpop.f32.mrf.mxu0
      %v3121 = vadd.f32 0.0, %v3120
      %3122 = vmatmul.f32.gmra.mxu0 %v3040
      %v3123 = vpop.f32.mrf.mxu0
      %v3124 = vadd.f32 0.0, %v3123
      %3125 = vdwg.mxu0
      %3126 = vmatpush.msra.mxu0 0.0
      %3127 = vmatpush.msra.mxu0 0.0
      %3128 = vmatpush.msra.mxu0 0.0
      %3129 = vmatpush.msra.mxu0 0.0
      %3130 = vmatpush.msra.mxu0 0.0
      %3131 = vmatpush.msra.mxu0 0.0
      %3132 = vmatpush.msra.mxu0 0.0
      %3133 = vmatpush.msra.mxu0 0.0
      %3134 = vmatpush.msra.mxu0 0.0
      %3135 = vmatpush.msra.mxu0 %v3055
      %3136 = vmatpush.msra.mxu0 %v3036
      %3137 = vmatpush.msra.mxu0 %v3034
      %3138 = vmatpush.msra.mxu0 %v3032
      %3139 = vmatpush.msra.mxu0 %v3030
      %3140 = vmatpush.msra.mxu0 %v3028
      %3141 = vmatpush.msra.mxu0 %v3026
      %3142 = vmatmul.f32.gmra.mxu0 %v3047
      %v3143 = vpop.f32.mrf.mxu0
      %v3144 = vadd.f32 %v3121, %v3143
      %3145 = vmatmul.f32.gmra.mxu0 %v3049
      %v3146 = vpop.f32.mrf.mxu0
      %v3147 = vadd.f32 %v3124, %v3146
      %3148 = vdwg.mxu0
      %v3149 = vadd.f32 %v2839, %v3098
      %v3150 = vadd.f32 %v2840, %v3144
      %v3151 = vadd.f32 %v2841, %v3101
      %v3152 = vadd.f32 %v2842, %v3147
      %s3153 = scalar_lea.vmem %s6, 1472
      %v3154 = vld [vmem:[%s3153] sm:$0xff]
      %v3155 = vld [vmem:[%s3153 + $0x8] sm:$0xff]
      %v3156 = vld [vmem:[%s3153 + $0x10] sm:$0xff]
      %v3157 = vld [vmem:[%s3153 + $0x18] sm:$0xff]
      %v3158 = vld [vmem:[%s3153 + $0x20] sm:$0xff]
      %v3159 = vld [vmem:[%s3153 + $0x28] sm:$0xff]
      %v3160 = vld [vmem:[%s3153 + $0x30] sm:$0xff]
      %v3161 = vld [vmem:[%s3153 + $0x38] sm:$0xff]
      %v3162 = vld [vmem:[%s3153 + $0x40] sm:$0xff]
      %v3163 = vld [vmem:[%s3153 + $0x48] sm:$0xff]
      %v3164 = vld [vmem:[%s3153 + $0x50] sm:$0xff]
      %v3165 = vld [vmem:[%s3153 + $0x58] sm:$0xff]
      %v3166 = vld [vmem:[%s3153 + $0x60] sm:$0xff]
      %v3167 = vld [vmem:[%s3153 + $0x68] sm:$0xff]
      %v3168 = vld [vmem:[%s3153 + $0x70] sm:$0xff]
      %v3169 = vld [vmem:[%s3153 + $0x78] sm:$0xff]
      %v3170 = vld [vmem:[%s3153 + $0x80] sm:$0xff]
      %v3171 = vld [vmem:[%s3153 + $0x88] sm:$0xff]
      %v3172 = vld [vmem:[%s3153 + $0x90] sm:$0xff]
      %v3173 = vld [vmem:[%s3153 + $0x98] sm:$0xff]
      %v3174 = vld [vmem:[%s3153 + $0xa0] sm:$0xff]
      %v3175 = vld [vmem:[%s3153 + $0xa8] sm:$0xff]
      %v3176 = vld [vmem:[%s3153 + $0xb0] sm:$0xff]
      %v3177 = vld [vmem:[%s3153 + $0xb8] sm:$0xff]
      %v3178 = vld [vmem:[%s3153 + $0xc0] sm:$0xff]
      %v3179 = vld [vmem:[%s3153 + $0xc8] sm:$0xff]
      %v3180 = vld [vmem:[%s3153 + $0xd0] sm:$0xff]
      %v3181 = vld [vmem:[%s3153 + $0xd8] sm:$0xff]
      %v3182 = vld [vmem:[%s3153 + $0xe0] sm:$0xff]
      %v3183 = vld [vmem:[%s3153 + $0xe8] sm:$0xff]
      %v3184 = vld [vmem:[%s3153 + $0xf0] sm:$0xff]
      %v3185 = vld [vmem:[%s3153 + $0xf8] sm:$0xff]
      %v3186 = vld [vmem:[%s3153 + $0x100] sm:$0xff]
      %v3187 = vld [vmem:[%s3153 + $0x108] sm:$0xff]
      %v3188 = vld [vmem:[%s3153 + $0x110] sm:$0xff]
      %v3189 = vld [vmem:[%s3153 + $0x118] sm:$0xff]
      %v3190 = vld [vmem:[%s3153 + $0x120] sm:$0xff]
      %v3191 = vld [vmem:[%s3153 + $0x128] sm:$0xff]
      %v3192 = vld [vmem:[%s3153 + $0x130] sm:$0xff]
      %v3193 = vld [vmem:[%s3153 + $0x138] sm:$0xff]
      %v3194 = vld [vmem:[%s3153 + $0x140] sm:$0xff]
      %v3195 = vld [vmem:[%s3153 + $0x148] sm:$0xff]
      %v3196 = vld [vmem:[%s3153 + $0x150] sm:$0xff]
      %v3197 = vld [vmem:[%s3153 + $0x158] sm:$0xff]
      %v3198 = vld [vmem:[%s3153 + $0x160] sm:$0xf]
      %v3199 = vld [vmem:[%s3153 + $0x168] sm:$0xf]
      %v3201 = vsel %vm520, %v3198, 0
      %v3204 = vsel %vm520, %v3199, 0
      %3206 = vmatpush.msra.mxu0 %v3184
      %3207 = vmatpush.msra.mxu0 %v3182
      %3208 = vmatpush.msra.mxu0 %v3180
      %3209 = vmatpush.msra.mxu0 %v3178
      %3210 = vmatpush.msra.mxu0 %v3176
      %3211 = vmatpush.msra.mxu0 %v3174
      %3212 = vmatpush.msra.mxu0 %v3172
      %3213 = vmatpush.msra.mxu0 %v3170
      %3214 = vmatpush.msra.mxu0 %v3168
      %3215 = vmatpush.msra.mxu0 %v3166
      %3216 = vmatpush.msra.mxu0 %v3164
      %3217 = vmatpush.msra.mxu0 %v3162
      %3218 = vmatpush.msra.mxu0 %v3160
      %3219 = vmatpush.msra.mxu0 %v3158
      %3220 = vmatpush.msra.mxu0 %v3156
      %3221 = vmatpush.msra.mxu0 %v3154
      %3222 = vmatmul.f32.gmra.mxu0 %v3041
      %v3223 = vpop.f32.mrf.mxu0
      %v3224 = vadd.f32 0.0, %v3223
      %3225 = vmatmul.f32.gmra.mxu0 %v3040
      %v3226 = vpop.f32.mrf.mxu0
      %v3227 = vadd.f32 0.0, %v3226
      %3228 = vdwg.mxu0
      %3229 = vmatpush.msra.mxu0 0.0
      %3230 = vmatpush.msra.mxu0 0.0
      %3231 = vmatpush.msra.mxu0 0.0
      %3232 = vmatpush.msra.mxu0 0.0
      %3233 = vmatpush.msra.mxu0 0.0
      %3234 = vmatpush.msra.mxu0 0.0
      %3235 = vmatpush.msra.mxu0 0.0
      %3236 = vmatpush.msra.mxu0 0.0
      %3237 = vmatpush.msra.mxu0 0.0
      %3238 = vmatpush.msra.mxu0 %v3201
      %3239 = vmatpush.msra.mxu0 %v3196
      %3240 = vmatpush.msra.mxu0 %v3194
      %3241 = vmatpush.msra.mxu0 %v3192
      %3242 = vmatpush.msra.mxu0 %v3190
      %3243 = vmatpush.msra.mxu0 %v3188
      %3244 = vmatpush.msra.mxu0 %v3186
      %3245 = vmatmul.f32.gmra.mxu0 %v3047
      %v3246 = vpop.f32.mrf.mxu0
      %v3247 = vadd.f32 %v3224, %v3246
      %3248 = vmatmul.f32.gmra.mxu0 %v3049
      %v3249 = vpop.f32.mrf.mxu0
      %v3250 = vadd.f32 %v3227, %v3249
      %3251 = vdwg.mxu0
      %3252 = vmatpush.msra.mxu0 %v3185
      %3253 = vmatpush.msra.mxu0 %v3183
      %3254 = vmatpush.msra.mxu0 %v3181
      %3255 = vmatpush.msra.mxu0 %v3179
      %3256 = vmatpush.msra.mxu0 %v3177
      %3257 = vmatpush.msra.mxu0 %v3175
      %3258 = vmatpush.msra.mxu0 %v3173
      %3259 = vmatpush.msra.mxu0 %v3171
      %3260 = vmatpush.msra.mxu0 %v3169
      %3261 = vmatpush.msra.mxu0 %v3167
      %3262 = vmatpush.msra.mxu0 %v3165
      %3263 = vmatpush.msra.mxu0 %v3163
      %3264 = vmatpush.msra.mxu0 %v3161
      %3265 = vmatpush.msra.mxu0 %v3159
      %3266 = vmatpush.msra.mxu0 %v3157
      %3267 = vmatpush.msra.mxu0 %v3155
      %3268 = vmatmul.f32.gmra.mxu0 %v3041
      %v3269 = vpop.f32.mrf.mxu0
      %v3270 = vadd.f32 0.0, %v3269
      %3271 = vmatmul.f32.gmra.mxu0 %v3040
      %v3272 = vpop.f32.mrf.mxu0
      %v3273 = vadd.f32 0.0, %v3272
      %3274 = vdwg.mxu0
      %3275 = vmatpush.msra.mxu0 0.0
      %3276 = vmatpush.msra.mxu0 0.0
      %3277 = vmatpush.msra.mxu0 0.0
      %3278 = vmatpush.msra.mxu0 0.0
      %3279 = vmatpush.msra.mxu0 0.0
      %3280 = vmatpush.msra.mxu0 0.0
      %3281 = vmatpush.msra.mxu0 0.0
      %3282 = vmatpush.msra.mxu0 0.0
      %3283 = vmatpush.msra.mxu0 0.0
      %3284 = vmatpush.msra.mxu0 %v3204
      %3285 = vmatpush.msra.mxu0 %v3197
      %3286 = vmatpush.msra.mxu0 %v3195
      %3287 = vmatpush.msra.mxu0 %v3193
      %3288 = vmatpush.msra.mxu0 %v3191
      %3289 = vmatpush.msra.mxu0 %v3189
      %3290 = vmatpush.msra.mxu0 %v3187
      %3291 = vmatmul.f32.gmra.mxu0 %v3047
      %v3292 = vpop.f32.mrf.mxu0
      %v3293 = vadd.f32 %v3270, %v3292
      %3294 = vmatmul.f32.gmra.mxu0 %v3049
      %v3295 = vpop.f32.mrf.mxu0
      %v3296 = vadd.f32 %v3273, %v3295
      %3297 = vdwg.mxu0
      %v3298 = vadd.f32 %v2988, %v3247
      %v3299 = vadd.f32 %v2989, %v3293
      %v3300 = vadd.f32 %v2990, %v3250
      %v3301 = vadd.f32 %v2991, %v3296
      %v3302 = vmax.f32 %v3149, %v3298
      %v3303 = vmax.f32 %v3150, %v3299
      %v3304 = vmax.f32 %v3151, %v3300
      %v3305 = vmax.f32 %v3152, %v3301
      %v3306 = vld [vmem:[%s9] sm:$0x1]
      %v3309 = vrot.slane %v3302, 1
      %v3310 = vrot.slane %v3303, 1
      %v3313 = vmax.f32 %v3302, %v3309
      %v3314 = vmax.f32 %v3303, %v3310
      %v3315 = vld [vmem:[%s7] sm:$0x3]
      %v3317 = vperm.slane %v3315, 0
      %v3318 = vperm.slane %v3315, 1
      %v3321 = vadd.f32 %v3313, %v3317
      %v3322 = vadd.f32 %v3314, %v3318
      %v3323 = vld [vmem:[#allocation3] ss:$8 sm:$0x3]
      %vm3324 = vcmp.gt.f32.partialorder %v3323, 1.0
      %v3325 = vsel %vm3324, 1, 0
      %v3326 = vcvt.s32.f32 %v3325
      %v3327 = vmul.f32 %v3323, 0.9
      %v3330 = vrot.slane %v3322, 7
      %vm3331 = vcmask 1040384
      %v3332 = vsel %vm3331, %v3321, %v3330
      %v3334 = vadd.f32 %v3327, %v3332
      %v3335 = vsub.f32 %v3334, %v3326
      %vm3336 = vcmp.gt.f32.partialorder %v3335, 1.0
      %v3337 = vsel %vm3336, 1, 0
      %v3338 = vcvt.s32.f32 %v3337
      %v3339 = vlaneseq
      %vm3340 = vcmp.ge.s32.totalorder %v3339, 0
      %vm3341 = vcmp.lt.s32.totalorder %v3339, 160
      %vm3342 = vmand %vm3340, %vm3341
      %3343 = vst.msk [vmem:[#allocation3] ss:$8 sm:$0x3] %vm3342, %v3335
      %3344 = vst.msk [vmem:[#allocation3] ss:$8 sm:$0x0] %vm3342, %v3335
      %v3345 = vld [vmem:[%s8] sm:$0xff]
      %v3346 = vld [vmem:[%s8 + $0x8] sm:$0xff]
      %v3347 = vld [vmem:[%s8 + $0x10] sm:$0xff]
      %v3348 = vld [vmem:[%s8 + $0x18] sm:$0xff]
      %v3349 = vld [vmem:[%s8 + $0x20] sm:$0xff]
      %v3350 = vld [vmem:[%s8 + $0x28] sm:$0xff]
      %v3351 = vld [vmem:[%s8 + $0x30] sm:$0xff]
      %v3352 = vld [vmem:[%s8 + $0x38] sm:$0xff]
      %v3353 = vld [vmem:[%s8 + $0x40] sm:$0xff]
      %v3354 = vld [vmem:[%s8 + $0x48] sm:$0xff]
      %v3355 = vld [vmem:[%s8 + $0x50] sm:$0xff]
      %v3356 = vld [vmem:[%s8 + $0x58] sm:$0xff]
      %v3357 = vld [vmem:[%s8 + $0x60] sm:$0xff]
      %v3358 = vld [vmem:[%s8 + $0x68] sm:$0xff]
      %v3359 = vld [vmem:[%s8 + $0x70] sm:$0xff]
      %v3360 = vld [vmem:[%s8 + $0x78] sm:$0xff]
      %v3361 = vld [vmem:[%s8 + $0x80] sm:$0xff]
      %v3362 = vld [vmem:[%s8 + $0x88] sm:$0xff]
      %v3363 = vld [vmem:[%s8 + $0x90] sm:$0xff]
      %v3364 = vld [vmem:[%s8 + $0x98] sm:$0xff]
      %v3366 = vperm.slane %v3338, 0
      %v3367 = vperm.slane %v3338, 1
      %vm3369 = vcmask 261120
      %v3370 = vsel %vm3369, %v3367, 0
      %3372 = vmatpush.msra.mxu0 %v3360
      %3373 = vmatpush.msra.mxu0 %v3359
      %3374 = vmatpush.msra.mxu0 %v3358
      %3375 = vmatpush.msra.mxu0 %v3357
      %3376 = vmatpush.msra.mxu0 %v3356
      %3377 = vmatpush.msra.mxu0 %v3355
      %3378 = vmatpush.msra.mxu0 %v3354
      %3379 = vmatpush.msra.mxu0 %v3353
      %3380 = vmatpush.msra.mxu0 %v3352
      %3381 = vmatpush.msra.mxu0 %v3351
      %3382 = vmatpush.msra.mxu0 %v3350
      %3383 = vmatpush.msra.mxu0 %v3349
      %3384 = vmatpush.msra.mxu0 %v3348
      %3385 = vmatpush.msra.mxu0 %v3347
      %3386 = vmatpush.msra.mxu0 %v3346
      %3387 = vmatpush.msra.mxu0 %v3345
      %3388 = vmatmul.f32.gmra.mxu0 %v3366
      %v3389 = vpop.f32.mrf.mxu0
      %v3390 = vadd.f32 0.0, %v3389
      %3391 = vdwg.mxu0
      %3392 = vmatpush.msra.mxu0 0.0
      %3393 = vmatpush.msra.mxu0 0.0
      %3394 = vmatpush.msra.mxu0 0.0
      %3395 = vmatpush.msra.mxu0 0.0
      %3396 = vmatpush.msra.mxu0 0.0
      %3397 = vmatpush.msra.mxu0 0.0
      %3398 = vmatpush.msra.mxu0 0.0
      %3399 = vmatpush.msra.mxu0 0.0
      %3400 = vmatpush.msra.mxu0 0.0
      %3401 = vmatpush.msra.mxu0 0.0
      %3402 = vmatpush.msra.mxu0 0.0
      %3403 = vmatpush.msra.mxu0 0.0
      %3404 = vmatpush.msra.mxu0 %v3364
      %3405 = vmatpush.msra.mxu0 %v3363
      %3406 = vmatpush.msra.mxu0 %v3362
      %3407 = vmatpush.msra.mxu0 %v3361
      %3408 = vmatmul.f32.gmra.mxu0 %v3370
      %v3409 = vpop.f32.mrf.mxu0
      %v3410 = vadd.f32 %v3390, %v3409
      %3411 = vdwg.mxu0
      %v3412 = vadd.f32 %v3306, %v3410
      %v3413 = vld [vmem:[%s7] sm:$0x3]
      %v3415 = vperm.slane %v3413, 0
      %v3416 = vperm.slane %v3413, 1
      %v3419 = vadd.f32 %v3313, %v3415
      %v3420 = vadd.f32 %v3314, %v3416
      %s3421 = scalar_lea.vmem [#allocation3], 1
      %v3422 = vld [vmem:[%s3421] ss:$8 sm:$0x3]
      %vm3423 = vcmp.gt.f32.partialorder %v3422, 1.0
      %v3424 = vsel %vm3423, 1, 0
      %v3425 = vcvt.s32.f32 %v3424
      %v3426 = vmul.f32 %v3422, 0.9
      %3429 = vst [vmem:[#allocation1] sm:$0xff] %v3419
      %3430 = vst [vmem:[#allocation1 + $0x9] sm:$0xff] %v3420
      %s3431 = scalar_lea.vmem [#allocation1], 2
      %v3432 = vld [vmem:[%s3431] ss:$9 sm:$0xff]
      %v3434 = vadd.f32 %v3426, %v3432
      %v3435 = vsub.f32 %v3434, %v3425
      %vm3436 = vcmp.gt.f32.partialorder %v3435, 1.0
      %v3437 = vsel %vm3436, 1, 0
      %v3438 = vcvt.s32.f32 %v3437
      %3439 = vst.msk [vmem:[%s3421] ss:$8 sm:$0x3] %vm3342, %v3435
      %3440 = vst.msk [vmem:[%s3421] ss:$8 sm:$0x0] %vm3342, %v3435
      %s3441 = scalar_lea.vmem %s8, 160
      %v3442 = vld [vmem:[%s3441] sm:$0xff]
      %v3443 = vld [vmem:[%s3441 + $0x8] sm:$0xff]
      %v3444 = vld [vmem:[%s3441 + $0x10] sm:$0xff]
      %v3445 = vld [vmem:[%s3441 + $0x18] sm:$0xff]
      %v3446 = vld [vmem:[%s3441 + $0x20] sm:$0xff]
      %v3447 = vld [vmem:[%s3441 + $0x28] sm:$0xff]
      %v3448 = vld [vmem:[%s3441 + $0x30] sm:$0xff]
      %v3449 = vld [vmem:[%s3441 + $0x38] sm:$0xff]
      %v3450 = vld [vmem:[%s3441 + $0x40] sm:$0xff]
      %v3451 = vld [vmem:[%s3441 + $0x48] sm:$0xff]
      %v3452 = vld [vmem:[%s3441 + $0x50] sm:$0xff]
      %v3453 = vld [vmem:[%s3441 + $0x58] sm:$0xff]
      %v3454 = vld [vmem:[%s3441 + $0x60] sm:$0xff]
      %v3455 = vld [vmem:[%s3441 + $0x68] sm:$0xff]
      %v3456 = vld [vmem:[%s3441 + $0x70] sm:$0xff]
      %v3457 = vld [vmem:[%s3441 + $0x78] sm:$0xff]
      %v3458 = vld [vmem:[%s3441 + $0x80] sm:$0xff]
      %v3459 = vld [vmem:[%s3441 + $0x88] sm:$0xff]
      %v3460 = vld [vmem:[%s3441 + $0x90] sm:$0xff]
      %v3461 = vld [vmem:[%s3441 + $0x98] sm:$0xff]
      %v3463 = vperm.slane %v3438, 0
      %v3464 = vperm.slane %v3438, 1
      %v3466 = vsel %vm3369, %v3464, 0
      %3468 = vmatpush.msra.mxu0 %v3457
      %3469 = vmatpush.msra.mxu0 %v3456
      %3470 = vmatpush.msra.mxu0 %v3455
      %3471 = vmatpush.msra.mxu0 %v3454
      %3472 = vmatpush.msra.mxu0 %v3453
      %3473 = vmatpush.msra.mxu0 %v3452
      %3474 = vmatpush.msra.mxu0 %v3451
      %3475 = vmatpush.msra.mxu0 %v3450
      %3476 = vmatpush.msra.mxu0 %v3449
      %3477 = vmatpush.msra.mxu0 %v3448
      %3478 = vmatpush.msra.mxu0 %v3447
      %3479 = vmatpush.msra.mxu0 %v3446
      %3480 = vmatpush.msra.mxu0 %v3445
      %3481 = vmatpush.msra.mxu0 %v3444
      %3482 = vmatpush.msra.mxu0 %v3443
      %3483 = vmatpush.msra.mxu0 %v3442
      %3484 = vmatmul.f32.gmra.mxu0 %v3463
      %v3485 = vpop.f32.mrf.mxu0
      %v3486 = vadd.f32 0.0, %v3485
      %3487 = vdwg.mxu0
      %3488 = vmatpush.msra.mxu0 0.0
      %3489 = vmatpush.msra.mxu0 0.0
      %3490 = vmatpush.msra.mxu0 0.0
      %3491 = vmatpush.msra.mxu0 0.0
      %3492 = vmatpush.msra.mxu0 0.0
      %3493 = vmatpush.msra.mxu0 0.0
      %3494 = vmatpush.msra.mxu0 0.0
      %3495 = vmatpush.msra.mxu0 0.0
      %3496 = vmatpush.msra.mxu0 0.0
      %3497 = vmatpush.msra.mxu0 0.0
      %3498 = vmatpush.msra.mxu0 0.0
      %3499 = vmatpush.msra.mxu0 0.0
      %3500 = vmatpush.msra.mxu0 %v3461
      %3501 = vmatpush.msra.mxu0 %v3460
      %3502 = vmatpush.msra.mxu0 %v3459
      %3503 = vmatpush.msra.mxu0 %v3458
      %3504 = vmatmul.f32.gmra.mxu0 %v3466
      %v3505 = vpop.f32.mrf.mxu0
      %v3506 = vadd.f32 %v3486, %v3505
      %3507 = vdwg.mxu0
      %v3508 = vadd.f32 %v3412, %v3506
      %v3509 = vld [vmem:[%s7] sm:$0x3]
      %v3511 = vperm.slane %v3509, 0
      %v3512 = vperm.slane %v3509, 1
      %v3515 = vadd.f32 %v3313, %v3511
      %v3516 = vadd.f32 %v3314, %v3512
      %s3517 = scalar_lea.vmem [#allocation3], 2
      %v3518 = vld [vmem:[%s3517] ss:$8 sm:$0x3]
      %vm3519 = vcmp.gt.f32.partialorder %v3518, 1.0
      %v3520 = vsel %vm3519, 1, 0
      %v3521 = vcvt.s32.f32 %v3520
      %v3522 = vmul.f32 %v3518, 0.9
      %3525 = vst [vmem:[#allocation1] sm:$0xff] %v3515
      %3526 = vst [vmem:[#allocation1 + $0x9] sm:$0xff] %v3516
      %s3527 = scalar_lea.vmem [#allocation1], 4
      %v3528 = vld [vmem:[%s3527] ss:$9 sm:$0xff]
      %v3530 = vadd.f32 %v3522, %v3528
      %v3531 = vsub.f32 %v3530, %v3521
      %vm3532 = vcmp.gt.f32.partialorder %v3531, 1.0
      %v3533 = vsel %vm3532, 1, 0
      %v3534 = vcvt.s32.f32 %v3533
      %3535 = vst.msk [vmem:[%s3517] ss:$8 sm:$0x3] %vm3342, %v3531
      %3536 = vst.msk [vmem:[%s3517] ss:$8 sm:$0x0] %vm3342, %v3531
      %s3537 = scalar_lea.vmem %s8, 320
      %v3538 = vld [vmem:[%s3537] sm:$0xff]
      %v3539 = vld [vmem:[%s3537 + $0x8] sm:$0xff]
      %v3540 = vld [vmem:[%s3537 + $0x10] sm:$0xff]
      %v3541 = vld [vmem:[%s3537 + $0x18] sm:$0xff]
      %v3542 = vld [vmem:[%s3537 + $0x20] sm:$0xff]
      %v3543 = vld [vmem:[%s3537 + $0x28] sm:$0xff]
      %v3544 = vld [vmem:[%s3537 + $0x30] sm:$0xff]
      %v3545 = vld [vmem:[%s3537 + $0x38] sm:$0xff]
      %v3546 = vld [vmem:[%s3537 + $0x40] sm:$0xff]
      %v3547 = vld [vmem:[%s3537 + $0x48] sm:$0xff]
      %v3548 = vld [vmem:[%s3537 + $0x50] sm:$0xff]
      %v3549 = vld [vmem:[%s3537 + $0x58] sm:$0xff]
      %v3550 = vld [vmem:[%s3537 + $0x60] sm:$0xff]
      %v3551 = vld [vmem:[%s3537 + $0x68] sm:$0xff]
      %v3552 = vld [vmem:[%s3537 + $0x70] sm:$0xff]
      %v3553 = vld [vmem:[%s3537 + $0x78] sm:$0xff]
      %v3554 = vld [vmem:[%s3537 + $0x80] sm:$0xff]
      %v3555 = vld [vmem:[%s3537 + $0x88] sm:$0xff]
      %v3556 = vld [vmem:[%s3537 + $0x90] sm:$0xff]
      %v3557 = vld [vmem:[%s3537 + $0x98] sm:$0xff]
      %v3559 = vperm.slane %v3534, 0
      %v3560 = vperm.slane %v3534, 1
      %v3562 = vsel %vm3369, %v3560, 0
      %3564 = vmatpush.msra.mxu0 %v3553
      %3565 = vmatpush.msra.mxu0 %v3552
      %3566 = vmatpush.msra.mxu0 %v3551
      %3567 = vmatpush.msra.mxu0 %v3550
      %3568 = vmatpush.msra.mxu0 %v3549
      %3569 = vmatpush.msra.mxu0 %v3548
      %3570 = vmatpush.msra.mxu0 %v3547
      %3571 = vmatpush.msra.mxu0 %v3546
      %3572 = vmatpush.msra.mxu0 %v3545
      %3573 = vmatpush.msra.mxu0 %v3544
      %3574 = vmatpush.msra.mxu0 %v3543
      %3575 = vmatpush.msra.mxu0 %v3542
      %3576 = vmatpush.msra.mxu0 %v3541
      %3577 = vmatpush.msra.mxu0 %v3540
      %3578 = vmatpush.msra.mxu0 %v3539
      %3579 = vmatpush.msra.mxu0 %v3538
      %3580 = vmatmul.f32.gmra.mxu0 %v3559
      %v3581 = vpop.f32.mrf.mxu0
      %v3582 = vadd.f32 0.0, %v3581
      %3583 = vdwg.mxu0
      %3584 = vmatpush.msra.mxu0 0.0
      %3585 = vmatpush.msra.mxu0 0.0
      %3586 = vmatpush.msra.mxu0 0.0
      %3587 = vmatpush.msra.mxu0 0.0
      %3588 = vmatpush.msra.mxu0 0.0
      %3589 = vmatpush.msra.mxu0 0.0
      %3590 = vmatpush.msra.mxu0 0.0
      %3591 = vmatpush.msra.mxu0 0.0
      %3592 = vmatpush.msra.mxu0 0.0
      %3593 = vmatpush.msra.mxu0 0.0
      %3594 = vmatpush.msra.mxu0 0.0
      %3595 = vmatpush.msra.mxu0 0.0
      %3596 = vmatpush.msra.mxu0 %v3557
      %3597 = vmatpush.msra.mxu0 %v3556
      %3598 = vmatpush.msra.mxu0 %v3555
      %3599 = vmatpush.msra.mxu0 %v3554
      %3600 = vmatmul.f32.gmra.mxu0 %v3562
      %v3601 = vpop.f32.mrf.mxu0
      %v3602 = vadd.f32 %v3582, %v3601
      %3603 = vdwg.mxu0
      %v3604 = vadd.f32 %v3508, %v3602
      %v3605 = vld [vmem:[%s7] sm:$0x3]
      %v3607 = vperm.slane %v3605, 0
      %v3608 = vperm.slane %v3605, 1
      %v3611 = vadd.f32 %v3313, %v3607
      %v3612 = vadd.f32 %v3314, %v3608
      %s3613 = scalar_lea.vmem [#allocation3], 3
      %v3614 = vld [vmem:[%s3613] ss:$8 sm:$0x3]
      %vm3615 = vcmp.gt.f32.partialorder %v3614, 1.0
      %v3616 = vsel %vm3615, 1, 0
      %v3617 = vcvt.s32.f32 %v3616
      %v3618 = vmul.f32 %v3614, 0.9
      %3621 = vst [vmem:[#allocation1] sm:$0xff] %v3611
      %3622 = vst [vmem:[#allocation1 + $0x9] sm:$0xff] %v3612
      %s3623 = scalar_lea.vmem [#allocation1], 6
      %v3624 = vld [vmem:[%s3623] ss:$9 sm:$0xff]
      %v3626 = vadd.f32 %v3618, %v3624
      %v3627 = vsub.f32 %v3626, %v3617
      %vm3628 = vcmp.gt.f32.partialorder %v3627, 1.0
      %v3629 = vsel %vm3628, 1, 0
      %v3630 = vcvt.s32.f32 %v3629
      %3631 = vst.msk [vmem:[%s3613] ss:$8 sm:$0x3] %vm3342, %v3627
      %3632 = vst.msk [vmem:[%s3613] ss:$8 sm:$0x0] %vm3342, %v3627
      %s3633 = scalar_lea.vmem %s8, 480
      %v3634 = vld [vmem:[%s3633] sm:$0xff]
      %v3635 = vld [vmem:[%s3633 + $0x8] sm:$0xff]
      %v3636 = vld [vmem:[%s3633 + $0x10] sm:$0xff]
      %v3637 = vld [vmem:[%s3633 + $0x18] sm:$0xff]
      %v3638 = vld [vmem:[%s3633 + $0x20] sm:$0xff]
      %v3639 = vld [vmem:[%s3633 + $0x28] sm:$0xff]
      %v3640 = vld [vmem:[%s3633 + $0x30] sm:$0xff]
      %v3641 = vld [vmem:[%s3633 + $0x38] sm:$0xff]
      %v3642 = vld [vmem:[%s3633 + $0x40] sm:$0xff]
      %v3643 = vld [vmem:[%s3633 + $0x48] sm:$0xff]
      %v3644 = vld [vmem:[%s3633 + $0x50] sm:$0xff]
      %v3645 = vld [vmem:[%s3633 + $0x58] sm:$0xff]
      %v3646 = vld [vmem:[%s3633 + $0x60] sm:$0xff]
      %v3647 = vld [vmem:[%s3633 + $0x68] sm:$0xff]
      %v3648 = vld [vmem:[%s3633 + $0x70] sm:$0xff]
      %v3649 = vld [vmem:[%s3633 + $0x78] sm:$0xff]
      %v3650 = vld [vmem:[%s3633 + $0x80] sm:$0xff]
      %v3651 = vld [vmem:[%s3633 + $0x88] sm:$0xff]
      %v3652 = vld [vmem:[%s3633 + $0x90] sm:$0xff]
      %v3653 = vld [vmem:[%s3633 + $0x98] sm:$0xff]
      %v3655 = vperm.slane %v3630, 0
      %v3656 = vperm.slane %v3630, 1
      %v3658 = vsel %vm3369, %v3656, 0
      %3660 = vmatpush.msra.mxu0 %v3649
      %3661 = vmatpush.msra.mxu0 %v3648
      %3662 = vmatpush.msra.mxu0 %v3647
      %3663 = vmatpush.msra.mxu0 %v3646
      %3664 = vmatpush.msra.mxu0 %v3645
      %3665 = vmatpush.msra.mxu0 %v3644
      %3666 = vmatpush.msra.mxu0 %v3643
      %3667 = vmatpush.msra.mxu0 %v3642
      %3668 = vmatpush.msra.mxu0 %v3641
      %3669 = vmatpush.msra.mxu0 %v3640
      %3670 = vmatpush.msra.mxu0 %v3639
      %3671 = vmatpush.msra.mxu0 %v3638
      %3672 = vmatpush.msra.mxu0 %v3637
      %3673 = vmatpush.msra.mxu0 %v3636
      %3674 = vmatpush.msra.mxu0 %v3635
      %3675 = vmatpush.msra.mxu0 %v3634
      %3676 = vmatmul.f32.gmra.mxu0 %v3655
      %v3677 = vpop.f32.mrf.mxu0
      %v3678 = vadd.f32 0.0, %v3677
      %3679 = vdwg.mxu0
      %3680 = vmatpush.msra.mxu0 0.0
      %3681 = vmatpush.msra.mxu0 0.0
      %3682 = vmatpush.msra.mxu0 0.0
      %3683 = vmatpush.msra.mxu0 0.0
      %3684 = vmatpush.msra.mxu0 0.0
      %3685 = vmatpush.msra.mxu0 0.0
      %3686 = vmatpush.msra.mxu0 0.0
      %3687 = vmatpush.msra.mxu0 0.0
      %3688 = vmatpush.msra.mxu0 0.0
      %3689 = vmatpush.msra.mxu0 0.0
      %3690 = vmatpush.msra.mxu0 0.0
      %3691 = vmatpush.msra.mxu0 0.0
      %3692 = vmatpush.msra.mxu0 %v3653
      %3693 = vmatpush.msra.mxu0 %v3652
      %3694 = vmatpush.msra.mxu0 %v3651
      %3695 = vmatpush.msra.mxu0 %v3650
      %3696 = vmatmul.f32.gmra.mxu0 %v3658
      %v3697 = vpop.f32.mrf.mxu0
      %v3698 = vadd.f32 %v3678, %v3697
      %3699 = vdwg.mxu0
      %v3700 = vadd.f32 %v3604, %v3698
      %v3703 = vrot.slane %v3304, 1
      %v3704 = vrot.slane %v3305, 1
      %v3707 = vmax.f32 %v3304, %v3703
      %v3708 = vmax.f32 %v3305, %v3704
      %v3709 = vld [vmem:[%s7] sm:$0x3]
      %v3711 = vperm.slane %v3709, 0
      %v3712 = vperm.slane %v3709, 1
      %v3715 = vadd.f32 %v3707, %v3711
      %v3716 = vadd.f32 %v3708, %v3712
      %s3717 = scalar_lea.vmem [#allocation3], 4
      %v3718 = vld [vmem:[%s3717] ss:$8 sm:$0x3]
      %vm3719 = vcmp.gt.f32.partialorder %v3718, 1.0
      %v3720 = vsel %vm3719, 1, 0
      %v3721 = vcvt.s32.f32 %v3720
      %v3722 = vmul.f32 %v3718, 0.9
      %v3725 = vrot.slane %v3716, 7
      %v3726 = vsel %vm3331, %v3715, %v3725
      %v3728 = vadd.f32 %v3722, %v3726
      %v3729 = vsub.f32 %v3728, %v3721
      %vm3730 = vcmp.gt.f32.partialorder %v3729, 1.0
      %v3731 = vsel %vm3730, 1, 0
      %v3732 = vcvt.s32.f32 %v3731
      %3733 = vst.msk [vmem:[%s3717] ss:$8 sm:$0x3] %vm3342, %v3729
      %3734 = vst.msk [vmem:[%s3717] ss:$8 sm:$0x0] %vm3342, %v3729
      %s3735 = scalar_lea.vmem %s8, 640
      %v3736 = vld [vmem:[%s3735] sm:$0xff]
      %v3737 = vld [vmem:[%s3735 + $0x8] sm:$0xff]
      %v3738 = vld [vmem:[%s3735 + $0x10] sm:$0xff]
      %v3739 = vld [vmem:[%s3735 + $0x18] sm:$0xff]
      %v3740 = vld [vmem:[%s3735 + $0x20] sm:$0xff]
      %v3741 = vld [vmem:[%s3735 + $0x28] sm:$0xff]
      %v3742 = vld [vmem:[%s3735 + $0x30] sm:$0xff]
      %v3743 = vld [vmem:[%s3735 + $0x38] sm:$0xff]
      %v3744 = vld [vmem:[%s3735 + $0x40] sm:$0xff]
      %v3745 = vld [vmem:[%s3735 + $0x48] sm:$0xff]
      %v3746 = vld [vmem:[%s3735 + $0x50] sm:$0xff]
      %v3747 = vld [vmem:[%s3735 + $0x58] sm:$0xff]
      %v3748 = vld [vmem:[%s3735 + $0x60] sm:$0xff]
      %v3749 = vld [vmem:[%s3735 + $0x68] sm:$0xff]
      %v3750 = vld [vmem:[%s3735 + $0x70] sm:$0xff]
      %v3751 = vld [vmem:[%s3735 + $0x78] sm:$0xff]
      %v3752 = vld [vmem:[%s3735 + $0x80] sm:$0xff]
      %v3753 = vld [vmem:[%s3735 + $0x88] sm:$0xff]
      %v3754 = vld [vmem:[%s3735 + $0x90] sm:$0xff]
      %v3755 = vld [vmem:[%s3735 + $0x98] sm:$0xff]
      %v3757 = vperm.slane %v3732, 0
      %v3758 = vperm.slane %v3732, 1
      %v3760 = vsel %vm3369, %v3758, 0
      %3762 = vmatpush.msra.mxu0 %v3751
      %3763 = vmatpush.msra.mxu0 %v3750
      %3764 = vmatpush.msra.mxu0 %v3749
      %3765 = vmatpush.msra.mxu0 %v3748
      %3766 = vmatpush.msra.mxu0 %v3747
      %3767 = vmatpush.msra.mxu0 %v3746
      %3768 = vmatpush.msra.mxu0 %v3745
      %3769 = vmatpush.msra.mxu0 %v3744
      %3770 = vmatpush.msra.mxu0 %v3743
      %3771 = vmatpush.msra.mxu0 %v3742
      %3772 = vmatpush.msra.mxu0 %v3741
      %3773 = vmatpush.msra.mxu0 %v3740
      %3774 = vmatpush.msra.mxu0 %v3739
      %3775 = vmatpush.msra.mxu0 %v3738
      %3776 = vmatpush.msra.mxu0 %v3737
      %3777 = vmatpush.msra.mxu0 %v3736
      %3778 = vmatmul.f32.gmra.mxu0 %v3757
      %v3779 = vpop.f32.mrf.mxu0
      %v3780 = vadd.f32 0.0, %v3779
      %3781 = vdwg.mxu0
      %3782 = vmatpush.msra.mxu0 0.0
      %3783 = vmatpush.msra.mxu0 0.0
      %3784 = vmatpush.msra.mxu0 0.0
      %3785 = vmatpush.msra.mxu0 0.0
      %3786 = vmatpush.msra.mxu0 0.0
      %3787 = vmatpush.msra.mxu0 0.0
      %3788 = vmatpush.msra.mxu0 0.0
      %3789 = vmatpush.msra.mxu0 0.0
      %3790 = vmatpush.msra.mxu0 0.0
      %3791 = vmatpush.msra.mxu0 0.0
      %3792 = vmatpush.msra.mxu0 0.0
      %3793 = vmatpush.msra.mxu0 0.0
      %3794 = vmatpush.msra.mxu0 %v3755
      %3795 = vmatpush.msra.mxu0 %v3754
      %3796 = vmatpush.msra.mxu0 %v3753
      %3797 = vmatpush.msra.mxu0 %v3752
      %3798 = vmatmul.f32.gmra.mxu0 %v3760
      %v3799 = vpop.f32.mrf.mxu0
      %v3800 = vadd.f32 %v3780, %v3799
      %3801 = vdwg.mxu0
      %v3802 = vadd.f32 %v3700, %v3800
      %v3803 = vld [vmem:[#allocation4] sm:$0x1]
      %vm3804 = vcmp.gt.f32.partialorder %v3803, 1.0
      %v3805 = vsel %vm3804, 1, 0
      %v3806 = vcvt.s32.f32 %v3805
      %v3807 = vmul.f32 %v3803, 0.9
      %v3808 = vadd.f32 %v3807, %v3802
      %v3809 = vsub.f32 %v3808, %v3806
      %vm3810 = vcmp.gt.f32.partialorder %v3809, 1.0
      %v3811 = vsel %vm3810, 1, 0
      %v3812 = vcvt.s32.f32 %v3811
      %vm3813 = vcmask 73728
      %3814 = vst.msk [vmem:[#allocation4] sm:$0x1] %vm3813, %v3809
      %s3815 = scalar_lea.vmem %s417, %s26
      %3816 = vst.msk [vmem:[%s3815] sm:$0x1] %vm3813, %v3812
      %p3817 = scmp.lt.s32.totalorder %s25, 1
      %s3818 = scalar_select %p3817, %s25, 1
      %s3819 = smul.addr %s3818, 4
      %s3820 = scalar_lea.vmem %s10, %s3819
      // Predicated region
      $region65: #{snn_forward.1} parent=59 // pred_check
        %p3821 = pneg %p275
      $region66: #{snn_forward.1} parent=59 // pred_check_branch
        %3823 = sbr.rel (%p3821) target = $region68
      $region67: #{snn_forward.1} parent=59 // pred_region
        _
      $region68: #{snn_forward.1} parent=59 // pred_fallthru
        _
    $region60: #{snn_forward.1} parent=5 // pred_fallthru
      _
    %p3824 = scmp.le.s32.totalorder 2, %s16
    // Predicated region
    $region69: #{snn_forward.1} parent=5 // pred_check
      %p3825 = pneg %p3824
    $region70: #{snn_forward.1} parent=5 // pred_check_branch
      %3827 = sbr.rel (%p3825) target = $region72
    $region71: #{snn_forward.1} parent=5 // pred_region
      %s3828 = ssub.s32 %s16, 2
      // Predicated region
      $region73: #{snn_forward.1} parent=71 // pred_check
        %p3829 = pneg %p281
      $region74: #{snn_forward.1} parent=71 // pred_check_branch
        %3831 = sbr.rel (%p3829) target = $region76
      $region75: #{snn_forward.1} parent=71 // pred_region
        %p3832 = scmp.lt.s32.totalorder %s27, 1
        %s3833 = scalar_select %p3832, %s27, 1
        %s3834 = smul.addr %s3833, 4
        %s3835 = scalar_lea.vmem %s10, %s3834
      $region76: #{snn_forward.1} parent=71 // pred_fallthru
        _
    $region72: #{snn_forward.1} parent=5 // pred_fallthru
      _
  $region6: #{snn_forward.1} parent=0 // loop_footer
    %s20 = sadd.s32 1, %s16
  $region7: #{snn_forward.1} parent=0 // loop_footer_branch
    %15 = sbr.rel target = $region3
  $region8: #{snn_forward.1} parent=0 // loop_exit
    _

</llo_original>
